<compile_context>
chip_gen: v5e
topology: v5e:2x2
jax: 0.10.0
libtpu: 0.0.40
codegen_flags: <defaults>
</compile_context>

<pallas_src>
import functools

import jax
import jax.numpy as jnp
from jax.experimental import pallas as pl
from jax.experimental.pallas import tpu as pltpu

EPS = 1e-5


def _round_up(x, m):
    return ((x + m - 1) // m) * m


# ----------------------------------------------------------------------------
# In-kernel helpers (values are VMEM-resident, channels-last (rows, C), f32)
# ----------------------------------------------------------------------------
def _shift_down(a):
    """out[m] = a[m-1], out[0] = 0.  Sublane roll on the XLU + iota row mask."""
    rolled = pltpu.roll(a, shift=1, axis=0)
    ridx = jax.lax.broadcasted_iota(jnp.int32, a.shape, 0)
    return jnp.where(ridx == 0, 0.0, rolled)


def _shift_up(a):
    """out[m] = a[m+1], out[last] = 0."""
    rows = a.shape[0]
    rolled = pltpu.roll(a, shift=rows - 1, axis=0)
    ridx = jax.lax.broadcasted_iota(jnp.int32, a.shape, 0)
    return jnp.where(ridx == rows - 1, 0.0, rolled)


def _conv3(z, l, w_ref, scale, shift, *, relu):
    """Conv1d(k=3, s=1, p=1) + folded bias/BatchNorm(eval) affine (+ReLU).

    z is the logical length-2l sequence in stream-stacked form: rows [0:l] = even
    positions, rows [l:2l] = odd positions.  Taps of the conv on the interleaved
    sequence:
        even[m]: W0*o[m-1] + W1*e[m] + W2*o[m]
        odd[m] : W0*e[m]   + W1*o[m] + W2*e[m+1]
    so one fused-K dot suffices: LHS = [prev | cur | next] of shape (2l, 3*Cin),
    with the weight prestacked host-side as (3*Cin, Cout).
    """
    f32 = jnp.float32
    e = z[:l, :]
    o = z[l:, :]
    prev = jnp.concatenate([_shift_down(o), e], axis=0)       # (2l, Cin)
    nxt = jnp.concatenate([o, _shift_up(e)], axis=0)          # (2l, Cin)
    lhs = jnp.concatenate([prev, z, nxt], axis=-1).astype(jnp.bfloat16)   # (2l, 3Cin)
    y = jnp.dot(lhs, w_ref[...], preferred_element_type=f32) * scale + shift
    if relu:
        y = jnp.maximum(y, 0.0)
    return y


# ----------------------------------------------------------------------------
# Fused DecoderLayer kernel (one grid step == one batch element)
# ----------------------------------------------------------------------------
def _decoder_layer_kernel(x_ref, y_ref,
                          up_w1_ref, up_w02_ref, up_b_ref,
                          c1_w_ref, c1_s_ref, c1_t_ref,
                          c2_w_ref, c2_s_ref, c2_t_ref,
                          c3_w_ref, c3_s_ref, c3_t_ref,
                          n2_s_ref, n2_t_ref,
                          wq_ref, wk_ref, wv_ref, wo_ref,
                          o_ref, *, n_heads):
    f32 = jnp.float32
    bf16 = jnp.bfloat16

    xf = x_ref[0].astype(f32)                      # (L, Cp)   (bf16 slab from prev layer)
    yb = y_ref[0]                                  # (Lk, Cp)  bf16 sample features
    l = xf.shape[0]

    # ---- ConvTranspose1d(k=3, s=2, p=1, output_padding=1), de-interleaved streams ----
    #   even[m] = x[m] @ W1 + b
    #   odd[m]  = x[m+1] @ W0 + x[m] @ W2 + b           (x[L] := 0)
    x_next = _shift_up(xf)                         # shift in f32, before the bf16 cast
    xb = xf.astype(bf16)
    up_b = up_b_ref[...]
    u_e = jnp.dot(xb, up_w1_ref[...], preferred_element_type=f32) + up_b
    u_o = (jnp.dot(jnp.concatenate([x_next.astype(bf16), xb], axis=-1),
                   up_w02_ref[...], preferred_element_type=f32) + up_b)
    u = jnp.concatenate([u_e, u_o], axis=0)        # (2L, Cp): rows = [even; odd]

    # ---- IbnBlock stream: (Conv1d+BN+ReLU) x2, then Conv1d+BN (one dot each) ----------
    s = _conv3(u, l, c1_w_ref, c1_s_ref[...], c1_t_ref[...], relu=True)
    s = _conv3(s, l, c2_w_ref, c2_s_ref[...], c2_t_ref[...], relu=True)
    s = _conv3(s, l, c3_w_ref, c3_s_ref[...], c3_t_ref[...], relu=False)

    # ---- residual + InstanceNorm1d (eval, no affine) over the logical 2L + ReLU -------
    v = u + s
    inv_len = 1.0 / (2 * l)
    mean = jnp.sum(v, axis=0, keepdims=True) * inv_len
    ex2 = jnp.sum(v * v, axis=0, keepdims=True) * inv_len
    var = jnp.maximum(ex2 - mean * mean, 0.0)       # one-pass stats
    h = jnp.maximum((v - mean) * jax.lax.rsqrt(var + EPS), 0.0)

    # ---- norm2: BatchNorm1d (eval) affine ----------------------------------------------
    xn = h * n2_s_ref[...] + n2_t_ref[...]          # (2L, Cp) f32
    xnb = xn.astype(bf16)

    # ---- Attention(xn, y, y): per-head, host-pre-split weights, no in-kernel slicing ---
    # 1/sqrt(d_model) is folded into wq.  Softmax math in f32; approx reciprocal on EUP.
    att_out = jnp.zeros_like(xn)
    for hd in range(n_heads):
        q = jnp.dot(xnb, wq_ref[hd], preferred_element_type=f32)      # (2L, dhp)
        k = jnp.dot(yb, wk_ref[hd], preferred_element_type=f32)       # (Lk, dhp)
        v_h = jnp.dot(yb, wv_ref[hd], preferred_element_type=f32)     # (Lk, dhp)
        sc = jax.lax.dot_general(q.astype(bf16), k.astype(bf16),
                                 (((1,), (1,)), ((), ())),
                                 preferred_element_type=f32)           # (2L, Lk)
        sc = sc - jnp.max(sc, axis=-1, keepdims=True)
        prob = jnp.exp(sc)
        prob = prob * pl.reciprocal(jnp.sum(prob, axis=-1, keepdims=True), approx=True)
        hv = jnp.dot(prob.astype(bf16), v_h.astype(bf16),
                     preferred_element_type=f32)                       # (2L, dhp)
        att_out = att_out + jnp.dot(hv.astype(bf16), wo_ref[hd],
                                    preferred_element_type=f32)        # (2L, Cp)
    out = xn + att_out

    # ---- lane-dense store: even rows -> lanes [0:Cp), odd rows -> lanes [Cp:2Cp) -------
    # (N, L, 2Cp) row-major is exactly the interleaved (N, 2L, Cp) upsampled sequence.
    o_ref[0] = jnp.concatenate([out[:l, :], out[l:, :]], axis=-1).astype(o_ref.dtype)


# ----------------------------------------------------------------------------
# pallas_call wrapper: grid over batch, full (L, Cp) block per example
# ----------------------------------------------------------------------------
def decoder_layer(x, y, p, *, n_heads):
    n, l, c_pad = x.shape
    _, lk, _ = y.shape
    mid_pad = p['c1_w'].shape[1]
    dhp = p['wq_h'].shape[2]

    def const_spec(shape):
        zeros = (0,) * len(shape)
        # TODO(synk): at real sizes, single-buffer these constant blocks
        # (pipeline_mode=pl.Buffered(1)) to halve their VMEM footprint on v7x.
        return pl.BlockSpec(shape, lambda i, _z=zeros: _z)

    kern = functools.partial(_decoder_layer_kernel, n_heads=n_heads)
    out = pl.pallas_call(
        kern,
        out_shape=jax.ShapeDtypeStruct((n, l, 2 * c_pad), jnp.bfloat16),
        grid=(n,),
        in_specs=[
            pl.BlockSpec((1, l, c_pad), lambda i: (i, 0, 0)),      # x
            pl.BlockSpec((1, lk, c_pad), lambda i: (i, 0, 0)),     # y (sample feats, bf16)
            const_spec((c_pad, c_pad)),          # up_w1
            const_spec((2 * c_pad, c_pad)),      # up_w02  (stacked taps 0 & 2)
            const_spec((1, c_pad)),              # up_b
            const_spec((3 * c_pad, mid_pad)),    # c1_w (tap-stacked)
            const_spec((1, mid_pad)),            # c1_scale
            const_spec((1, mid_pad)),            # c1_shift
            const_spec((3 * mid_pad, mid_pad)),  # c2_w
            const_spec((1, mid_pad)),            # c2_scale
            const_spec((1, mid_pad)),            # c2_shift
            const_spec((3 * mid_pad, c_pad)),    # c3_w
            const_spec((1, c_pad)),              # c3_scale
            const_spec((1, c_pad)),              # c3_shift
            const_spec((1, c_pad)),              # n2_scale
            const_spec((1, c_pad)),              # n2_shift
            const_spec((n_heads, c_pad, dhp)),   # wq (per-head, 1/sqrt(d_model) folded)
            const_spec((n_heads, c_pad, dhp)),   # wk
            const_spec((n_heads, c_pad, dhp)),   # wv
            const_spec((n_heads, dhp, c_pad)),   # wo
        ],
        out_specs=pl.BlockSpec((1, l, 2 * c_pad), lambda i: (i, 0, 0)),
        compiler_params=pltpu.CompilerParams(
            dimension_semantics=("parallel",),
            # Explicit VMEM budget (review #7): x/y blocks + 19 weight blocks (x2 buffers)
            # + all fused intermediates; tiny here, 48 MiB leaves headroom on every chip
            # (v5e/v6e: 128 MiB physical, v7x: 64 MiB physical).
            vmem_limit_bytes=48 * 1024 * 1024),
    )(x, y, p['up_w1'], p['up_w02'], p['up_b'],
      p['c1_w'], p['c1_scale'], p['c1_shift'],
      p['c2_w'], p['c2_scale'], p['c2_shift'],
      p['c3_w'], p['c3_scale'], p['c3_shift'],
      p['n2_scale'], p['n2_shift'],
      p['wq_h'], p['wk_h'], p['wv_h'], p['wo_h'])
    # Free row-major view: (N, L, 2Cp) -> (N, 2L, Cp) interleaved upsampled sequence.
    return out.reshape(n, 2 * l, c_pad)


# ----------------------------------------------------------------------------
# Parameter init: fold biases/BN, pre-stack conv taps, pre-split heads, pad channels
# ----------------------------------------------------------------------------
def init_layer_params(key, c, mid, n_heads, c_pad, mid_pad):
    keys = iter(jax.random.split(key, 32))
    f32, bf16 = jnp.float32, jnp.bfloat16
    d_head = c // n_heads
    dhp = c_pad // n_heads

    def nrm(shape, s=0.1):
        return s * jax.random.normal(next(keys), shape, f32)

    def pad2(a, r, cc):
        return jnp.pad(a, ((0, r - a.shape[0]), (0, cc - a.shape[1])))

    def bn_fold(ch, ch_pad, conv_bias):
        gamma = 1.0 + nrm((ch,))
        beta = nrm((ch,))
        rmean = nrm((ch,))
        rvar = jax.random.uniform(next(keys), (ch,), f32, 0.5, 1.5)
        scale = gamma / jnp.sqrt(rvar + EPS)
        shift = (conv_bias - rmean) * scale + beta     # fold conv bias + eval-mode BN
        # pad region: scale=1, shift=0 so padded (zero) channels stay exactly zero.
        scale = jnp.concatenate([scale, jnp.ones((ch_pad - ch,), f32)])
        shift = jnp.concatenate([shift, jnp.zeros((ch_pad - ch,), f32)])
        return scale.reshape(1, ch_pad), shift.reshape(1, ch_pad)

    p = {}
    # ConvTranspose1d(C, C, k=3, s=2, p=1, op=1) — taps stored (k, in, out)
    up_w = nrm((3, c, c))
    up_b = nrm((c,))
    p['up_w1'] = pad2(up_w[1], c_pad, c_pad).astype(bf16)
    p['up_w02'] = jnp.concatenate([pad2(up_w[0], c_pad, c_pad),
                                   pad2(up_w[2], c_pad, c_pad)], axis=0).astype(bf16)
    p['up_b'] = jnp.concatenate([up_b, jnp.zeros((c_pad - c,), f32)]).reshape(1, c_pad)

    # IbnBlock: three Conv1d(k=3, p=1) each followed by BatchNorm1d; taps stacked on K.
    def conv_bn(cin, cin_pad, cout, cout_pad):
        w = nrm((3, cin, cout))
        b = nrm((cout,))
        w_pad = jnp.concatenate([pad2(w[k], cin_pad, cout_pad) for k in range(3)], axis=0)
        scale, shift = bn_fold(cout, cout_pad, b)
        return w_pad.astype(bf16), scale, shift

    p['c1_w'], p['c1_scale'], p['c1_shift'] = conv_bn(c, c_pad, mid, mid_pad)
    p['c2_w'], p['c2_scale'], p['c2_shift'] = conv_bn(mid, mid_pad, mid, mid_pad)
    p['c3_w'], p['c3_scale'], p['c3_shift'] = conv_bn(mid, mid_pad, c, c_pad)

    # norm2 BatchNorm1d(C), no preceding conv bias
    p['n2_scale'], p['n2_shift'] = bn_fold(c, c_pad, jnp.zeros((c,), f32))

    # Attention linears (bias-free), stored (in, out) so y = x @ W.
    wq = nrm((c, c)) * (1.0 / (c ** 0.5))           # fold 1/sqrt(d_model) into wq
    wk = nrm((c, c))
    wv = nrm((c, c))
    wo = nrm((c, c))

    def split_in_out(w):      # (C, C) -> (H, C_pad, dhp); real head cols first, then 0s
        return jnp.stack([pad2(w[:, h * d_head:(h + 1) * d_head], c_pad, dhp)
                          for h in range(n_heads)], axis=0).astype(bf16)

    def split_out_in(w):      # (C, C) -> (H, dhp, C_pad); head rows of the out-proj input
        return jnp.stack([pad2(w[h * d_head:(h + 1) * d_head, :], dhp, c_pad)
                          for h in range(n_heads)], axis=0).astype(bf16)

    p['wq_h'] = split_in_out(wq)
    p['wk_h'] = split_in_out(wk)
    p['wv_h'] = split_in_out(wv)
    p['wo_h'] = split_out_in(wo)
    return p


# ----------------------------------------------------------------------------
# Model glue: channel padding + layer composition (external layout matches PyTorch)
# ----------------------------------------------------------------------------
def _pad_channels(a_nlc, c_pad):
    c = a_nlc.shape[-1]
    if c == c_pad:
        return a_nlc
    return jnp.pad(a_nlc, ((0, 0), (0, 0), (0, c_pad - c)))


def decoder_forward(x_ncl, samples_ncl, params, *, n_heads):
    c = x_ncl.shape[1]
    c_pad = params[0]['up_b'].shape[-1]
    x = _pad_channels(jnp.transpose(x_ncl, (0, 2, 1)), c_pad)           # f32, first layer
    for sample, p in zip(samples_ncl, params):
        y = _pad_channels(jnp.transpose(sample, (0, 2, 1)), c_pad).astype(jnp.bfloat16)
        x = decoder_layer(x, y, p, n_heads=n_heads)                     # bf16 slab out
    x = x[..., :c].astype(jnp.float32)                                  # strip padding
    return jnp.transpose(x, (0, 2, 1))


# ----------------------------------------------------------------------------
if __name__ == "__main__":
    N, C, MID, N_HEADS, N_LAYERS, L = 2, 32, 16, 4, 2, 8
    # Lane-dense padding: 2*C_PAD is a multiple of 128 (unmasked stores); C_PAD divisible
    # by n_heads so per-head weight slabs stay rectangular.
    C_PAD = _round_up(C, 64)
    MID_PAD = _round_up(MID, 64)
    assert C_PAD % N_HEADS == 0 and C % N_HEADS == 0

    key = jax.random.PRNGKey(0)
    kx, ks1, ks2, kp = jax.random.split(key, 4)
    x = jax.random.normal(kx, (N, C, L), jnp.float32)
    samples = [jax.random.normal(ks1, (N, C, 16), jnp.float32),
               jax.random.normal(ks2, (N, C, 32), jnp.float32)]
    params = [init_layer_params(k, C, MID, N_HEADS, C_PAD, MID_PAD)
              for k in jax.random.split(kp, N_LAYERS)]

    fwd = jax.jit(functools.partial(decoder_forward, n_heads=N_HEADS))
    out = fwd(x, samples, params)
    jax.block_until_ready(out)

    assert out.shape == (N, C, L * (2 ** N_LAYERS)), out.shape
    assert bool(jnp.all(jnp.isfinite(out)))
    print("KERNEL_OK")
</pallas_src>

<mosaic_0001>
module attributes {stable_mosaic.version = 11 : i64} {
  func.func @_decoder_layer_kernel(%arg0: i32, %arg1: memref<1x8x64xf32, #tpu.memory_space<vmem>>, %arg2: memref<1x16x64xbf16, #tpu.memory_space<vmem>>, %arg3: memref<64x64xbf16, #tpu.memory_space<vmem>>, %arg4: memref<128x64xbf16, #tpu.memory_space<vmem>>, %arg5: memref<1x64xf32, #tpu.memory_space<vmem>>, %arg6: memref<192x64xbf16, #tpu.memory_space<vmem>>, %arg7: memref<1x64xf32, #tpu.memory_space<vmem>>, %arg8: memref<1x64xf32, #tpu.memory_space<vmem>>, %arg9: memref<192x64xbf16, #tpu.memory_space<vmem>>, %arg10: memref<1x64xf32, #tpu.memory_space<vmem>>, %arg11: memref<1x64xf32, #tpu.memory_space<vmem>>, %arg12: memref<192x64xbf16, #tpu.memory_space<vmem>>, %arg13: memref<1x64xf32, #tpu.memory_space<vmem>>, %arg14: memref<1x64xf32, #tpu.memory_space<vmem>>, %arg15: memref<1x64xf32, #tpu.memory_space<vmem>>, %arg16: memref<1x64xf32, #tpu.memory_space<vmem>>, %arg17: memref<4x64x16xbf16, #tpu.memory_space<vmem>>, %arg18: memref<4x64x16xbf16, #tpu.memory_space<vmem>>, %arg19: memref<4x64x16xbf16, #tpu.memory_space<vmem>>, %arg20: memref<4x16x64xbf16, #tpu.memory_space<vmem>>, %arg21: memref<1x8x128xbf16, #tpu.memory_space<vmem>>) attributes {dimension_semantics = [#tpu.dimension_semantics<parallel>], iteration_bounds = array<i64: 2>, scalar_prefetch = 0 : i64, scratch_operands = 0 : i64, tpu.core_type = #tpu.core_type<tc>, window_params = [{transform_indices = @transform_0, window_bounds = array<i64: 1, 8, 64>}, {transform_indices = @transform_1, window_bounds = array<i64: 1, 16, 64>}, {pipeline_mode = #tpu.pipeline_mode<synchronous>, transform_indices = @transform_2, window_bounds = array<i64: 64, 64>}, {pipeline_mode = #tpu.pipeline_mode<synchronous>, transform_indices = @transform_3, window_bounds = array<i64: 128, 64>}, {pipeline_mode = #tpu.pipeline_mode<synchronous>, transform_indices = @transform_4, window_bounds = array<i64: 1, 64>}, {pipeline_mode = #tpu.pipeline_mode<synchronous>, transform_indices = @transform_5, window_bounds = array<i64: 192, 64>}, {pipeline_mode = #tpu.pipeline_mode<synchronous>, transform_indices = @transform_6, window_bounds = array<i64: 1, 64>}, {pipeline_mode = #tpu.pipeline_mode<synchronous>, transform_indices = @transform_7, window_bounds = array<i64: 1, 64>}, {pipeline_mode = #tpu.pipeline_mode<synchronous>, transform_indices = @transform_8, window_bounds = array<i64: 192, 64>}, {pipeline_mode = #tpu.pipeline_mode<synchronous>, transform_indices = @transform_9, window_bounds = array<i64: 1, 64>}, {pipeline_mode = #tpu.pipeline_mode<synchronous>, transform_indices = @transform_10, window_bounds = array<i64: 1, 64>}, {pipeline_mode = #tpu.pipeline_mode<synchronous>, transform_indices = @transform_11, window_bounds = array<i64: 192, 64>}, {pipeline_mode = #tpu.pipeline_mode<synchronous>, transform_indices = @transform_12, window_bounds = array<i64: 1, 64>}, {pipeline_mode = #tpu.pipeline_mode<synchronous>, transform_indices = @transform_13, window_bounds = array<i64: 1, 64>}, {pipeline_mode = #tpu.pipeline_mode<synchronous>, transform_indices = @transform_14, window_bounds = array<i64: 1, 64>}, {pipeline_mode = #tpu.pipeline_mode<synchronous>, transform_indices = @transform_15, window_bounds = array<i64: 1, 64>}, {pipeline_mode = #tpu.pipeline_mode<synchronous>, transform_indices = @transform_16, window_bounds = array<i64: 4, 64, 16>}, {pipeline_mode = #tpu.pipeline_mode<synchronous>, transform_indices = @transform_17, window_bounds = array<i64: 4, 64, 16>}, {pipeline_mode = #tpu.pipeline_mode<synchronous>, transform_indices = @transform_18, window_bounds = array<i64: 4, 64, 16>}, {pipeline_mode = #tpu.pipeline_mode<synchronous>, transform_indices = @transform_19, window_bounds = array<i64: 4, 16, 64>}, {transform_indices = @transform_20, window_bounds = array<i64: 1, 8, 128>}]} {
    %c0 = arith.constant 0 : index
    %c0_0 = arith.constant 0 : index
    %c0_1 = arith.constant 0 : index
    %0 = vector.load %arg1[%c0, %c0_0, %c0_1] : memref<1x8x64xf32, #tpu.memory_space<vmem>>, vector<1x8x64xf32>
    %1 = vector.shape_cast %0 : vector<1x8x64xf32> to vector<8x64xf32>
    %c0_2 = arith.constant 0 : index
    %c0_3 = arith.constant 0 : index
    %c0_4 = arith.constant 0 : index
    %2 = vector.load %arg2[%c0_2, %c0_3, %c0_4] : memref<1x16x64xbf16, #tpu.memory_space<vmem>>, vector<1x16x64xbf16>
    %3 = vector.shape_cast %2 : vector<1x16x64xbf16> to vector<16x64xbf16>
    %c7_i32 = arith.constant 7 : i32
    %4 = tpu.dynamic_rotate %1 by %c7_i32 dim 0 : vector<8x64xf32>, i32 -> vector<8x64xf32>
    %5 = tpu.iota {dimensions = array<i32: 0>} : vector<8x64xi32>
    %c7_i32_5 = arith.constant 7 : i32
    %6 = vector.broadcast %c7_i32_5 : i32 to vector<8x64xi32>
    %7 = arith.cmpi eq, %5, %6 : vector<8x64xi32>
    %cst = arith.constant 0.000000e+00 : f32
    %8 = vector.broadcast %cst : f32 to vector<8x64xf32>
    %9 = arith.select %7, %8, %4 : vector<8x64xi1>, vector<8x64xf32>
    %10 = arith.truncf %1 : vector<8x64xf32> to vector<8x64xbf16>
    %c0_6 = arith.constant 0 : index
    %c0_7 = arith.constant 0 : index
    %11 = vector.load %arg5[%c0_6, %c0_7] : memref<1x64xf32, #tpu.memory_space<vmem>>, vector<1x64xf32>
    %c0_8 = arith.constant 0 : index
    %c0_9 = arith.constant 0 : index
    %12 = vector.load %arg3[%c0_8, %c0_9] : memref<64x64xbf16, #tpu.memory_space<vmem>>, vector<64x64xbf16>
    %cst_10 = arith.constant dense<0.000000e+00> : vector<8x64xf32>
    %13 = tpu.matmul %10, %12, %cst_10 {dimension_numbers = #tpu.dot_dimension_numbers<[1], [0], [0], [1], [0, 0, 1, 1], [], []>} : vector<8x64xbf16>, vector<64x64xbf16>, vector<8x64xf32> -> vector<8x64xf32>
    %14 = vector.broadcast %11 : vector<1x64xf32> to vector<8x64xf32>
    %15 = arith.addf %13, %14 : vector<8x64xf32>
    %16 = arith.truncf %9 : vector<8x64xf32> to vector<8x64xbf16>
    %17 = tpu.concatenate %16, %10 in 1 : vector<8x64xbf16>, vector<8x64xbf16> -> vector<8x128xbf16>
    %c0_11 = arith.constant 0 : index
    %c0_12 = arith.constant 0 : index
    %18 = vector.load %arg4[%c0_11, %c0_12] : memref<128x64xbf16, #tpu.memory_space<vmem>>, vector<128x64xbf16>
    %cst_13 = arith.constant dense<0.000000e+00> : vector<8x64xf32>
    %19 = tpu.matmul %17, %18, %cst_13 {dimension_numbers = #tpu.dot_dimension_numbers<[1], [0], [0], [1], [0, 0, 1, 1], [], []>} : vector<8x128xbf16>, vector<128x64xbf16>, vector<8x64xf32> -> vector<8x64xf32>
    %20 = vector.broadcast %11 : vector<1x64xf32> to vector<8x64xf32>
    %21 = arith.addf %19, %20 : vector<8x64xf32>
    %22 = tpu.concatenate %15, %21 in 0 : vector<8x64xf32>, vector<8x64xf32> -> vector<16x64xf32>
    %c0_14 = arith.constant 0 : index
    %c0_15 = arith.constant 0 : index
    %23 = vector.load %arg7[%c0_14, %c0_15] : memref<1x64xf32, #tpu.memory_space<vmem>>, vector<1x64xf32>
    %c0_16 = arith.constant 0 : index
    %c0_17 = arith.constant 0 : index
    %24 = vector.load %arg8[%c0_16, %c0_17] : memref<1x64xf32, #tpu.memory_space<vmem>>, vector<1x64xf32>
    %25 = vector.extract_strided_slice %22 {offsets = [0, 0], sizes = [8, 64], strides = [1, 1]} : vector<16x64xf32> to vector<8x64xf32>
    %26 = vector.extract_strided_slice %22 {offsets = [8, 0], sizes = [8, 64], strides = [1, 1]} : vector<16x64xf32> to vector<8x64xf32>
    %c1_i32 = arith.constant 1 : i32
    %27 = tpu.dynamic_rotate %26 by %c1_i32 dim 0 : vector<8x64xf32>, i32 -> vector<8x64xf32>
    %28 = tpu.iota {dimensions = array<i32: 0>} : vector<8x64xi32>
    %c0_i32 = arith.constant 0 : i32
    %29 = vector.broadcast %c0_i32 : i32 to vector<8x64xi32>
    %30 = arith.cmpi eq, %28, %29 : vector<8x64xi32>
    %cst_18 = arith.constant 0.000000e+00 : f32
    %31 = vector.broadcast %cst_18 : f32 to vector<8x64xf32>
    %32 = arith.select %30, %31, %27 : vector<8x64xi1>, vector<8x64xf32>
    %33 = tpu.concatenate %32, %25 in 0 : vector<8x64xf32>, vector<8x64xf32> -> vector<16x64xf32>
    %c7_i32_19 = arith.constant 7 : i32
    %34 = tpu.dynamic_rotate %25 by %c7_i32_19 dim 0 : vector<8x64xf32>, i32 -> vector<8x64xf32>
    %35 = tpu.iota {dimensions = array<i32: 0>} : vector<8x64xi32>
    %c7_i32_20 = arith.constant 7 : i32
    %36 = vector.broadcast %c7_i32_20 : i32 to vector<8x64xi32>
    %37 = arith.cmpi eq, %35, %36 : vector<8x64xi32>
    %cst_21 = arith.constant 0.000000e+00 : f32
    %38 = vector.broadcast %cst_21 : f32 to vector<8x64xf32>
    %39 = arith.select %37, %38, %34 : vector<8x64xi1>, vector<8x64xf32>
    %40 = tpu.concatenate %26, %39 in 0 : vector<8x64xf32>, vector<8x64xf32> -> vector<16x64xf32>
    %41 = tpu.concatenate %33, %22, %40 in 1 : vector<16x64xf32>, vector<16x64xf32>, vector<16x64xf32> -> vector<16x192xf32>
    %42 = arith.truncf %41 : vector<16x192xf32> to vector<16x192xbf16>
    %c0_22 = arith.constant 0 : index
    %c0_23 = arith.constant 0 : index
    %43 = vector.load %arg6[%c0_22, %c0_23] : memref<192x64xbf16, #tpu.memory_space<vmem>>, vector<192x64xbf16>
    %cst_24 = arith.constant dense<0.000000e+00> : vector<16x64xf32>
    %44 = tpu.matmul %42, %43, %cst_24 {dimension_numbers = #tpu.dot_dimension_numbers<[1], [0], [0], [1], [0, 0, 1, 1], [], []>} : vector<16x192xbf16>, vector<192x64xbf16>, vector<16x64xf32> -> vector<16x64xf32>
    %45 = vector.broadcast %23 : vector<1x64xf32> to vector<16x64xf32>
    %46 = arith.mulf %44, %45 : vector<16x64xf32>
    %47 = vector.broadcast %24 : vector<1x64xf32> to vector<16x64xf32>
    %48 = arith.addf %46, %47 : vector<16x64xf32>
    %cst_25 = arith.constant 0.000000e+00 : f32
    %49 = vector.broadcast %cst_25 : f32 to vector<16x64xf32>
    %50 = arith.maximumf %48, %49 : vector<16x64xf32>
    %c0_26 = arith.constant 0 : index
    %c0_27 = arith.constant 0 : index
    %51 = vector.load %arg10[%c0_26, %c0_27] : memref<1x64xf32, #tpu.memory_space<vmem>>, vector<1x64xf32>
    %c0_28 = arith.constant 0 : index
    %c0_29 = arith.constant 0 : index
    %52 = vector.load %arg11[%c0_28, %c0_29] : memref<1x64xf32, #tpu.memory_space<vmem>>, vector<1x64xf32>
    %53 = vector.extract_strided_slice %50 {offsets = [0, 0], sizes = [8, 64], strides = [1, 1]} : vector<16x64xf32> to vector<8x64xf32>
    %54 = vector.extract_strided_slice %50 {offsets = [8, 0], sizes = [8, 64], strides = [1, 1]} : vector<16x64xf32> to vector<8x64xf32>
    %c1_i32_30 = arith.constant 1 : i32
    %55 = tpu.dynamic_rotate %54 by %c1_i32_30 dim 0 : vector<8x64xf32>, i32 -> vector<8x64xf32>
    %56 = tpu.iota {dimensions = array<i32: 0>} : vector<8x64xi32>
    %c0_i32_31 = arith.constant 0 : i32
    %57 = vector.broadcast %c0_i32_31 : i32 to vector<8x64xi32>
    %58 = arith.cmpi eq, %56, %57 : vector<8x64xi32>
    %cst_32 = arith.constant 0.000000e+00 : f32
    %59 = vector.broadcast %cst_32 : f32 to vector<8x64xf32>
    %60 = arith.select %58, %59, %55 : vector<8x64xi1>, vector<8x64xf32>
    %61 = tpu.concatenate %60, %53 in 0 : vector<8x64xf32>, vector<8x64xf32> -> vector<16x64xf32>
    %c7_i32_33 = arith.constant 7 : i32
    %62 = tpu.dynamic_rotate %53 by %c7_i32_33 dim 0 : vector<8x64xf32>, i32 -> vector<8x64xf32>
    %63 = tpu.iota {dimensions = array<i32: 0>} : vector<8x64xi32>
    %c7_i32_34 = arith.constant 7 : i32
    %64 = vector.broadcast %c7_i32_34 : i32 to vector<8x64xi32>
    %65 = arith.cmpi eq, %63, %64 : vector<8x64xi32>
    %cst_35 = arith.constant 0.000000e+00 : f32
    %66 = vector.broadcast %cst_35 : f32 to vector<8x64xf32>
    %67 = arith.select %65, %66, %62 : vector<8x64xi1>, vector<8x64xf32>
    %68 = tpu.concatenate %54, %67 in 0 : vector<8x64xf32>, vector<8x64xf32> -> vector<16x64xf32>
    %69 = tpu.concatenate %61, %50, %68 in 1 : vector<16x64xf32>, vector<16x64xf32>, vector<16x64xf32> -> vector<16x192xf32>
    %70 = arith.truncf %69 : vector<16x192xf32> to vector<16x192xbf16>
    %c0_36 = arith.constant 0 : index
    %c0_37 = arith.constant 0 : index
    %71 = vector.load %arg9[%c0_36, %c0_37] : memref<192x64xbf16, #tpu.memory_space<vmem>>, vector<192x64xbf16>
    %cst_38 = arith.constant dense<0.000000e+00> : vector<16x64xf32>
    %72 = tpu.matmul %70, %71, %cst_38 {dimension_numbers = #tpu.dot_dimension_numbers<[1], [0], [0], [1], [0, 0, 1, 1], [], []>} : vector<16x192xbf16>, vector<192x64xbf16>, vector<16x64xf32> -> vector<16x64xf32>
    %73 = vector.broadcast %51 : vector<1x64xf32> to vector<16x64xf32>
    %74 = arith.mulf %72, %73 : vector<16x64xf32>
    %75 = vector.broadcast %52 : vector<1x64xf32> to vector<16x64xf32>
    %76 = arith.addf %74, %75 : vector<16x64xf32>
    %cst_39 = arith.constant 0.000000e+00 : f32
    %77 = vector.broadcast %cst_39 : f32 to vector<16x64xf32>
    %78 = arith.maximumf %76, %77 : vector<16x64xf32>
    %c0_40 = arith.constant 0 : index
    %c0_41 = arith.constant 0 : index
    %79 = vector.load %arg13[%c0_40, %c0_41] : memref<1x64xf32, #tpu.memory_space<vmem>>, vector<1x64xf32>
    %c0_42 = arith.constant 0 : index
    %c0_43 = arith.constant 0 : index
    %80 = vector.load %arg14[%c0_42, %c0_43] : memref<1x64xf32, #tpu.memory_space<vmem>>, vector<1x64xf32>
    %81 = vector.extract_strided_slice %78 {offsets = [0, 0], sizes = [8, 64], strides = [1, 1]} : vector<16x64xf32> to vector<8x64xf32>
    %82 = vector.extract_strided_slice %78 {offsets = [8, 0], sizes = [8, 64], strides = [1, 1]} : vector<16x64xf32> to vector<8x64xf32>
    %c1_i32_44 = arith.constant 1 : i32
    %83 = tpu.dynamic_rotate %82 by %c1_i32_44 dim 0 : vector<8x64xf32>, i32 -> vector<8x64xf32>
    %84 = tpu.iota {dimensions = array<i32: 0>} : vector<8x64xi32>
    %c0_i32_45 = arith.constant 0 : i32
    %85 = vector.broadcast %c0_i32_45 : i32 to vector<8x64xi32>
    %86 = arith.cmpi eq, %84, %85 : vector<8x64xi32>
    %cst_46 = arith.constant 0.000000e+00 : f32
    %87 = vector.broadcast %cst_46 : f32 to vector<8x64xf32>
    %88 = arith.select %86, %87, %83 : vector<8x64xi1>, vector<8x64xf32>
    %89 = tpu.concatenate %88, %81 in 0 : vector<8x64xf32>, vector<8x64xf32> -> vector<16x64xf32>
    %c7_i32_47 = arith.constant 7 : i32
    %90 = tpu.dynamic_rotate %81 by %c7_i32_47 dim 0 : vector<8x64xf32>, i32 -> vector<8x64xf32>
    %91 = tpu.iota {dimensions = array<i32: 0>} : vector<8x64xi32>
    %c7_i32_48 = arith.constant 7 : i32
    %92 = vector.broadcast %c7_i32_48 : i32 to vector<8x64xi32>
    %93 = arith.cmpi eq, %91, %92 : vector<8x64xi32>
    %cst_49 = arith.constant 0.000000e+00 : f32
    %94 = vector.broadcast %cst_49 : f32 to vector<8x64xf32>
    %95 = arith.select %93, %94, %90 : vector<8x64xi1>, vector<8x64xf32>
    %96 = tpu.concatenate %82, %95 in 0 : vector<8x64xf32>, vector<8x64xf32> -> vector<16x64xf32>
    %97 = tpu.concatenate %89, %78, %96 in 1 : vector<16x64xf32>, vector<16x64xf32>, vector<16x64xf32> -> vector<16x192xf32>
    %98 = arith.truncf %97 : vector<16x192xf32> to vector<16x192xbf16>
    %c0_50 = arith.constant 0 : index
    %c0_51 = arith.constant 0 : index
    %99 = vector.load %arg12[%c0_50, %c0_51] : memref<192x64xbf16, #tpu.memory_space<vmem>>, vector<192x64xbf16>
    %cst_52 = arith.constant dense<0.000000e+00> : vector<16x64xf32>
    %100 = tpu.matmul %98, %99, %cst_52 {dimension_numbers = #tpu.dot_dimension_numbers<[1], [0], [0], [1], [0, 0, 1, 1], [], []>} : vector<16x192xbf16>, vector<192x64xbf16>, vector<16x64xf32> -> vector<16x64xf32>
    %101 = vector.broadcast %79 : vector<1x64xf32> to vector<16x64xf32>
    %102 = arith.mulf %100, %101 : vector<16x64xf32>
    %103 = vector.broadcast %80 : vector<1x64xf32> to vector<16x64xf32>
    %104 = arith.addf %102, %103 : vector<16x64xf32>
    %105 = arith.addf %22, %104 : vector<16x64xf32>
    %cst_53 = arith.constant dense<0.000000e+00> : vector<64xf32>
    %106 = vector.multi_reduction <add>, %105, %cst_53 [0] : vector<16x64xf32> to vector<64xf32>
    %107 = vector.shape_cast %106 : vector<64xf32> to vector<1x64xf32>
    %cst_54 = arith.constant 6.250000e-02 : f32
    %108 = vector.broadcast %cst_54 : f32 to vector<1x64xf32>
    %109 = arith.mulf %107, %108 : vector<1x64xf32>
    %110 = arith.mulf %105, %105 : vector<16x64xf32>
    %cst_55 = arith.constant dense<0.000000e+00> : vector<64xf32>
    %111 = vector.multi_reduction <add>, %110, %cst_55 [0] : vector<16x64xf32> to vector<64xf32>
    %112 = vector.shape_cast %111 : vector<64xf32> to vector<1x64xf32>
    %cst_56 = arith.constant 6.250000e-02 : f32
    %113 = vector.broadcast %cst_56 : f32 to vector<1x64xf32>
    %114 = arith.mulf %112, %113 : vector<1x64xf32>
    %115 = arith.mulf %109, %109 : vector<1x64xf32>
    %116 = arith.subf %114, %115 : vector<1x64xf32>
    %cst_57 = arith.constant 0.000000e+00 : f32
    %117 = vector.broadcast %cst_57 : f32 to vector<1x64xf32>
    %118 = arith.maximumf %116, %117 : vector<1x64xf32>
    %119 = vector.broadcast %109 : vector<1x64xf32> to vector<16x64xf32>
    %120 = arith.subf %105, %119 : vector<16x64xf32>
    %cst_58 = arith.constant 9.99999974E-6 : f32
    %121 = vector.broadcast %cst_58 : f32 to vector<1x64xf32>
    %122 = arith.addf %118, %121 : vector<1x64xf32>
    %123 = math.rsqrt %122 : vector<1x64xf32>
    %124 = vector.broadcast %123 : vector<1x64xf32> to vector<16x64xf32>
    %125 = arith.mulf %120, %124 : vector<16x64xf32>
    %cst_59 = arith.constant 0.000000e+00 : f32
    %126 = vector.broadcast %cst_59 : f32 to vector<16x64xf32>
    %127 = arith.maximumf %125, %126 : vector<16x64xf32>
    %c0_60 = arith.constant 0 : index
    %c0_61 = arith.constant 0 : index
    %128 = vector.load %arg15[%c0_60, %c0_61] : memref<1x64xf32, #tpu.memory_space<vmem>>, vector<1x64xf32>
    %129 = vector.broadcast %128 : vector<1x64xf32> to vector<16x64xf32>
    %130 = arith.mulf %127, %129 : vector<16x64xf32>
    %c0_62 = arith.constant 0 : index
    %c0_63 = arith.constant 0 : index
    %131 = vector.load %arg16[%c0_62, %c0_63] : memref<1x64xf32, #tpu.memory_space<vmem>>, vector<1x64xf32>
    %132 = vector.broadcast %131 : vector<1x64xf32> to vector<16x64xf32>
    %133 = arith.addf %130, %132 : vector<16x64xf32>
    %134 = arith.truncf %133 : vector<16x64xf32> to vector<16x64xbf16>
    %cst_64 = arith.constant 0.000000e+00 : f32
    %135 = vector.broadcast %cst_64 : f32 to vector<16x64xf32>
    %c0_65 = arith.constant 0 : index
    %c0_66 = arith.constant 0 : index
    %c0_67 = arith.constant 0 : index
    %136 = vector.load %arg17[%c0_65, %c0_66, %c0_67] : memref<4x64x16xbf16, #tpu.memory_space<vmem>>, vector<1x64x16xbf16>
    %137 = vector.shape_cast %136 : vector<1x64x16xbf16> to vector<64x16xbf16>
    %cst_68 = arith.constant dense<0.000000e+00> : vector<16x16xf32>
    %138 = tpu.matmul %134, %137, %cst_68 {dimension_numbers = #tpu.dot_dimension_numbers<[1], [0], [0], [1], [0, 0, 1, 1], [], []>} : vector<16x64xbf16>, vector<64x16xbf16>, vector<16x16xf32> -> vector<16x16xf32>
    %c0_69 = arith.constant 0 : index
    %c0_70 = arith.constant 0 : index
    %c0_71 = arith.constant 0 : index
    %139 = vector.load %arg18[%c0_69, %c0_70, %c0_71] : memref<4x64x16xbf16, #tpu.memory_space<vmem>>, vector<1x64x16xbf16>
    %140 = vector.shape_cast %139 : vector<1x64x16xbf16> to vector<64x16xbf16>
    %cst_72 = arith.constant dense<0.000000e+00> : vector<16x16xf32>
    %141 = tpu.matmul %3, %140, %cst_72 {dimension_numbers = #tpu.dot_dimension_numbers<[1], [0], [0], [1], [0, 0, 1, 1], [], []>} : vector<16x64xbf16>, vector<64x16xbf16>, vector<16x16xf32> -> vector<16x16xf32>
    %c0_73 = arith.constant 0 : index
    %c0_74 = arith.constant 0 : index
    %c0_75 = arith.constant 0 : index
    %142 = vector.load %arg19[%c0_73, %c0_74, %c0_75] : memref<4x64x16xbf16, #tpu.memory_space<vmem>>, vector<1x64x16xbf16>
    %143 = vector.shape_cast %142 : vector<1x64x16xbf16> to vector<64x16xbf16>
    %cst_76 = arith.constant dense<0.000000e+00> : vector<16x16xf32>
    %144 = tpu.matmul %3, %143, %cst_76 {dimension_numbers = #tpu.dot_dimension_numbers<[1], [0], [0], [1], [0, 0, 1, 1], [], []>} : vector<16x64xbf16>, vector<64x16xbf16>, vector<16x16xf32> -> vector<16x16xf32>
    %145 = arith.truncf %138 : vector<16x16xf32> to vector<16x16xbf16>
    %146 = arith.truncf %141 : vector<16x16xf32> to vector<16x16xbf16>
    %cst_77 = arith.constant dense<0.000000e+00> : vector<16x16xf32>
    %147 = tpu.matmul %145, %146, %cst_77 {dimension_numbers = #tpu.dot_dimension_numbers<[1], [1], [0], [0], [0, 0, 1, 0], [], []>} : vector<16x16xbf16>, vector<16x16xbf16>, vector<16x16xf32> -> vector<16x16xf32>
    %cst_78 = arith.constant dense<0xFF800000> : vector<16xf32>
    %148 = vector.multi_reduction <maximumf>, %147, %cst_78 [1] : vector<16x16xf32> to vector<16xf32>
    %149 = vector.shape_cast %148 : vector<16xf32> to vector<16x1xf32>
    %150 = vector.broadcast %149 : vector<16x1xf32> to vector<16x16xf32>
    %151 = arith.subf %147, %150 : vector<16x16xf32>
    %152 = math.exp %151 : vector<16x16xf32>
    %cst_79 = arith.constant dense<0.000000e+00> : vector<16xf32>
    %153 = vector.multi_reduction <add>, %152, %cst_79 [1] : vector<16x16xf32> to vector<16xf32>
    %154 = vector.shape_cast %153 : vector<16xf32> to vector<16x1xf32>
    %155 = tpu.reciprocal %154 {approx = true} : vector<16x1xf32> -> vector<16x1xf32>
    %156 = vector.broadcast %155 : vector<16x1xf32> to vector<16x16xf32>
    %157 = arith.mulf %152, %156 : vector<16x16xf32>
    %158 = arith.truncf %157 : vector<16x16xf32> to vector<16x16xbf16>
    %159 = arith.truncf %144 : vector<16x16xf32> to vector<16x16xbf16>
    %cst_80 = arith.constant dense<0.000000e+00> : vector<16x16xf32>
    %160 = tpu.matmul %158, %159, %cst_80 {dimension_numbers = #tpu.dot_dimension_numbers<[1], [0], [0], [1], [0, 0, 1, 1], [], []>} : vector<16x16xbf16>, vector<16x16xbf16>, vector<16x16xf32> -> vector<16x16xf32>
    %161 = arith.truncf %160 : vector<16x16xf32> to vector<16x16xbf16>
    %c0_81 = arith.constant 0 : index
    %c0_82 = arith.constant 0 : index
    %c0_83 = arith.constant 0 : index
    %162 = vector.load %arg20[%c0_81, %c0_82, %c0_83] : memref<4x16x64xbf16, #tpu.memory_space<vmem>>, vector<1x16x64xbf16>
    %163 = vector.shape_cast %162 : vector<1x16x64xbf16> to vector<16x64xbf16>
    %cst_84 = arith.constant dense<0.000000e+00> : vector<16x64xf32>
    %164 = tpu.matmul %161, %163, %cst_84 {dimension_numbers = #tpu.dot_dimension_numbers<[1], [0], [0], [1], [0, 0, 1, 1], [], []>} : vector<16x16xbf16>, vector<16x64xbf16>, vector<16x64xf32> -> vector<16x64xf32>
    %165 = arith.addf %135, %164 : vector<16x64xf32>
    %c1 = arith.constant 1 : index
    %c0_85 = arith.constant 0 : index
    %c0_86 = arith.constant 0 : index
    %166 = vector.load %arg17[%c1, %c0_85, %c0_86] : memref<4x64x16xbf16, #tpu.memory_space<vmem>>, vector<1x64x16xbf16>
    %167 = vector.shape_cast %166 : vector<1x64x16xbf16> to vector<64x16xbf16>
    %cst_87 = arith.constant dense<0.000000e+00> : vector<16x16xf32>
    %168 = tpu.matmul %134, %167, %cst_87 {dimension_numbers = #tpu.dot_dimension_numbers<[1], [0], [0], [1], [0, 0, 1, 1], [], []>} : vector<16x64xbf16>, vector<64x16xbf16>, vector<16x16xf32> -> vector<16x16xf32>
    %c1_88 = arith.constant 1 : index
    %c0_89 = arith.constant 0 : index
    %c0_90 = arith.constant 0 : index
    %169 = vector.load %arg18[%c1_88, %c0_89, %c0_90] : memref<4x64x16xbf16, #tpu.memory_space<vmem>>, vector<1x64x16xbf16>
    %170 = vector.shape_cast %169 : vector<1x64x16xbf16> to vector<64x16xbf16>
    %cst_91 = arith.constant dense<0.000000e+00> : vector<16x16xf32>
    %171 = tpu.matmul %3, %170, %cst_91 {dimension_numbers = #tpu.dot_dimension_numbers<[1], [0], [0], [1], [0, 0, 1, 1], [], []>} : vector<16x64xbf16>, vector<64x16xbf16>, vector<16x16xf32> -> vector<16x16xf32>
    %c1_92 = arith.constant 1 : index
    %c0_93 = arith.constant 0 : index
    %c0_94 = arith.constant 0 : index
    %172 = vector.load %arg19[%c1_92, %c0_93, %c0_94] : memref<4x64x16xbf16, #tpu.memory_space<vmem>>, vector<1x64x16xbf16>
    %173 = vector.shape_cast %172 : vector<1x64x16xbf16> to vector<64x16xbf16>
    %cst_95 = arith.constant dense<0.000000e+00> : vector<16x16xf32>
    %174 = tpu.matmul %3, %173, %cst_95 {dimension_numbers = #tpu.dot_dimension_numbers<[1], [0], [0], [1], [0, 0, 1, 1], [], []>} : vector<16x64xbf16>, vector<64x16xbf16>, vector<16x16xf32> -> vector<16x16xf32>
    %175 = arith.truncf %168 : vector<16x16xf32> to vector<16x16xbf16>
    %176 = arith.truncf %171 : vector<16x16xf32> to vector<16x16xbf16>
    %cst_96 = arith.constant dense<0.000000e+00> : vector<16x16xf32>
    %177 = tpu.matmul %175, %176, %cst_96 {dimension_numbers = #tpu.dot_dimension_numbers<[1], [1], [0], [0], [0, 0, 1, 0], [], []>} : vector<16x16xbf16>, vector<16x16xbf16>, vector<16x16xf32> -> vector<16x16xf32>
    %cst_97 = arith.constant dense<0xFF800000> : vector<16xf32>
    %178 = vector.multi_reduction <maximumf>, %177, %cst_97 [1] : vector<16x16xf32> to vector<16xf32>
    %179 = vector.shape_cast %178 : vector<16xf32> to vector<16x1xf32>
    %180 = vector.broadcast %179 : vector<16x1xf32> to vector<16x16xf32>
    %181 = arith.subf %177, %180 : vector<16x16xf32>
    %182 = math.exp %181 : vector<16x16xf32>
    %cst_98 = arith.constant dense<0.000000e+00> : vector<16xf32>
    %183 = vector.multi_reduction <add>, %182, %cst_98 [1] : vector<16x16xf32> to vector<16xf32>
    %184 = vector.shape_cast %183 : vector<16xf32> to vector<16x1xf32>
    %185 = tpu.reciprocal %184 {approx = true} : vector<16x1xf32> -> vector<16x1xf32>
    %186 = vector.broadcast %185 : vector<16x1xf32> to vector<16x16xf32>
    %187 = arith.mulf %182, %186 : vector<16x16xf32>
    %188 = arith.truncf %187 : vector<16x16xf32> to vector<16x16xbf16>
    %189 = arith.truncf %174 : vector<16x16xf32> to vector<16x16xbf16>
    %cst_99 = arith.constant dense<0.000000e+00> : vector<16x16xf32>
    %190 = tpu.matmul %188, %189, %cst_99 {dimension_numbers = #tpu.dot_dimension_numbers<[1], [0], [0], [1], [0, 0, 1, 1], [], []>} : vector<16x16xbf16>, vector<16x16xbf16>, vector<16x16xf32> -> vector<16x16xf32>
    %191 = arith.truncf %190 : vector<16x16xf32> to vector<16x16xbf16>
    %c1_100 = arith.constant 1 : index
    %c0_101 = arith.constant 0 : index
    %c0_102 = arith.constant 0 : index
    %192 = vector.load %arg20[%c1_100, %c0_101, %c0_102] : memref<4x16x64xbf16, #tpu.memory_space<vmem>>, vector<1x16x64xbf16>
    %193 = vector.shape_cast %192 : vector<1x16x64xbf16> to vector<16x64xbf16>
    %cst_103 = arith.constant dense<0.000000e+00> : vector<16x64xf32>
    %194 = tpu.matmul %191, %193, %cst_103 {dimension_numbers = #tpu.dot_dimension_numbers<[1], [0], [0], [1], [0, 0, 1, 1], [], []>} : vector<16x16xbf16>, vector<16x64xbf16>, vector<16x64xf32> -> vector<16x64xf32>
    %195 = arith.addf %165, %194 : vector<16x64xf32>
    %c2 = arith.constant 2 : index
    %c0_104 = arith.constant 0 : index
    %c0_105 = arith.constant 0 : index
    %196 = vector.load %arg17[%c2, %c0_104, %c0_105] : memref<4x64x16xbf16, #tpu.memory_space<vmem>>, vector<1x64x16xbf16>
    %197 = vector.shape_cast %196 : vector<1x64x16xbf16> to vector<64x16xbf16>
    %cst_106 = arith.constant dense<0.000000e+00> : vector<16x16xf32>
    %198 = tpu.matmul %134, %197, %cst_106 {dimension_numbers = #tpu.dot_dimension_numbers<[1], [0], [0], [1], [0, 0, 1, 1], [], []>} : vector<16x64xbf16>, vector<64x16xbf16>, vector<16x16xf32> -> vector<16x16xf32>
    %c2_107 = arith.constant 2 : index
    %c0_108 = arith.constant 0 : index
    %c0_109 = arith.constant 0 : index
    %199 = vector.load %arg18[%c2_107, %c0_108, %c0_109] : memref<4x64x16xbf16, #tpu.memory_space<vmem>>, vector<1x64x16xbf16>
    %200 = vector.shape_cast %199 : vector<1x64x16xbf16> to vector<64x16xbf16>
    %cst_110 = arith.constant dense<0.000000e+00> : vector<16x16xf32>
    %201 = tpu.matmul %3, %200, %cst_110 {dimension_numbers = #tpu.dot_dimension_numbers<[1], [0], [0], [1], [0, 0, 1, 1], [], []>} : vector<16x64xbf16>, vector<64x16xbf16>, vector<16x16xf32> -> vector<16x16xf32>
    %c2_111 = arith.constant 2 : index
    %c0_112 = arith.constant 0 : index
    %c0_113 = arith.constant 0 : index
    %202 = vector.load %arg19[%c2_111, %c0_112, %c0_113] : memref<4x64x16xbf16, #tpu.memory_space<vmem>>, vector<1x64x16xbf16>
    %203 = vector.shape_cast %202 : vector<1x64x16xbf16> to vector<64x16xbf16>
    %cst_114 = arith.constant dense<0.000000e+00> : vector<16x16xf32>
    %204 = tpu.matmul %3, %203, %cst_114 {dimension_numbers = #tpu.dot_dimension_numbers<[1], [0], [0], [1], [0, 0, 1, 1], [], []>} : vector<16x64xbf16>, vector<64x16xbf16>, vector<16x16xf32> -> vector<16x16xf32>
    %205 = arith.truncf %198 : vector<16x16xf32> to vector<16x16xbf16>
    %206 = arith.truncf %201 : vector<16x16xf32> to vector<16x16xbf16>
    %cst_115 = arith.constant dense<0.000000e+00> : vector<16x16xf32>
    %207 = tpu.matmul %205, %206, %cst_115 {dimension_numbers = #tpu.dot_dimension_numbers<[1], [1], [0], [0], [0, 0, 1, 0], [], []>} : vector<16x16xbf16>, vector<16x16xbf16>, vector<16x16xf32> -> vector<16x16xf32>
    %cst_116 = arith.constant dense<0xFF800000> : vector<16xf32>
    %208 = vector.multi_reduction <maximumf>, %207, %cst_116 [1] : vector<16x16xf32> to vector<16xf32>
    %209 = vector.shape_cast %208 : vector<16xf32> to vector<16x1xf32>
    %210 = vector.broadcast %209 : vector<16x1xf32> to vector<16x16xf32>
    %211 = arith.subf %207, %210 : vector<16x16xf32>
    %212 = math.exp %211 : vector<16x16xf32>
    %cst_117 = arith.constant dense<0.000000e+00> : vector<16xf32>
    %213 = vector.multi_reduction <add>, %212, %cst_117 [1] : vector<16x16xf32> to vector<16xf32>
    %214 = vector.shape_cast %213 : vector<16xf32> to vector<16x1xf32>
    %215 = tpu.reciprocal %214 {approx = true} : vector<16x1xf32> -> vector<16x1xf32>
    %216 = vector.broadcast %215 : vector<16x1xf32> to vector<16x16xf32>
    %217 = arith.mulf %212, %216 : vector<16x16xf32>
    %218 = arith.truncf %217 : vector<16x16xf32> to vector<16x16xbf16>
    %219 = arith.truncf %204 : vector<16x16xf32> to vector<16x16xbf16>
    %cst_118 = arith.constant dense<0.000000e+00> : vector<16x16xf32>
    %220 = tpu.matmul %218, %219, %cst_118 {dimension_numbers = #tpu.dot_dimension_numbers<[1], [0], [0], [1], [0, 0, 1, 1], [], []>} : vector<16x16xbf16>, vector<16x16xbf16>, vector<16x16xf32> -> vector<16x16xf32>
    %221 = arith.truncf %220 : vector<16x16xf32> to vector<16x16xbf16>
    %c2_119 = arith.constant 2 : index
    %c0_120 = arith.constant 0 : index
    %c0_121 = arith.constant 0 : index
    %222 = vector.load %arg20[%c2_119, %c0_120, %c0_121] : memref<4x16x64xbf16, #tpu.memory_space<vmem>>, vector<1x16x64xbf16>
    %223 = vector.shape_cast %222 : vector<1x16x64xbf16> to vector<16x64xbf16>
    %cst_122 = arith.constant dense<0.000000e+00> : vector<16x64xf32>
    %224 = tpu.matmul %221, %223, %cst_122 {dimension_numbers = #tpu.dot_dimension_numbers<[1], [0], [0], [1], [0, 0, 1, 1], [], []>} : vector<16x16xbf16>, vector<16x64xbf16>, vector<16x64xf32> -> vector<16x64xf32>
    %225 = arith.addf %195, %224 : vector<16x64xf32>
    %c3 = arith.constant 3 : index
    %c0_123 = arith.constant 0 : index
    %c0_124 = arith.constant 0 : index
    %226 = vector.load %arg17[%c3, %c0_123, %c0_124] : memref<4x64x16xbf16, #tpu.memory_space<vmem>>, vector<1x64x16xbf16>
    %227 = vector.shape_cast %226 : vector<1x64x16xbf16> to vector<64x16xbf16>
    %cst_125 = arith.constant dense<0.000000e+00> : vector<16x16xf32>
    %228 = tpu.matmul %134, %227, %cst_125 {dimension_numbers = #tpu.dot_dimension_numbers<[1], [0], [0], [1], [0, 0, 1, 1], [], []>} : vector<16x64xbf16>, vector<64x16xbf16>, vector<16x16xf32> -> vector<16x16xf32>
    %c3_126 = arith.constant 3 : index
    %c0_127 = arith.constant 0 : index
    %c0_128 = arith.constant 0 : index
    %229 = vector.load %arg18[%c3_126, %c0_127, %c0_128] : memref<4x64x16xbf16, #tpu.memory_space<vmem>>, vector<1x64x16xbf16>
    %230 = vector.shape_cast %229 : vector<1x64x16xbf16> to vector<64x16xbf16>
    %cst_129 = arith.constant dense<0.000000e+00> : vector<16x16xf32>
    %231 = tpu.matmul %3, %230, %cst_129 {dimension_numbers = #tpu.dot_dimension_numbers<[1], [0], [0], [1], [0, 0, 1, 1], [], []>} : vector<16x64xbf16>, vector<64x16xbf16>, vector<16x16xf32> -> vector<16x16xf32>
    %c3_130 = arith.constant 3 : index
    %c0_131 = arith.constant 0 : index
    %c0_132 = arith.constant 0 : index
    %232 = vector.load %arg19[%c3_130, %c0_131, %c0_132] : memref<4x64x16xbf16, #tpu.memory_space<vmem>>, vector<1x64x16xbf16>
    %233 = vector.shape_cast %232 : vector<1x64x16xbf16> to vector<64x16xbf16>
    %cst_133 = arith.constant dense<0.000000e+00> : vector<16x16xf32>
    %234 = tpu.matmul %3, %233, %cst_133 {dimension_numbers = #tpu.dot_dimension_numbers<[1], [0], [0], [1], [0, 0, 1, 1], [], []>} : vector<16x64xbf16>, vector<64x16xbf16>, vector<16x16xf32> -> vector<16x16xf32>
    %235 = arith.truncf %228 : vector<16x16xf32> to vector<16x16xbf16>
    %236 = arith.truncf %231 : vector<16x16xf32> to vector<16x16xbf16>
    %cst_134 = arith.constant dense<0.000000e+00> : vector<16x16xf32>
    %237 = tpu.matmul %235, %236, %cst_134 {dimension_numbers = #tpu.dot_dimension_numbers<[1], [1], [0], [0], [0, 0, 1, 0], [], []>} : vector<16x16xbf16>, vector<16x16xbf16>, vector<16x16xf32> -> vector<16x16xf32>
    %cst_135 = arith.constant dense<0xFF800000> : vector<16xf32>
    %238 = vector.multi_reduction <maximumf>, %237, %cst_135 [1] : vector<16x16xf32> to vector<16xf32>
    %239 = vector.shape_cast %238 : vector<16xf32> to vector<16x1xf32>
    %240 = vector.broadcast %239 : vector<16x1xf32> to vector<16x16xf32>
    %241 = arith.subf %237, %240 : vector<16x16xf32>
    %242 = math.exp %241 : vector<16x16xf32>
    %cst_136 = arith.constant dense<0.000000e+00> : vector<16xf32>
    %243 = vector.multi_reduction <add>, %242, %cst_136 [1] : vector<16x16xf32> to vector<16xf32>
    %244 = vector.shape_cast %243 : vector<16xf32> to vector<16x1xf32>
    %245 = tpu.reciprocal %244 {approx = true} : vector<16x1xf32> -> vector<16x1xf32>
    %246 = vector.broadcast %245 : vector<16x1xf32> to vector<16x16xf32>
    %247 = arith.mulf %242, %246 : vector<16x16xf32>
    %248 = arith.truncf %247 : vector<16x16xf32> to vector<16x16xbf16>
    %249 = arith.truncf %234 : vector<16x16xf32> to vector<16x16xbf16>
    %cst_137 = arith.constant dense<0.000000e+00> : vector<16x16xf32>
    %250 = tpu.matmul %248, %249, %cst_137 {dimension_numbers = #tpu.dot_dimension_numbers<[1], [0], [0], [1], [0, 0, 1, 1], [], []>} : vector<16x16xbf16>, vector<16x16xbf16>, vector<16x16xf32> -> vector<16x16xf32>
    %251 = arith.truncf %250 : vector<16x16xf32> to vector<16x16xbf16>
    %c3_138 = arith.constant 3 : index
    %c0_139 = arith.constant 0 : index
    %c0_140 = arith.constant 0 : index
    %252 = vector.load %arg20[%c3_138, %c0_139, %c0_140] : memref<4x16x64xbf16, #tpu.memory_space<vmem>>, vector<1x16x64xbf16>
    %253 = vector.shape_cast %252 : vector<1x16x64xbf16> to vector<16x64xbf16>
    %cst_141 = arith.constant dense<0.000000e+00> : vector<16x64xf32>
    %254 = tpu.matmul %251, %253, %cst_141 {dimension_numbers = #tpu.dot_dimension_numbers<[1], [0], [0], [1], [0, 0, 1, 1], [], []>} : vector<16x16xbf16>, vector<16x64xbf16>, vector<16x64xf32> -> vector<16x64xf32>
    %255 = arith.addf %225, %254 : vector<16x64xf32>
    %256 = arith.addf %133, %255 : vector<16x64xf32>
    %257 = vector.extract_strided_slice %256 {offsets = [0, 0], sizes = [8, 64], strides = [1, 1]} : vector<16x64xf32> to vector<8x64xf32>
    %258 = vector.extract_strided_slice %256 {offsets = [8, 0], sizes = [8, 64], strides = [1, 1]} : vector<16x64xf32> to vector<8x64xf32>
    %259 = tpu.concatenate %257, %258 in 1 : vector<8x64xf32>, vector<8x64xf32> -> vector<8x128xf32>
    %260 = arith.truncf %259 : vector<8x128xf32> to vector<8x128xbf16>
    %c0_142 = arith.constant 0 : index
    %c0_143 = arith.constant 0 : index
    %c0_144 = arith.constant 0 : index
    %261 = vector.load %arg21[%c0_142, %c0_143, %c0_144] : memref<1x8x128xbf16, #tpu.memory_space<vmem>>, vector<1x8x128xbf16>
    %262 = vector.shape_cast %261 : vector<1x8x128xbf16> to vector<8x128xbf16>
    %263 = vector.shape_cast %260 : vector<8x128xbf16> to vector<1x8x128xbf16>
    tpu.vector_store %arg21[%c0_142, %c0_143, %c0_144], %263 {strides = array<i32>} : memref<1x8x128xbf16, #tpu.memory_space<vmem>>, vector<1x8x128xbf16>,
    return
  }
  func.func @transform_0(%arg0: i32) -> (i32, i32, i32) {
    %c0_i32 = arith.constant 0 : i32
    %c0_i32_0 = arith.constant 0 : i32
    %c0_i32_1 = arith.constant 0 : i32
    return %arg0, %c0_i32, %c0_i32_0 : i32, i32, i32
  }
  func.func @transform_1(%arg0: i32) -> (i32, i32, i32) {
    %c0_i32 = arith.constant 0 : i32
    %c0_i32_0 = arith.constant 0 : i32
    %c0_i32_1 = arith.constant 0 : i32
    return %arg0, %c0_i32, %c0_i32_0 : i32, i32, i32
  }
  func.func @transform_2(%arg0: i32) -> (i32, i32) {
    %c0_i32 = arith.constant 0 : i32
    %c0_i32_0 = arith.constant 0 : i32
    %c0_i32_1 = arith.constant 0 : i32
    return %c0_i32, %c0_i32_0 : i32, i32
  }
  func.func @transform_3(%arg0: i32) -> (i32, i32) {
    %c0_i32 = arith.constant 0 : i32
    %c0_i32_0 = arith.constant 0 : i32
    %c0_i32_1 = arith.constant 0 : i32
    return %c0_i32, %c0_i32_0 : i32, i32
  }
  func.func @transform_4(%arg0: i32) -> (i32, i32) {
    %c0_i32 = arith.constant 0 : i32
    %c0_i32_0 = arith.constant 0 : i32
    %c0_i32_1 = arith.constant 0 : i32
    return %c0_i32, %c0_i32_0 : i32, i32
  }
  func.func @transform_5(%arg0: i32) -> (i32, i32) {
    %c0_i32 = arith.constant 0 : i32
    %c0_i32_0 = arith.constant 0 : i32
    %c0_i32_1 = arith.constant 0 : i32
    return %c0_i32, %c0_i32_0 : i32, i32
  }
  func.func @transform_6(%arg0: i32) -> (i32, i32) {
    %c0_i32 = arith.constant 0 : i32
    %c0_i32_0 = arith.constant 0 : i32
    %c0_i32_1 = arith.constant 0 : i32
    return %c0_i32, %c0_i32_0 : i32, i32
  }
  func.func @transform_7(%arg0: i32) -> (i32, i32) {
    %c0_i32 = arith.constant 0 : i32
    %c0_i32_0 = arith.constant 0 : i32
    %c0_i32_1 = arith.constant 0 : i32
    return %c0_i32, %c0_i32_0 : i32, i32
  }
  func.func @transform_8(%arg0: i32) -> (i32, i32) {
    %c0_i32 = arith.constant 0 : i32
    %c0_i32_0 = arith.constant 0 : i32
    %c0_i32_1 = arith.constant 0 : i32
    return %c0_i32, %c0_i32_0 : i32, i32
  }
  func.func @transform_9(%arg0: i32) -> (i32, i32) {
    %c0_i32 = arith.constant 0 : i32
    %c0_i32_0 = arith.constant 0 : i32
    %c0_i32_1 = arith.constant 0 : i32
    return %c0_i32, %c0_i32_0 : i32, i32
  }
  func.func @transform_10(%arg0: i32) -> (i32, i32) {
    %c0_i32 = arith.constant 0 : i32
    %c0_i32_0 = arith.constant 0 : i32
    %c0_i32_1 = arith.constant 0 : i32
    return %c0_i32, %c0_i32_0 : i32, i32
  }
  func.func @transform_11(%arg0: i32) -> (i32, i32) {
    %c0_i32 = arith.constant 0 : i32
    %c0_i32_0 = arith.constant 0 : i32
    %c0_i32_1 = arith.constant 0 : i32
    return %c0_i32, %c0_i32_0 : i32, i32
  }
  func.func @transform_12(%arg0: i32) -> (i32, i32) {
    %c0_i32 = arith.constant 0 : i32
    %c0_i32_0 = arith.constant 0 : i32
    %c0_i32_1 = arith.constant 0 : i32
    return %c0_i32, %c0_i32_0 : i32, i32
  }
  func.func @transform_13(%arg0: i32) -> (i32, i32) {
    %c0_i32 = arith.constant 0 : i32
    %c0_i32_0 = arith.constant 0 : i32
    %c0_i32_1 = arith.constant 0 : i32
    return %c0_i32, %c0_i32_0 : i32, i32
  }
  func.func @transform_14(%arg0: i32) -> (i32, i32) {
    %c0_i32 = arith.constant 0 : i32
    %c0_i32_0 = arith.constant 0 : i32
    %c0_i32_1 = arith.constant 0 : i32
    return %c0_i32, %c0_i32_0 : i32, i32
  }
  func.func @transform_15(%arg0: i32) -> (i32, i32) {
    %c0_i32 = arith.constant 0 : i32
    %c0_i32_0 = arith.constant 0 : i32
    %c0_i32_1 = arith.constant 0 : i32
    return %c0_i32, %c0_i32_0 : i32, i32
  }
  func.func @transform_16(%arg0: i32) -> (i32, i32, i32) {
    %c0_i32 = arith.constant 0 : i32
    %c0_i32_0 = arith.constant 0 : i32
    %c0_i32_1 = arith.constant 0 : i32
    %c0_i32_2 = arith.constant 0 : i32
    return %c0_i32, %c0_i32_0, %c0_i32_1 : i32, i32, i32
  }
  func.func @transform_17(%arg0: i32) -> (i32, i32, i32) {
    %c0_i32 = arith.constant 0 : i32
    %c0_i32_0 = arith.constant 0 : i32
    %c0_i32_1 = arith.constant 0 : i32
    %c0_i32_2 = arith.constant 0 : i32
    return %c0_i32, %c0_i32_0, %c0_i32_1 : i32, i32, i32
  }
  func.func @transform_18(%arg0: i32) -> (i32, i32, i32) {
    %c0_i32 = arith.constant 0 : i32
    %c0_i32_0 = arith.constant 0 : i32
    %c0_i32_1 = arith.constant 0 : i32
    %c0_i32_2 = arith.constant 0 : i32
    return %c0_i32, %c0_i32_0, %c0_i32_1 : i32, i32, i32
  }
  func.func @transform_19(%arg0: i32) -> (i32, i32, i32) {
    %c0_i32 = arith.constant 0 : i32
    %c0_i32_0 = arith.constant 0 : i32
    %c0_i32_1 = arith.constant 0 : i32
    %c0_i32_2 = arith.constant 0 : i32
    return %c0_i32, %c0_i32_0, %c0_i32_1 : i32, i32, i32
  }
  func.func @transform_20(%arg0: i32) -> (i32, i32, i32) {
    %c0_i32 = arith.constant 0 : i32
    %c0_i32_0 = arith.constant 0 : i32
    %c0_i32_1 = arith.constant 0 : i32
    return %arg0, %c0_i32, %c0_i32_0 : i32, i32, i32
  }
}

module attributes {stable_mosaic.version = 11 : i64} {
  func.func @_decoder_layer_kernel(%arg0: i32, %arg1: memref<1x16x64xbf16, #tpu.memory_space<vmem>>, %arg2: memref<1x32x64xbf16, #tpu.memory_space<vmem>>, %arg3: memref<64x64xbf16, #tpu.memory_space<vmem>>, %arg4: memref<128x64xbf16, #tpu.memory_space<vmem>>, %arg5: memref<1x64xf32, #tpu.memory_space<vmem>>, %arg6: memref<192x64xbf16, #tpu.memory_space<vmem>>, %arg7: memref<1x64xf32, #tpu.memory_space<vmem>>, %arg8: memref<1x64xf32, #tpu.memory_space<vmem>>, %arg9: memref<192x64xbf16, #tpu.memory_space<vmem>>, %arg10: memref<1x64xf32, #tpu.memory_space<vmem>>, %arg11: memref<1x64xf32, #tpu.memory_space<vmem>>, %arg12: memref<192x64xbf16, #tpu.memory_space<vmem>>, %arg13: memref<1x64xf32, #tpu.memory_space<vmem>>, %arg14: memref<1x64xf32, #tpu.memory_space<vmem>>, %arg15: memref<1x64xf32, #tpu.memory_space<vmem>>, %arg16: memref<1x64xf32, #tpu.memory_space<vmem>>, %arg17: memref<4x64x16xbf16, #tpu.memory_space<vmem>>, %arg18: memref<4x64x16xbf16, #tpu.memory_space<vmem>>, %arg19: memref<4x64x16xbf16, #tpu.memory_space<vmem>>, %arg20: memref<4x16x64xbf16, #tpu.memory_space<vmem>>, %arg21: memref<1x16x128xbf16, #tpu.memory_space<vmem>>) attributes {dimension_semantics = [#tpu.dimension_semantics<parallel>], iteration_bounds = array<i64: 2>, scalar_prefetch = 0 : i64, scratch_operands = 0 : i64, tpu.core_type = #tpu.core_type<tc>, window_params = [{transform_indices = @transform_0, window_bounds = array<i64: 1, 16, 64>}, {transform_indices = @transform_1, window_bounds = array<i64: 1, 32, 64>}, {pipeline_mode = #tpu.pipeline_mode<synchronous>, transform_indices = @transform_2, window_bounds = array<i64: 64, 64>}, {pipeline_mode = #tpu.pipeline_mode<synchronous>, transform_indices = @transform_3, window_bounds = array<i64: 128, 64>}, {pipeline_mode = #tpu.pipeline_mode<synchronous>, transform_indices = @transform_4, window_bounds = array<i64: 1, 64>}, {pipeline_mode = #tpu.pipeline_mode<synchronous>, transform_indices = @transform_5, window_bounds = array<i64: 192, 64>}, {pipeline_mode = #tpu.pipeline_mode<synchronous>, transform_indices = @transform_6, window_bounds = array<i64: 1, 64>}, {pipeline_mode = #tpu.pipeline_mode<synchronous>, transform_indices = @transform_7, window_bounds = array<i64: 1, 64>}, {pipeline_mode = #tpu.pipeline_mode<synchronous>, transform_indices = @transform_8, window_bounds = array<i64: 192, 64>}, {pipeline_mode = #tpu.pipeline_mode<synchronous>, transform_indices = @transform_9, window_bounds = array<i64: 1, 64>}, {pipeline_mode = #tpu.pipeline_mode<synchronous>, transform_indices = @transform_10, window_bounds = array<i64: 1, 64>}, {pipeline_mode = #tpu.pipeline_mode<synchronous>, transform_indices = @transform_11, window_bounds = array<i64: 192, 64>}, {pipeline_mode = #tpu.pipeline_mode<synchronous>, transform_indices = @transform_12, window_bounds = array<i64: 1, 64>}, {pipeline_mode = #tpu.pipeline_mode<synchronous>, transform_indices = @transform_13, window_bounds = array<i64: 1, 64>}, {pipeline_mode = #tpu.pipeline_mode<synchronous>, transform_indices = @transform_14, window_bounds = array<i64: 1, 64>}, {pipeline_mode = #tpu.pipeline_mode<synchronous>, transform_indices = @transform_15, window_bounds = array<i64: 1, 64>}, {pipeline_mode = #tpu.pipeline_mode<synchronous>, transform_indices = @transform_16, window_bounds = array<i64: 4, 64, 16>}, {pipeline_mode = #tpu.pipeline_mode<synchronous>, transform_indices = @transform_17, window_bounds = array<i64: 4, 64, 16>}, {pipeline_mode = #tpu.pipeline_mode<synchronous>, transform_indices = @transform_18, window_bounds = array<i64: 4, 64, 16>}, {pipeline_mode = #tpu.pipeline_mode<synchronous>, transform_indices = @transform_19, window_bounds = array<i64: 4, 16, 64>}, {transform_indices = @transform_20, window_bounds = array<i64: 1, 16, 128>}]} {
    %c0 = arith.constant 0 : index
    %c0_0 = arith.constant 0 : index
    %c0_1 = arith.constant 0 : index
    %0 = vector.load %arg1[%c0, %c0_0, %c0_1] : memref<1x16x64xbf16, #tpu.memory_space<vmem>>, vector<1x16x64xbf16>
    %1 = vector.shape_cast %0 : vector<1x16x64xbf16> to vector<16x64xbf16>
    %2 = arith.extf %1 : vector<16x64xbf16> to vector<16x64xf32>
    %c0_2 = arith.constant 0 : index
    %c0_3 = arith.constant 0 : index
    %c0_4 = arith.constant 0 : index
    %3 = vector.load %arg2[%c0_2, %c0_3, %c0_4] : memref<1x32x64xbf16, #tpu.memory_space<vmem>>, vector<1x32x64xbf16>
    %4 = vector.shape_cast %3 : vector<1x32x64xbf16> to vector<32x64xbf16>
    %c15_i32 = arith.constant 15 : i32
    %5 = tpu.dynamic_rotate %2 by %c15_i32 dim 0 : vector<16x64xf32>, i32 -> vector<16x64xf32>
    %6 = tpu.iota {dimensions = array<i32: 0>} : vector<16x64xi32>
    %c15_i32_5 = arith.constant 15 : i32
    %7 = vector.broadcast %c15_i32_5 : i32 to vector<16x64xi32>
    %8 = arith.cmpi eq, %6, %7 : vector<16x64xi32>
    %cst = arith.constant 0.000000e+00 : f32
    %9 = vector.broadcast %cst : f32 to vector<16x64xf32>
    %10 = arith.select %8, %9, %5 : vector<16x64xi1>, vector<16x64xf32>
    %11 = arith.truncf %2 : vector<16x64xf32> to vector<16x64xbf16>
    %c0_6 = arith.constant 0 : index
    %c0_7 = arith.constant 0 : index
    %12 = vector.load %arg5[%c0_6, %c0_7] : memref<1x64xf32, #tpu.memory_space<vmem>>, vector<1x64xf32>
    %c0_8 = arith.constant 0 : index
    %c0_9 = arith.constant 0 : index
    %13 = vector.load %arg3[%c0_8, %c0_9] : memref<64x64xbf16, #tpu.memory_space<vmem>>, vector<64x64xbf16>
    %cst_10 = arith.constant dense<0.000000e+00> : vector<16x64xf32>
    %14 = tpu.matmul %11, %13, %cst_10 {dimension_numbers = #tpu.dot_dimension_numbers<[1], [0], [0], [1], [0, 0, 1, 1], [], []>} : vector<16x64xbf16>, vector<64x64xbf16>, vector<16x64xf32> -> vector<16x64xf32>
    %15 = vector.broadcast %12 : vector<1x64xf32> to vector<16x64xf32>
    %16 = arith.addf %14, %15 : vector<16x64xf32>
    %17 = arith.truncf %10 : vector<16x64xf32> to vector<16x64xbf16>
    %18 = tpu.concatenate %17, %11 in 1 : vector<16x64xbf16>, vector<16x64xbf16> -> vector<16x128xbf16>
    %c0_11 = arith.constant 0 : index
    %c0_12 = arith.constant 0 : index
    %19 = vector.load %arg4[%c0_11, %c0_12] : memref<128x64xbf16, #tpu.memory_space<vmem>>, vector<128x64xbf16>
    %cst_13 = arith.constant dense<0.000000e+00> : vector<16x64xf32>
    %20 = tpu.matmul %18, %19, %cst_13 {dimension_numbers = #tpu.dot_dimension_numbers<[1], [0], [0], [1], [0, 0, 1, 1], [], []>} : vector<16x128xbf16>, vector<128x64xbf16>, vector<16x64xf32> -> vector<16x64xf32>
    %21 = vector.broadcast %12 : vector<1x64xf32> to vector<16x64xf32>
    %22 = arith.addf %20, %21 : vector<16x64xf32>
    %23 = tpu.concatenate %16, %22 in 0 : vector<16x64xf32>, vector<16x64xf32> -> vector<32x64xf32>
    %c0_14 = arith.constant 0 : index
    %c0_15 = arith.constant 0 : index
    %24 = vector.load %arg7[%c0_14, %c0_15] : memref<1x64xf32, #tpu.memory_space<vmem>>, vector<1x64xf32>
    %c0_16 = arith.constant 0 : index
    %c0_17 = arith.constant 0 : index
    %25 = vector.load %arg8[%c0_16, %c0_17] : memref<1x64xf32, #tpu.memory_space<vmem>>, vector<1x64xf32>
    %26 = vector.extract_strided_slice %23 {offsets = [0, 0], sizes = [16, 64], strides = [1, 1]} : vector<32x64xf32> to vector<16x64xf32>
    %27 = vector.extract_strided_slice %23 {offsets = [16, 0], sizes = [16, 64], strides = [1, 1]} : vector<32x64xf32> to vector<16x64xf32>
    %c1_i32 = arith.constant 1 : i32
    %28 = tpu.dynamic_rotate %27 by %c1_i32 dim 0 : vector<16x64xf32>, i32 -> vector<16x64xf32>
    %29 = tpu.iota {dimensions = array<i32: 0>} : vector<16x64xi32>
    %c0_i32 = arith.constant 0 : i32
    %30 = vector.broadcast %c0_i32 : i32 to vector<16x64xi32>
    %31 = arith.cmpi eq, %29, %30 : vector<16x64xi32>
    %cst_18 = arith.constant 0.000000e+00 : f32
    %32 = vector.broadcast %cst_18 : f32 to vector<16x64xf32>
    %33 = arith.select %31, %32, %28 : vector<16x64xi1>, vector<16x64xf32>
    %34 = tpu.concatenate %33, %26 in 0 : vector<16x64xf32>, vector<16x64xf32> -> vector<32x64xf32>
    %c15_i32_19 = arith.constant 15 : i32
    %35 = tpu.dynamic_rotate %26 by %c15_i32_19 dim 0 : vector<16x64xf32>, i32 -> vector<16x64xf32>
    %36 = tpu.iota {dimensions = array<i32: 0>} : vector<16x64xi32>
    %c15_i32_20 = arith.constant 15 : i32
    %37 = vector.broadcast %c15_i32_20 : i32 to vector<16x64xi32>
    %38 = arith.cmpi eq, %36, %37 : vector<16x64xi32>
    %cst_21 = arith.constant 0.000000e+00 : f32
    %39 = vector.broadcast %cst_21 : f32 to vector<16x64xf32>
    %40 = arith.select %38, %39, %35 : vector<16x64xi1>, vector<16x64xf32>
    %41 = tpu.concatenate %27, %40 in 0 : vector<16x64xf32>, vector<16x64xf32> -> vector<32x64xf32>
    %42 = tpu.concatenate %34, %23, %41 in 1 : vector<32x64xf32>, vector<32x64xf32>, vector<32x64xf32> -> vector<32x192xf32>
    %43 = arith.truncf %42 : vector<32x192xf32> to vector<32x192xbf16>
    %c0_22 = arith.constant 0 : index
    %c0_23 = arith.constant 0 : index
    %44 = vector.load %arg6[%c0_22, %c0_23] : memref<192x64xbf16, #tpu.memory_space<vmem>>, vector<192x64xbf16>
    %cst_24 = arith.constant dense<0.000000e+00> : vector<32x64xf32>
    %45 = tpu.matmul %43, %44, %cst_24 {dimension_numbers = #tpu.dot_dimension_numbers<[1], [0], [0], [1], [0, 0, 1, 1], [], []>} : vector<32x192xbf16>, vector<192x64xbf16>, vector<32x64xf32> -> vector<32x64xf32>
    %46 = vector.broadcast %24 : vector<1x64xf32> to vector<32x64xf32>
    %47 = arith.mulf %45, %46 : vector<32x64xf32>
    %48 = vector.broadcast %25 : vector<1x64xf32> to vector<32x64xf32>
    %49 = arith.addf %47, %48 : vector<32x64xf32>
    %cst_25 = arith.constant 0.000000e+00 : f32
    %50 = vector.broadcast %cst_25 : f32 to vector<32x64xf32>
    %51 = arith.maximumf %49, %50 : vector<32x64xf32>
    %c0_26 = arith.constant 0 : index
    %c0_27 = arith.constant 0 : index
    %52 = vector.load %arg10[%c0_26, %c0_27] : memref<1x64xf32, #tpu.memory_space<vmem>>, vector<1x64xf32>
    %c0_28 = arith.constant 0 : index
    %c0_29 = arith.constant 0 : index
    %53 = vector.load %arg11[%c0_28, %c0_29] : memref<1x64xf32, #tpu.memory_space<vmem>>, vector<1x64xf32>
    %54 = vector.extract_strided_slice %51 {offsets = [0, 0], sizes = [16, 64], strides = [1, 1]} : vector<32x64xf32> to vector<16x64xf32>
    %55 = vector.extract_strided_slice %51 {offsets = [16, 0], sizes = [16, 64], strides = [1, 1]} : vector<32x64xf32> to vector<16x64xf32>
    %c1_i32_30 = arith.constant 1 : i32
    %56 = tpu.dynamic_rotate %55 by %c1_i32_30 dim 0 : vector<16x64xf32>, i32 -> vector<16x64xf32>
    %57 = tpu.iota {dimensions = array<i32: 0>} : vector<16x64xi32>
    %c0_i32_31 = arith.constant 0 : i32
    %58 = vector.broadcast %c0_i32_31 : i32 to vector<16x64xi32>
    %59 = arith.cmpi eq, %57, %58 : vector<16x64xi32>
    %cst_32 = arith.constant 0.000000e+00 : f32
    %60 = vector.broadcast %cst_32 : f32 to vector<16x64xf32>
    %61 = arith.select %59, %60, %56 : vector<16x64xi1>, vector<16x64xf32>
    %62 = tpu.concatenate %61, %54 in 0 : vector<16x64xf32>, vector<16x64xf32> -> vector<32x64xf32>
    %c15_i32_33 = arith.constant 15 : i32
    %63 = tpu.dynamic_rotate %54 by %c15_i32_33 dim 0 : vector<16x64xf32>, i32 -> vector<16x64xf32>
    %64 = tpu.iota {dimensions = array<i32: 0>} : vector<16x64xi32>
    %c15_i32_34 = arith.constant 15 : i32
    %65 = vector.broadcast %c15_i32_34 : i32 to vector<16x64xi32>
    %66 = arith.cmpi eq, %64, %65 : vector<16x64xi32>
    %cst_35 = arith.constant 0.000000e+00 : f32
    %67 = vector.broadcast %cst_35 : f32 to vector<16x64xf32>
    %68 = arith.select %66, %67, %63 : vector<16x64xi1>, vector<16x64xf32>
    %69 = tpu.concatenate %55, %68 in 0 : vector<16x64xf32>, vector<16x64xf32> -> vector<32x64xf32>
    %70 = tpu.concatenate %62, %51, %69 in 1 : vector<32x64xf32>, vector<32x64xf32>, vector<32x64xf32> -> vector<32x192xf32>
    %71 = arith.truncf %70 : vector<32x192xf32> to vector<32x192xbf16>
    %c0_36 = arith.constant 0 : index
    %c0_37 = arith.constant 0 : index
    %72 = vector.load %arg9[%c0_36, %c0_37] : memref<192x64xbf16, #tpu.memory_space<vmem>>, vector<192x64xbf16>
    %cst_38 = arith.constant dense<0.000000e+00> : vector<32x64xf32>
    %73 = tpu.matmul %71, %72, %cst_38 {dimension_numbers = #tpu.dot_dimension_numbers<[1], [0], [0], [1], [0, 0, 1, 1], [], []>} : vector<32x192xbf16>, vector<192x64xbf16>, vector<32x64xf32> -> vector<32x64xf32>
    %74 = vector.broadcast %52 : vector<1x64xf32> to vector<32x64xf32>
    %75 = arith.mulf %73, %74 : vector<32x64xf32>
    %76 = vector.broadcast %53 : vector<1x64xf32> to vector<32x64xf32>
    %77 = arith.addf %75, %76 : vector<32x64xf32>
    %cst_39 = arith.constant 0.000000e+00 : f32
    %78 = vector.broadcast %cst_39 : f32 to vector<32x64xf32>
    %79 = arith.maximumf %77, %78 : vector<32x64xf32>
    %c0_40 = arith.constant 0 : index
    %c0_41 = arith.constant 0 : index
    %80 = vector.load %arg13[%c0_40, %c0_41] : memref<1x64xf32, #tpu.memory_space<vmem>>, vector<1x64xf32>
    %c0_42 = arith.constant 0 : index
    %c0_43 = arith.constant 0 : index
    %81 = vector.load %arg14[%c0_42, %c0_43] : memref<1x64xf32, #tpu.memory_space<vmem>>, vector<1x64xf32>
    %82 = vector.extract_strided_slice %79 {offsets = [0, 0], sizes = [16, 64], strides = [1, 1]} : vector<32x64xf32> to vector<16x64xf32>
    %83 = vector.extract_strided_slice %79 {offsets = [16, 0], sizes = [16, 64], strides = [1, 1]} : vector<32x64xf32> to vector<16x64xf32>
    %c1_i32_44 = arith.constant 1 : i32
    %84 = tpu.dynamic_rotate %83 by %c1_i32_44 dim 0 : vector<16x64xf32>, i32 -> vector<16x64xf32>
    %85 = tpu.iota {dimensions = array<i32: 0>} : vector<16x64xi32>
    %c0_i32_45 = arith.constant 0 : i32
    %86 = vector.broadcast %c0_i32_45 : i32 to vector<16x64xi32>
    %87 = arith.cmpi eq, %85, %86 : vector<16x64xi32>
    %cst_46 = arith.constant 0.000000e+00 : f32
    %88 = vector.broadcast %cst_46 : f32 to vector<16x64xf32>
    %89 = arith.select %87, %88, %84 : vector<16x64xi1>, vector<16x64xf32>
    %90 = tpu.concatenate %89, %82 in 0 : vector<16x64xf32>, vector<16x64xf32> -> vector<32x64xf32>
    %c15_i32_47 = arith.constant 15 : i32
    %91 = tpu.dynamic_rotate %82 by %c15_i32_47 dim 0 : vector<16x64xf32>, i32 -> vector<16x64xf32>
    %92 = tpu.iota {dimensions = array<i32: 0>} : vector<16x64xi32>
    %c15_i32_48 = arith.constant 15 : i32
    %93 = vector.broadcast %c15_i32_48 : i32 to vector<16x64xi32>
    %94 = arith.cmpi eq, %92, %93 : vector<16x64xi32>
    %cst_49 = arith.constant 0.000000e+00 : f32
    %95 = vector.broadcast %cst_49 : f32 to vector<16x64xf32>
    %96 = arith.select %94, %95, %91 : vector<16x64xi1>, vector<16x64xf32>
    %97 = tpu.concatenate %83, %96 in 0 : vector<16x64xf32>, vector<16x64xf32> -> vector<32x64xf32>
    %98 = tpu.concatenate %90, %79, %97 in 1 : vector<32x64xf32>, vector<32x64xf32>, vector<32x64xf32> -> vector<32x192xf32>
    %99 = arith.truncf %98 : vector<32x192xf32> to vector<32x192xbf16>
    %c0_50 = arith.constant 0 : index
    %c0_51 = arith.constant 0 : index
    %100 = vector.load %arg12[%c0_50, %c0_51] : memref<192x64xbf16, #tpu.memory_space<vmem>>, vector<192x64xbf16>
    %cst_52 = arith.constant dense<0.000000e+00> : vector<32x64xf32>
    %101 = tpu.matmul %99, %100, %cst_52 {dimension_numbers = #tpu.dot_dimension_numbers<[1], [0], [0], [1], [0, 0, 1, 1], [], []>} : vector<32x192xbf16>, vector<192x64xbf16>, vector<32x64xf32> -> vector<32x64xf32>
    %102 = vector.broadcast %80 : vector<1x64xf32> to vector<32x64xf32>
    %103 = arith.mulf %101, %102 : vector<32x64xf32>
    %104 = vector.broadcast %81 : vector<1x64xf32> to vector<32x64xf32>
    %105 = arith.addf %103, %104 : vector<32x64xf32>
    %106 = arith.addf %23, %105 : vector<32x64xf32>
    %cst_53 = arith.constant dense<0.000000e+00> : vector<64xf32>
    %107 = vector.multi_reduction <add>, %106, %cst_53 [0] : vector<32x64xf32> to vector<64xf32>
    %108 = vector.shape_cast %107 : vector<64xf32> to vector<1x64xf32>
    %cst_54 = arith.constant 3.125000e-02 : f32
    %109 = vector.broadcast %cst_54 : f32 to vector<1x64xf32>
    %110 = arith.mulf %108, %109 : vector<1x64xf32>
    %111 = arith.mulf %106, %106 : vector<32x64xf32>
    %cst_55 = arith.constant dense<0.000000e+00> : vector<64xf32>
    %112 = vector.multi_reduction <add>, %111, %cst_55 [0] : vector<32x64xf32> to vector<64xf32>
    %113 = vector.shape_cast %112 : vector<64xf32> to vector<1x64xf32>
    %cst_56 = arith.constant 3.125000e-02 : f32
    %114 = vector.broadcast %cst_56 : f32 to vector<1x64xf32>
    %115 = arith.mulf %113, %114 : vector<1x64xf32>
    %116 = arith.mulf %110, %110 : vector<1x64xf32>
    %117 = arith.subf %115, %116 : vector<1x64xf32>
    %cst_57 = arith.constant 0.000000e+00 : f32
    %118 = vector.broadcast %cst_57 : f32 to vector<1x64xf32>
    %119 = arith.maximumf %117, %118 : vector<1x64xf32>
    %120 = vector.broadcast %110 : vector<1x64xf32> to vector<32x64xf32>
    %121 = arith.subf %106, %120 : vector<32x64xf32>
    %cst_58 = arith.constant 9.99999974E-6 : f32
    %122 = vector.broadcast %cst_58 : f32 to vector<1x64xf32>
    %123 = arith.addf %119, %122 : vector<1x64xf32>
    %124 = math.rsqrt %123 : vector<1x64xf32>
    %125 = vector.broadcast %124 : vector<1x64xf32> to vector<32x64xf32>
    %126 = arith.mulf %121, %125 : vector<32x64xf32>
    %cst_59 = arith.constant 0.000000e+00 : f32
    %127 = vector.broadcast %cst_59 : f32 to vector<32x64xf32>
    %128 = arith.maximumf %126, %127 : vector<32x64xf32>
    %c0_60 = arith.constant 0 : index
    %c0_61 = arith.constant 0 : index
    %129 = vector.load %arg15[%c0_60, %c0_61] : memref<1x64xf32, #tpu.memory_space<vmem>>, vector<1x64xf32>
    %130 = vector.broadcast %129 : vector<1x64xf32> to vector<32x64xf32>
    %131 = arith.mulf %128, %130 : vector<32x64xf32>
    %c0_62 = arith.constant 0 : index
    %c0_63 = arith.constant 0 : index
    %132 = vector.load %arg16[%c0_62, %c0_63] : memref<1x64xf32, #tpu.memory_space<vmem>>, vector<1x64xf32>
    %133 = vector.broadcast %132 : vector<1x64xf32> to vector<32x64xf32>
    %134 = arith.addf %131, %133 : vector<32x64xf32>
    %135 = arith.truncf %134 : vector<32x64xf32> to vector<32x64xbf16>
    %cst_64 = arith.constant 0.000000e+00 : f32
    %136 = vector.broadcast %cst_64 : f32 to vector<32x64xf32>
    %c0_65 = arith.constant 0 : index
    %c0_66 = arith.constant 0 : index
    %c0_67 = arith.constant 0 : index
    %137 = vector.load %arg17[%c0_65, %c0_66, %c0_67] : memref<4x64x16xbf16, #tpu.memory_space<vmem>>, vector<1x64x16xbf16>
    %138 = vector.shape_cast %137 : vector<1x64x16xbf16> to vector<64x16xbf16>
    %cst_68 = arith.constant dense<0.000000e+00> : vector<32x16xf32>
    %139 = tpu.matmul %135, %138, %cst_68 {dimension_numbers = #tpu.dot_dimension_numbers<[1], [0], [0], [1], [0, 0, 1, 1], [], []>} : vector<32x64xbf16>, vector<64x16xbf16>, vector<32x16xf32> -> vector<32x16xf32>
    %c0_69 = arith.constant 0 : index
    %c0_70 = arith.constant 0 : index
    %c0_71 = arith.constant 0 : index
    %140 = vector.load %arg18[%c0_69, %c0_70, %c0_71] : memref<4x64x16xbf16, #tpu.memory_space<vmem>>, vector<1x64x16xbf16>
    %141 = vector.shape_cast %140 : vector<1x64x16xbf16> to vector<64x16xbf16>
    %cst_72 = arith.constant dense<0.000000e+00> : vector<32x16xf32>
    %142 = tpu.matmul %4, %141, %cst_72 {dimension_numbers = #tpu.dot_dimension_numbers<[1], [0], [0], [1], [0, 0, 1, 1], [], []>} : vector<32x64xbf16>, vector<64x16xbf16>, vector<32x16xf32> -> vector<32x16xf32>
    %c0_73 = arith.constant 0 : index
    %c0_74 = arith.constant 0 : index
    %c0_75 = arith.constant 0 : index
    %143 = vector.load %arg19[%c0_73, %c0_74, %c0_75] : memref<4x64x16xbf16, #tpu.memory_space<vmem>>, vector<1x64x16xbf16>
    %144 = vector.shape_cast %143 : vector<1x64x16xbf16> to vector<64x16xbf16>
    %cst_76 = arith.constant dense<0.000000e+00> : vector<32x16xf32>
    %145 = tpu.matmul %4, %144, %cst_76 {dimension_numbers = #tpu.dot_dimension_numbers<[1], [0], [0], [1], [0, 0, 1, 1], [], []>} : vector<32x64xbf16>, vector<64x16xbf16>, vector<32x16xf32> -> vector<32x16xf32>
    %146 = arith.truncf %139 : vector<32x16xf32> to vector<32x16xbf16>
    %147 = arith.truncf %142 : vector<32x16xf32> to vector<32x16xbf16>
    %cst_77 = arith.constant dense<0.000000e+00> : vector<32x32xf32>
    %148 = tpu.matmul %146, %147, %cst_77 {dimension_numbers = #tpu.dot_dimension_numbers<[1], [1], [0], [0], [0, 0, 1, 0], [], []>} : vector<32x16xbf16>, vector<32x16xbf16>, vector<32x32xf32> -> vector<32x32xf32>
    %cst_78 = arith.constant dense<0xFF800000> : vector<32xf32>
    %149 = vector.multi_reduction <maximumf>, %148, %cst_78 [1] : vector<32x32xf32> to vector<32xf32>
    %150 = vector.shape_cast %149 : vector<32xf32> to vector<32x1xf32>
    %151 = vector.broadcast %150 : vector<32x1xf32> to vector<32x32xf32>
    %152 = arith.subf %148, %151 : vector<32x32xf32>
    %153 = math.exp %152 : vector<32x32xf32>
    %cst_79 = arith.constant dense<0.000000e+00> : vector<32xf32>
    %154 = vector.multi_reduction <add>, %153, %cst_79 [1] : vector<32x32xf32> to vector<32xf32>
    %155 = vector.shape_cast %154 : vector<32xf32> to vector<32x1xf32>
    %156 = tpu.reciprocal %155 {approx = true} : vector<32x1xf32> -> vector<32x1xf32>
    %157 = vector.broadcast %156 : vector<32x1xf32> to vector<32x32xf32>
    %158 = arith.mulf %153, %157 : vector<32x32xf32>
    %159 = arith.truncf %158 : vector<32x32xf32> to vector<32x32xbf16>
    %160 = arith.truncf %145 : vector<32x16xf32> to vector<32x16xbf16>
    %cst_80 = arith.constant dense<0.000000e+00> : vector<32x16xf32>
    %161 = tpu.matmul %159, %160, %cst_80 {dimension_numbers = #tpu.dot_dimension_numbers<[1], [0], [0], [1], [0, 0, 1, 1], [], []>} : vector<32x32xbf16>, vector<32x16xbf16>, vector<32x16xf32> -> vector<32x16xf32>
    %162 = arith.truncf %161 : vector<32x16xf32> to vector<32x16xbf16>
    %c0_81 = arith.constant 0 : index
    %c0_82 = arith.constant 0 : index
    %c0_83 = arith.constant 0 : index
    %163 = vector.load %arg20[%c0_81, %c0_82, %c0_83] : memref<4x16x64xbf16, #tpu.memory_space<vmem>>, vector<1x16x64xbf16>
    %164 = vector.shape_cast %163 : vector<1x16x64xbf16> to vector<16x64xbf16>
    %cst_84 = arith.constant dense<0.000000e+00> : vector<32x64xf32>
    %165 = tpu.matmul %162, %164, %cst_84 {dimension_numbers = #tpu.dot_dimension_numbers<[1], [0], [0], [1], [0, 0, 1, 1], [], []>} : vector<32x16xbf16>, vector<16x64xbf16>, vector<32x64xf32> -> vector<32x64xf32>
    %166 = arith.addf %136, %165 : vector<32x64xf32>
    %c1 = arith.constant 1 : index
    %c0_85 = arith.constant 0 : index
    %c0_86 = arith.constant 0 : index
    %167 = vector.load %arg17[%c1, %c0_85, %c0_86] : memref<4x64x16xbf16, #tpu.memory_space<vmem>>, vector<1x64x16xbf16>
    %168 = vector.shape_cast %167 : vector<1x64x16xbf16> to vector<64x16xbf16>
    %cst_87 = arith.constant dense<0.000000e+00> : vector<32x16xf32>
    %169 = tpu.matmul %135, %168, %cst_87 {dimension_numbers = #tpu.dot_dimension_numbers<[1], [0], [0], [1], [0, 0, 1, 1], [], []>} : vector<32x64xbf16>, vector<64x16xbf16>, vector<32x16xf32> -> vector<32x16xf32>
    %c1_88 = arith.constant 1 : index
    %c0_89 = arith.constant 0 : index
    %c0_90 = arith.constant 0 : index
    %170 = vector.load %arg18[%c1_88, %c0_89, %c0_90] : memref<4x64x16xbf16, #tpu.memory_space<vmem>>, vector<1x64x16xbf16>
    %171 = vector.shape_cast %170 : vector<1x64x16xbf16> to vector<64x16xbf16>
    %cst_91 = arith.constant dense<0.000000e+00> : vector<32x16xf32>
    %172 = tpu.matmul %4, %171, %cst_91 {dimension_numbers = #tpu.dot_dimension_numbers<[1], [0], [0], [1], [0, 0, 1, 1], [], []>} : vector<32x64xbf16>, vector<64x16xbf16>, vector<32x16xf32> -> vector<32x16xf32>
    %c1_92 = arith.constant 1 : index
    %c0_93 = arith.constant 0 : index
    %c0_94 = arith.constant 0 : index
    %173 = vector.load %arg19[%c1_92, %c0_93, %c0_94] : memref<4x64x16xbf16, #tpu.memory_space<vmem>>, vector<1x64x16xbf16>
    %174 = vector.shape_cast %173 : vector<1x64x16xbf16> to vector<64x16xbf16>
    %cst_95 = arith.constant dense<0.000000e+00> : vector<32x16xf32>
    %175 = tpu.matmul %4, %174, %cst_95 {dimension_numbers = #tpu.dot_dimension_numbers<[1], [0], [0], [1], [0, 0, 1, 1], [], []>} : vector<32x64xbf16>, vector<64x16xbf16>, vector<32x16xf32> -> vector<32x16xf32>
    %176 = arith.truncf %169 : vector<32x16xf32> to vector<32x16xbf16>
    %177 = arith.truncf %172 : vector<32x16xf32> to vector<32x16xbf16>
    %cst_96 = arith.constant dense<0.000000e+00> : vector<32x32xf32>
    %178 = tpu.matmul %176, %177, %cst_96 {dimension_numbers = #tpu.dot_dimension_numbers<[1], [1], [0], [0], [0, 0, 1, 0], [], []>} : vector<32x16xbf16>, vector<32x16xbf16>, vector<32x32xf32> -> vector<32x32xf32>
    %cst_97 = arith.constant dense<0xFF800000> : vector<32xf32>
    %179 = vector.multi_reduction <maximumf>, %178, %cst_97 [1] : vector<32x32xf32> to vector<32xf32>
    %180 = vector.shape_cast %179 : vector<32xf32> to vector<32x1xf32>
    %181 = vector.broadcast %180 : vector<32x1xf32> to vector<32x32xf32>
    %182 = arith.subf %178, %181 : vector<32x32xf32>
    %183 = math.exp %182 : vector<32x32xf32>
    %cst_98 = arith.constant dense<0.000000e+00> : vector<32xf32>
    %184 = vector.multi_reduction <add>, %183, %cst_98 [1] : vector<32x32xf32> to vector<32xf32>
    %185 = vector.shape_cast %184 : vector<32xf32> to vector<32x1xf32>
    %186 = tpu.reciprocal %185 {approx = true} : vector<32x1xf32> -> vector<32x1xf32>
    %187 = vector.broadcast %186 : vector<32x1xf32> to vector<32x32xf32>
    %188 = arith.mulf %183, %187 : vector<32x32xf32>
    %189 = arith.truncf %188 : vector<32x32xf32> to vector<32x32xbf16>
    %190 = arith.truncf %175 : vector<32x16xf32> to vector<32x16xbf16>
    %cst_99 = arith.constant dense<0.000000e+00> : vector<32x16xf32>
    %191 = tpu.matmul %189, %190, %cst_99 {dimension_numbers = #tpu.dot_dimension_numbers<[1], [0], [0], [1], [0, 0, 1, 1], [], []>} : vector<32x32xbf16>, vector<32x16xbf16>, vector<32x16xf32> -> vector<32x16xf32>
    %192 = arith.truncf %191 : vector<32x16xf32> to vector<32x16xbf16>
    %c1_100 = arith.constant 1 : index
    %c0_101 = arith.constant 0 : index
    %c0_102 = arith.constant 0 : index
    %193 = vector.load %arg20[%c1_100, %c0_101, %c0_102] : memref<4x16x64xbf16, #tpu.memory_space<vmem>>, vector<1x16x64xbf16>
    %194 = vector.shape_cast %193 : vector<1x16x64xbf16> to vector<16x64xbf16>
    %cst_103 = arith.constant dense<0.000000e+00> : vector<32x64xf32>
    %195 = tpu.matmul %192, %194, %cst_103 {dimension_numbers = #tpu.dot_dimension_numbers<[1], [0], [0], [1], [0, 0, 1, 1], [], []>} : vector<32x16xbf16>, vector<16x64xbf16>, vector<32x64xf32> -> vector<32x64xf32>
    %196 = arith.addf %166, %195 : vector<32x64xf32>
    %c2 = arith.constant 2 : index
    %c0_104 = arith.constant 0 : index
    %c0_105 = arith.constant 0 : index
    %197 = vector.load %arg17[%c2, %c0_104, %c0_105] : memref<4x64x16xbf16, #tpu.memory_space<vmem>>, vector<1x64x16xbf16>
    %198 = vector.shape_cast %197 : vector<1x64x16xbf16> to vector<64x16xbf16>
    %cst_106 = arith.constant dense<0.000000e+00> : vector<32x16xf32>
    %199 = tpu.matmul %135, %198, %cst_106 {dimension_numbers = #tpu.dot_dimension_numbers<[1], [0], [0], [1], [0, 0, 1, 1], [], []>} : vector<32x64xbf16>, vector<64x16xbf16>, vector<32x16xf32> -> vector<32x16xf32>
    %c2_107 = arith.constant 2 : index
    %c0_108 = arith.constant 0 : index
    %c0_109 = arith.constant 0 : index
    %200 = vector.load %arg18[%c2_107, %c0_108, %c0_109] : memref<4x64x16xbf16, #tpu.memory_space<vmem>>, vector<1x64x16xbf16>
    %201 = vector.shape_cast %200 : vector<1x64x16xbf16> to vector<64x16xbf16>
    %cst_110 = arith.constant dense<0.000000e+00> : vector<32x16xf32>
    %202 = tpu.matmul %4, %201, %cst_110 {dimension_numbers = #tpu.dot_dimension_numbers<[1], [0], [0], [1], [0, 0, 1, 1], [], []>} : vector<32x64xbf16>, vector<64x16xbf16>, vector<32x16xf32> -> vector<32x16xf32>
    %c2_111 = arith.constant 2 : index
    %c0_112 = arith.constant 0 : index
    %c0_113 = arith.constant 0 : index
    %203 = vector.load %arg19[%c2_111, %c0_112, %c0_113] : memref<4x64x16xbf16, #tpu.memory_space<vmem>>, vector<1x64x16xbf16>
    %204 = vector.shape_cast %203 : vector<1x64x16xbf16> to vector<64x16xbf16>
    %cst_114 = arith.constant dense<0.000000e+00> : vector<32x16xf32>
    %205 = tpu.matmul %4, %204, %cst_114 {dimension_numbers = #tpu.dot_dimension_numbers<[1], [0], [0], [1], [0, 0, 1, 1], [], []>} : vector<32x64xbf16>, vector<64x16xbf16>, vector<32x16xf32> -> vector<32x16xf32>
    %206 = arith.truncf %199 : vector<32x16xf32> to vector<32x16xbf16>
    %207 = arith.truncf %202 : vector<32x16xf32> to vector<32x16xbf16>
    %cst_115 = arith.constant dense<0.000000e+00> : vector<32x32xf32>
    %208 = tpu.matmul %206, %207, %cst_115 {dimension_numbers = #tpu.dot_dimension_numbers<[1], [1], [0], [0], [0, 0, 1, 0], [], []>} : vector<32x16xbf16>, vector<32x16xbf16>, vector<32x32xf32> -> vector<32x32xf32>
    %cst_116 = arith.constant dense<0xFF800000> : vector<32xf32>
    %209 = vector.multi_reduction <maximumf>, %208, %cst_116 [1] : vector<32x32xf32> to vector<32xf32>
    %210 = vector.shape_cast %209 : vector<32xf32> to vector<32x1xf32>
    %211 = vector.broadcast %210 : vector<32x1xf32> to vector<32x32xf32>
    %212 = arith.subf %208, %211 : vector<32x32xf32>
    %213 = math.exp %212 : vector<32x32xf32>
    %cst_117 = arith.constant dense<0.000000e+00> : vector<32xf32>
    %214 = vector.multi_reduction <add>, %213, %cst_117 [1] : vector<32x32xf32> to vector<32xf32>
    %215 = vector.shape_cast %214 : vector<32xf32> to vector<32x1xf32>
    %216 = tpu.reciprocal %215 {approx = true} : vector<32x1xf32> -> vector<32x1xf32>
    %217 = vector.broadcast %216 : vector<32x1xf32> to vector<32x32xf32>
    %218 = arith.mulf %213, %217 : vector<32x32xf32>
    %219 = arith.truncf %218 : vector<32x32xf32> to vector<32x32xbf16>
    %220 = arith.truncf %205 : vector<32x16xf32> to vector<32x16xbf16>
    %cst_118 = arith.constant dense<0.000000e+00> : vector<32x16xf32>
    %221 = tpu.matmul %219, %220, %cst_118 {dimension_numbers = #tpu.dot_dimension_numbers<[1], [0], [0], [1], [0, 0, 1, 1], [], []>} : vector<32x32xbf16>, vector<32x16xbf16>, vector<32x16xf32> -> vector<32x16xf32>
    %222 = arith.truncf %221 : vector<32x16xf32> to vector<32x16xbf16>
    %c2_119 = arith.constant 2 : index
    %c0_120 = arith.constant 0 : index
    %c0_121 = arith.constant 0 : index
    %223 = vector.load %arg20[%c2_119, %c0_120, %c0_121] : memref<4x16x64xbf16, #tpu.memory_space<vmem>>, vector<1x16x64xbf16>
    %224 = vector.shape_cast %223 : vector<1x16x64xbf16> to vector<16x64xbf16>
    %cst_122 = arith.constant dense<0.000000e+00> : vector<32x64xf32>
    %225 = tpu.matmul %222, %224, %cst_122 {dimension_numbers = #tpu.dot_dimension_numbers<[1], [0], [0], [1], [0, 0, 1, 1], [], []>} : vector<32x16xbf16>, vector<16x64xbf16>, vector<32x64xf32> -> vector<32x64xf32>
    %226 = arith.addf %196, %225 : vector<32x64xf32>
    %c3 = arith.constant 3 : index
    %c0_123 = arith.constant 0 : index
    %c0_124 = arith.constant 0 : index
    %227 = vector.load %arg17[%c3, %c0_123, %c0_124] : memref<4x64x16xbf16, #tpu.memory_space<vmem>>, vector<1x64x16xbf16>
    %228 = vector.shape_cast %227 : vector<1x64x16xbf16> to vector<64x16xbf16>
    %cst_125 = arith.constant dense<0.000000e+00> : vector<32x16xf32>
    %229 = tpu.matmul %135, %228, %cst_125 {dimension_numbers = #tpu.dot_dimension_numbers<[1], [0], [0], [1], [0, 0, 1, 1], [], []>} : vector<32x64xbf16>, vector<64x16xbf16>, vector<32x16xf32> -> vector<32x16xf32>
    %c3_126 = arith.constant 3 : index
    %c0_127 = arith.constant 0 : index
    %c0_128 = arith.constant 0 : index
    %230 = vector.load %arg18[%c3_126, %c0_127, %c0_128] : memref<4x64x16xbf16, #tpu.memory_space<vmem>>, vector<1x64x16xbf16>
    %231 = vector.shape_cast %230 : vector<1x64x16xbf16> to vector<64x16xbf16>
    %cst_129 = arith.constant dense<0.000000e+00> : vector<32x16xf32>
    %232 = tpu.matmul %4, %231, %cst_129 {dimension_numbers = #tpu.dot_dimension_numbers<[1], [0], [0], [1], [0, 0, 1, 1], [], []>} : vector<32x64xbf16>, vector<64x16xbf16>, vector<32x16xf32> -> vector<32x16xf32>
    %c3_130 = arith.constant 3 : index
    %c0_131 = arith.constant 0 : index
    %c0_132 = arith.constant 0 : index
    %233 = vector.load %arg19[%c3_130, %c0_131, %c0_132] : memref<4x64x16xbf16, #tpu.memory_space<vmem>>, vector<1x64x16xbf16>
    %234 = vector.shape_cast %233 : vector<1x64x16xbf16> to vector<64x16xbf16>
    %cst_133 = arith.constant dense<0.000000e+00> : vector<32x16xf32>
    %235 = tpu.matmul %4, %234, %cst_133 {dimension_numbers = #tpu.dot_dimension_numbers<[1], [0], [0], [1], [0, 0, 1, 1], [], []>} : vector<32x64xbf16>, vector<64x16xbf16>, vector<32x16xf32> -> vector<32x16xf32>
    %236 = arith.truncf %229 : vector<32x16xf32> to vector<32x16xbf16>
    %237 = arith.truncf %232 : vector<32x16xf32> to vector<32x16xbf16>
    %cst_134 = arith.constant dense<0.000000e+00> : vector<32x32xf32>
    %238 = tpu.matmul %236, %237, %cst_134 {dimension_numbers = #tpu.dot_dimension_numbers<[1], [1], [0], [0], [0, 0, 1, 0], [], []>} : vector<32x16xbf16>, vector<32x16xbf16>, vector<32x32xf32> -> vector<32x32xf32>
    %cst_135 = arith.constant dense<0xFF800000> : vector<32xf32>
    %239 = vector.multi_reduction <maximumf>, %238, %cst_135 [1] : vector<32x32xf32> to vector<32xf32>
    %240 = vector.shape_cast %239 : vector<32xf32> to vector<32x1xf32>
    %241 = vector.broadcast %240 : vector<32x1xf32> to vector<32x32xf32>
    %242 = arith.subf %238, %241 : vector<32x32xf32>
    %243 = math.exp %242 : vector<32x32xf32>
    %cst_136 = arith.constant dense<0.000000e+00> : vector<32xf32>
    %244 = vector.multi_reduction <add>, %243, %cst_136 [1] : vector<32x32xf32> to vector<32xf32>
    %245 = vector.shape_cast %244 : vector<32xf32> to vector<32x1xf32>
    %246 = tpu.reciprocal %245 {approx = true} : vector<32x1xf32> -> vector<32x1xf32>
    %247 = vector.broadcast %246 : vector<32x1xf32> to vector<32x32xf32>
    %248 = arith.mulf %243, %247 : vector<32x32xf32>
    %249 = arith.truncf %248 : vector<32x32xf32> to vector<32x32xbf16>
    %250 = arith.truncf %235 : vector<32x16xf32> to vector<32x16xbf16>
    %cst_137 = arith.constant dense<0.000000e+00> : vector<32x16xf32>
    %251 = tpu.matmul %249, %250, %cst_137 {dimension_numbers = #tpu.dot_dimension_numbers<[1], [0], [0], [1], [0, 0, 1, 1], [], []>} : vector<32x32xbf16>, vector<32x16xbf16>, vector<32x16xf32> -> vector<32x16xf32>
    %252 = arith.truncf %251 : vector<32x16xf32> to vector<32x16xbf16>
    %c3_138 = arith.constant 3 : index
    %c0_139 = arith.constant 0 : index
    %c0_140 = arith.constant 0 : index
    %253 = vector.load %arg20[%c3_138, %c0_139, %c0_140] : memref<4x16x64xbf16, #tpu.memory_space<vmem>>, vector<1x16x64xbf16>
    %254 = vector.shape_cast %253 : vector<1x16x64xbf16> to vector<16x64xbf16>
    %cst_141 = arith.constant dense<0.000000e+00> : vector<32x64xf32>
    %255 = tpu.matmul %252, %254, %cst_141 {dimension_numbers = #tpu.dot_dimension_numbers<[1], [0], [0], [1], [0, 0, 1, 1], [], []>} : vector<32x16xbf16>, vector<16x64xbf16>, vector<32x64xf32> -> vector<32x64xf32>
    %256 = arith.addf %226, %255 : vector<32x64xf32>
    %257 = arith.addf %134, %256 : vector<32x64xf32>
    %258 = vector.extract_strided_slice %257 {offsets = [0, 0], sizes = [16, 64], strides = [1, 1]} : vector<32x64xf32> to vector<16x64xf32>
    %259 = vector.extract_strided_slice %257 {offsets = [16, 0], sizes = [16, 64], strides = [1, 1]} : vector<32x64xf32> to vector<16x64xf32>
    %260 = tpu.concatenate %258, %259 in 1 : vector<16x64xf32>, vector<16x64xf32> -> vector<16x128xf32>
    %261 = arith.truncf %260 : vector<16x128xf32> to vector<16x128xbf16>
    %c0_142 = arith.constant 0 : index
    %c0_143 = arith.constant 0 : index
    %c0_144 = arith.constant 0 : index
    %262 = vector.load %arg21[%c0_142, %c0_143, %c0_144] : memref<1x16x128xbf16, #tpu.memory_space<vmem>>, vector<1x16x128xbf16>
    %263 = vector.shape_cast %262 : vector<1x16x128xbf16> to vector<16x128xbf16>
    %264 = vector.shape_cast %261 : vector<16x128xbf16> to vector<1x16x128xbf16>
    tpu.vector_store %arg21[%c0_142, %c0_143, %c0_144], %264 {strides = array<i32>} : memref<1x16x128xbf16, #tpu.memory_space<vmem>>, vector<1x16x128xbf16>,
    return
  }
  func.func @transform_0(%arg0: i32) -> (i32, i32, i32) {
    %c0_i32 = arith.constant 0 : i32
    %c0_i32_0 = arith.constant 0 : i32
    %c0_i32_1 = arith.constant 0 : i32
    return %arg0, %c0_i32, %c0_i32_0 : i32, i32, i32
  }
  func.func @transform_1(%arg0: i32) -> (i32, i32, i32) {
    %c0_i32 = arith.constant 0 : i32
    %c0_i32_0 = arith.constant 0 : i32
    %c0_i32_1 = arith.constant 0 : i32
    return %arg0, %c0_i32, %c0_i32_0 : i32, i32, i32
  }
  func.func @transform_2(%arg0: i32) -> (i32, i32) {
    %c0_i32 = arith.constant 0 : i32
    %c0_i32_0 = arith.constant 0 : i32
    %c0_i32_1 = arith.constant 0 : i32
    return %c0_i32, %c0_i32_0 : i32, i32
  }
  func.func @transform_3(%arg0: i32) -> (i32, i32) {
    %c0_i32 = arith.constant 0 : i32
    %c0_i32_0 = arith.constant 0 : i32
    %c0_i32_1 = arith.constant 0 : i32
    return %c0_i32, %c0_i32_0 : i32, i32
  }
  func.func @transform_4(%arg0: i32) -> (i32, i32) {
    %c0_i32 = arith.constant 0 : i32
    %c0_i32_0 = arith.constant 0 : i32
    %c0_i32_1 = arith.constant 0 : i32
    return %c0_i32, %c0_i32_0 : i32, i32
  }
  func.func @transform_5(%arg0: i32) -> (i32, i32) {
    %c0_i32 = arith.constant 0 : i32
    %c0_i32_0 = arith.constant 0 : i32
    %c0_i32_1 = arith.constant 0 : i32
    return %c0_i32, %c0_i32_0 : i32, i32
  }
  func.func @transform_6(%arg0: i32) -> (i32, i32) {
    %c0_i32 = arith.constant 0 : i32
    %c0_i32_0 = arith.constant 0 : i32
    %c0_i32_1 = arith.constant 0 : i32
    return %c0_i32, %c0_i32_0 : i32, i32
  }
  func.func @transform_7(%arg0: i32) -> (i32, i32) {
    %c0_i32 = arith.constant 0 : i32
    %c0_i32_0 = arith.constant 0 : i32
    %c0_i32_1 = arith.constant 0 : i32
    return %c0_i32, %c0_i32_0 : i32, i32
  }
  func.func @transform_8(%arg0: i32) -> (i32, i32) {
    %c0_i32 = arith.constant 0 : i32
    %c0_i32_0 = arith.constant 0 : i32
    %c0_i32_1 = arith.constant 0 : i32
    return %c0_i32, %c0_i32_0 : i32, i32
  }
  func.func @transform_9(%arg0: i32) -> (i32, i32) {
    %c0_i32 = arith.constant 0 : i32
    %c0_i32_0 = arith.constant 0 : i32
    %c0_i32_1 = arith.constant 0 : i32
    return %c0_i32, %c0_i32_0 : i32, i32
  }
  func.func @transform_10(%arg0: i32) -> (i32, i32) {
    %c0_i32 = arith.constant 0 : i32
    %c0_i32_0 = arith.constant 0 : i32
    %c0_i32_1 = arith.constant 0 : i32
    return %c0_i32, %c0_i32_0 : i32, i32
  }
  func.func @transform_11(%arg0: i32) -> (i32, i32) {
    %c0_i32 = arith.constant 0 : i32
    %c0_i32_0 = arith.constant 0 : i32
    %c0_i32_1 = arith.constant 0 : i32
    return %c0_i32, %c0_i32_0 : i32, i32
  }
  func.func @transform_12(%arg0: i32) -> (i32, i32) {
    %c0_i32 = arith.constant 0 : i32
    %c0_i32_0 = arith.constant 0 : i32
    %c0_i32_1 = arith.constant 0 : i32
    return %c0_i32, %c0_i32_0 : i32, i32
  }
  func.func @transform_13(%arg0: i32) -> (i32, i32) {
    %c0_i32 = arith.constant 0 : i32
    %c0_i32_0 = arith.constant 0 : i32
    %c0_i32_1 = arith.constant 0 : i32
    return %c0_i32, %c0_i32_0 : i32, i32
  }
  func.func @transform_14(%arg0: i32) -> (i32, i32) {
    %c0_i32 = arith.constant 0 : i32
    %c0_i32_0 = arith.constant 0 : i32
    %c0_i32_1 = arith.constant 0 : i32
    return %c0_i32, %c0_i32_0 : i32, i32
  }
  func.func @transform_15(%arg0: i32) -> (i32, i32) {
    %c0_i32 = arith.constant 0 : i32
    %c0_i32_0 = arith.constant 0 : i32
    %c0_i32_1 = arith.constant 0 : i32
    return %c0_i32, %c0_i32_0 : i32, i32
  }
  func.func @transform_16(%arg0: i32) -> (i32, i32, i32) {
    %c0_i32 = arith.constant 0 : i32
    %c0_i32_0 = arith.constant 0 : i32
    %c0_i32_1 = arith.constant 0 : i32
    %c0_i32_2 = arith.constant 0 : i32
    return %c0_i32, %c0_i32_0, %c0_i32_1 : i32, i32, i32
  }
  func.func @transform_17(%arg0: i32) -> (i32, i32, i32) {
    %c0_i32 = arith.constant 0 : i32
    %c0_i32_0 = arith.constant 0 : i32
    %c0_i32_1 = arith.constant 0 : i32
    %c0_i32_2 = arith.constant 0 : i32
    return %c0_i32, %c0_i32_0, %c0_i32_1 : i32, i32, i32
  }
  func.func @transform_18(%arg0: i32) -> (i32, i32, i32) {
    %c0_i32 = arith.constant 0 : i32
    %c0_i32_0 = arith.constant 0 : i32
    %c0_i32_1 = arith.constant 0 : i32
    %c0_i32_2 = arith.constant 0 : i32
    return %c0_i32, %c0_i32_0, %c0_i32_1 : i32, i32, i32
  }
  func.func @transform_19(%arg0: i32) -> (i32, i32, i32) {
    %c0_i32 = arith.constant 0 : i32
    %c0_i32_0 = arith.constant 0 : i32
    %c0_i32_1 = arith.constant 0 : i32
    %c0_i32_2 = arith.constant 0 : i32
    return %c0_i32, %c0_i32_0, %c0_i32_1 : i32, i32, i32
  }
  func.func @transform_20(%arg0: i32) -> (i32, i32, i32) {
    %c0_i32 = arith.constant 0 : i32
    %c0_i32_0 = arith.constant 0 : i32
    %c0_i32_1 = arith.constant 0 : i32
    return %arg0, %c0_i32, %c0_i32_0 : i32, i32, i32
  }
}

</mosaic_0001>

<llo_original>
// kernel: decoder_forward.2
$region0: #{decoder_forward.2}
  #allocation0 [shape = 'u32[]', space=smem, size = 0x4, offset = 0x4, fixed_abs, tag = 'smem constant byte address 0x4 - core index']
  #allocation1 [shape = 'u32[72,128]{1,0:T(1,128)}', space=vmem, size = 0x9000, scoped, tag = 'internal scratch']
  %s0 = inlined_call_operand.vmem [shape: f32[2,8,64], index: 0, kind: input, shape index: {}]
  %s1 = inlined_call_operand.vmem [shape: bf16[2,16,64], index: 1, kind: input, shape index: {}]
  %s2 = inlined_call_operand.vmem [shape: bf16[64,64], index: 2, kind: input, shape index: {}]
  %s3 = inlined_call_operand.vmem [shape: bf16[128,64], index: 3, kind: input, shape index: {}]
  %s4 = inlined_call_operand.vmem [shape: f32[1,64], index: 4, kind: input, shape index: {}]
  %s5 = inlined_call_operand.vmem [shape: bf16[192,64], index: 5, kind: input, shape index: {}]
  %s6 = inlined_call_operand.vmem [shape: f32[1,64], index: 6, kind: input, shape index: {}]
  %s7 = inlined_call_operand.vmem [shape: f32[1,64], index: 7, kind: input, shape index: {}]
  %s8 = inlined_call_operand.vmem [shape: bf16[192,64], index: 8, kind: input, shape index: {}]
  %s9 = inlined_call_operand.vmem [shape: f32[1,64], index: 9, kind: input, shape index: {}]
  %s10 = inlined_call_operand.vmem [shape: f32[1,64], index: 10, kind: input, shape index: {}]
  %s11 = inlined_call_operand.vmem [shape: bf16[192,64], index: 11, kind: input, shape index: {}]
  %s12 = inlined_call_operand.vmem [shape: f32[1,64], index: 12, kind: input, shape index: {}]
  %s13 = inlined_call_operand.vmem [shape: f32[1,64], index: 13, kind: input, shape index: {}]
  %s14 = inlined_call_operand.vmem [shape: f32[1,64], index: 14, kind: input, shape index: {}]
  %s15 = inlined_call_operand.vmem [shape: f32[1,64], index: 15, kind: input, shape index: {}]
  %s16 = inlined_call_operand.vmem [shape: bf16[4,64,16], index: 16, kind: input, shape index: {}]
  %s17 = inlined_call_operand.vmem [shape: bf16[4,64,16], index: 17, kind: input, shape index: {}]
  %s18 = inlined_call_operand.vmem [shape: bf16[4,64,16], index: 18, kind: input, shape index: {}]
  %s19 = inlined_call_operand.vmem [shape: bf16[4,16,64], index: 19, kind: input, shape index: {}]
  %s20 = inlined_call_operand.vmem [shape: bf16[2,8,128], index: 20, kind: output, shape index: {}]
  %s21 = sld [smem:[#allocation0]]
  $region113: #{decoder_forward.2} parent=0
    _
  %s23 = ssub.s32 1, %s21
  %s24 = scalar_select 0, %s23, %s21
  loop: start=0, step=1, limit=4
  $region2: #{decoder_forward.2} parent=0 // loop_pre_header
    _
  $region3: #{decoder_forward.2} parent=0 // loop_header
    %s26 = sphi 0, %s30
    %p27 = scmp.ge.s32.totalorder %s26, 4
    %s36 = sphi 0, %s38
    %s39 = sphi 0, %s36
    %s40 = sphi 0, %s39
    %s56 = sphi 0, %s40
    %s62 = sphi 0, %s64
    %s65 = sphi 0, %s62
    %s66 = sphi 0, %s65
    %s82 = sphi 0, %s66
    %s86 = sphi 0, %s86
    %s88 = sphi 0, %s86
    %s89 = sphi 0, %s88
    %s103 = sphi 0, %s89
    %s107 = sphi 0, %s107
    %s109 = sphi 0, %s107
    %s110 = sphi 0, %s109
    %s124 = sphi 0, %s110
    %s128 = sphi 0, %s128
    %s130 = sphi 0, %s128
    %s131 = sphi 0, %s130
    %s145 = sphi 0, %s131
    %s149 = sphi 0, %s149
    %s151 = sphi 0, %s149
    %s152 = sphi 0, %s151
    %s166 = sphi 0, %s152
    %s170 = sphi 0, %s170
    %s172 = sphi 0, %s170
    %s173 = sphi 0, %s172
    %s187 = sphi 0, %s173
    %s191 = sphi 0, %s191
    %s193 = sphi 0, %s191
    %s194 = sphi 0, %s193
    %s208 = sphi 0, %s194
    %s212 = sphi 0, %s212
    %s214 = sphi 0, %s212
    %s215 = sphi 0, %s214
    %s229 = sphi 0, %s215
    %s233 = sphi 0, %s233
    %s235 = sphi 0, %s233
    %s236 = sphi 0, %s235
    %s250 = sphi 0, %s236
    %s254 = sphi 0, %s254
    %s256 = sphi 0, %s254
    %s257 = sphi 0, %s256
    %s271 = sphi 0, %s257
    %s275 = sphi 0, %s275
    %s277 = sphi 0, %s275
    %s278 = sphi 0, %s277
    %s292 = sphi 0, %s278
    %s296 = sphi 0, %s296
    %s298 = sphi 0, %s296
    %s299 = sphi 0, %s298
    %s313 = sphi 0, %s299
    %s317 = sphi 0, %s317
    %s319 = sphi 0, %s317
    %s320 = sphi 0, %s319
    %s334 = sphi 0, %s320
    %s338 = sphi 0, %s338
    %s340 = sphi 0, %s338
    %s341 = sphi 0, %s340
    %s355 = sphi 0, %s341
    %s359 = sphi 0, %s359
    %s361 = sphi 0, %s359
    %s362 = sphi 0, %s361
    %s376 = sphi 0, %s362
    %s380 = sphi 0, %s380
    %s382 = sphi 0, %s380
    %s383 = sphi 0, %s382
    %s397 = sphi 0, %s383
    %s401 = sphi 0, %s401
    %s403 = sphi 0, %s401
    %s404 = sphi 0, %s403
    %s418 = sphi 0, %s404
    %s422 = sphi 0, %s422
    %s424 = sphi 0, %s422
    %s425 = sphi 0, %s424
    %s439 = sphi 0, %s425
    %s443 = sphi 0, %s443
    %s445 = sphi 0, %s443
    %s446 = sphi 0, %s445
    %s460 = sphi 0, %s446
    %s466 = sphi 0, %s468
    %s469 = sphi 0, %s466
    %s470 = sphi 0, %s469
    %s486 = sphi 0, %s470
  $region4: #{decoder_forward.2} parent=0 // loop_header_branch
    %29 = sbr.rel (%p27) target = $region8
  $region5: #{decoder_forward.2} parent=0 // loop_body
    %s31 = ssub.s32 %s26, 1
    %s32 = ssub.s32 %s26, 2
    %s33 = sadd.s32 %s26, 1
    %s34 = ssub.s32 %s26, %s33
    %p35 = scmp.eq.s32.totalorder %s34, 0
    %s37 = sadd.s32 %s36, 1
    %s38 = scalar_select %p35, %s36, %s37
    %p41 = pneg %p35
    %p42 = scmp.eq.s32.totalorder %s26, 1
    %p43 = por %p41, %p42
    %p44 = scmp.ne.s32.totalorder %s36, %s39
    %p45 = scmp.eq.s32.totalorder %s26, 0
    %p46 = por %p44, %p45
    %p47 = scmp.ne.s32.totalorder %s36, %s39
    %p48 = scmp.eq.s32.totalorder %s31, 1
    %p49 = por %p47, %p48
    %p50 = scmp.ne.s32.totalorder %s39, %s40
    %p51 = scmp.eq.s32.totalorder %s31, 0
    %p52 = por %p50, %p51
    %p53 = scmp.ne.s32.totalorder %s39, %s40
    %p54 = scmp.eq.s32.totalorder %s32, 1
    %p55 = por %p53, %p54
    %p57 = scmp.ne.s32.totalorder %s40, %s56
    %p58 = scmp.eq.s32.totalorder %s32, 0
    %p59 = por %p57, %p58
    %s60 = ssub.s32 %s26, %s33
    %p61 = scmp.eq.s32.totalorder %s60, 0
    %s63 = sadd.s32 %s62, 1
    %s64 = scalar_select %p61, %s62, %s63
    %p67 = pneg %p61
    %p68 = scmp.eq.s32.totalorder %s26, 1
    %p69 = por %p67, %p68
    %p70 = scmp.ne.s32.totalorder %s62, %s65
    %p71 = scmp.eq.s32.totalorder %s26, 0
    %p72 = por %p70, %p71
    %p73 = scmp.ne.s32.totalorder %s62, %s65
    %p74 = scmp.eq.s32.totalorder %s31, 1
    %p75 = por %p73, %p74
    %p76 = scmp.ne.s32.totalorder %s65, %s66
    %p77 = scmp.eq.s32.totalorder %s31, 0
    %p78 = por %p76, %p77
    %p79 = scmp.ne.s32.totalorder %s65, %s66
    %p80 = scmp.eq.s32.totalorder %s32, 1
    %p81 = por %p79, %p80
    %p83 = scmp.ne.s32.totalorder %s66, %s82
    %p84 = scmp.eq.s32.totalorder %s32, 0
    %p85 = por %p83, %p84
    %s87 = sadd.s32 %s86, 1
    %p90 = scmp.eq.s32.totalorder %s26, 1
    %p91 = scmp.ne.s32.totalorder %s86, %s88
    %p92 = scmp.eq.s32.totalorder %s26, 0
    %p93 = por %p91, %p92
    %p94 = scmp.ne.s32.totalorder %s86, %s88
    %p95 = scmp.eq.s32.totalorder %s31, 1
    %p96 = por %p94, %p95
    %p97 = scmp.ne.s32.totalorder %s88, %s89
    %p98 = scmp.eq.s32.totalorder %s31, 0
    %p99 = por %p97, %p98
    %p100 = scmp.ne.s32.totalorder %s88, %s89
    %p101 = scmp.eq.s32.totalorder %s32, 1
    %p102 = por %p100, %p101
    %p104 = scmp.ne.s32.totalorder %s89, %s103
    %p105 = scmp.eq.s32.totalorder %s32, 0
    %p106 = por %p104, %p105
    %s108 = sadd.s32 %s107, 1
    %p111 = scmp.eq.s32.totalorder %s26, 1
    %p112 = scmp.ne.s32.totalorder %s107, %s109
    %p113 = scmp.eq.s32.totalorder %s26, 0
    %p114 = por %p112, %p113
    %p115 = scmp.ne.s32.totalorder %s107, %s109
    %p116 = scmp.eq.s32.totalorder %s31, 1
    %p117 = por %p115, %p116
    %p118 = scmp.ne.s32.totalorder %s109, %s110
    %p119 = scmp.eq.s32.totalorder %s31, 0
    %p120 = por %p118, %p119
    %p121 = scmp.ne.s32.totalorder %s109, %s110
    %p122 = scmp.eq.s32.totalorder %s32, 1
    %p123 = por %p121, %p122
    %p125 = scmp.ne.s32.totalorder %s110, %s124
    %p126 = scmp.eq.s32.totalorder %s32, 0
    %p127 = por %p125, %p126
    %s129 = sadd.s32 %s128, 1
    %p132 = scmp.eq.s32.totalorder %s26, 1
    %p133 = scmp.ne.s32.totalorder %s128, %s130
    %p134 = scmp.eq.s32.totalorder %s26, 0
    %p135 = por %p133, %p134
    %p136 = scmp.ne.s32.totalorder %s128, %s130
    %p137 = scmp.eq.s32.totalorder %s31, 1
    %p138 = por %p136, %p137
    %p139 = scmp.ne.s32.totalorder %s130, %s131
    %p140 = scmp.eq.s32.totalorder %s31, 0
    %p141 = por %p139, %p140
    %p142 = scmp.ne.s32.totalorder %s130, %s131
    %p143 = scmp.eq.s32.totalorder %s32, 1
    %p144 = por %p142, %p143
    %p146 = scmp.ne.s32.totalorder %s131, %s145
    %p147 = scmp.eq.s32.totalorder %s32, 0
    %p148 = por %p146, %p147
    %s150 = sadd.s32 %s149, 1
    %p153 = scmp.eq.s32.totalorder %s26, 1
    %p154 = scmp.ne.s32.totalorder %s149, %s151
    %p155 = scmp.eq.s32.totalorder %s26, 0
    %p156 = por %p154, %p155
    %p157 = scmp.ne.s32.totalorder %s149, %s151
    %p158 = scmp.eq.s32.totalorder %s31, 1
    %p159 = por %p157, %p158
    %p160 = scmp.ne.s32.totalorder %s151, %s152
    %p161 = scmp.eq.s32.totalorder %s31, 0
    %p162 = por %p160, %p161
    %p163 = scmp.ne.s32.totalorder %s151, %s152
    %p164 = scmp.eq.s32.totalorder %s32, 1
    %p165 = por %p163, %p164
    %p167 = scmp.ne.s32.totalorder %s152, %s166
    %p168 = scmp.eq.s32.totalorder %s32, 0
    %p169 = por %p167, %p168
    %s171 = sadd.s32 %s170, 1
    %p174 = scmp.eq.s32.totalorder %s26, 1
    %p175 = scmp.ne.s32.totalorder %s170, %s172
    %p176 = scmp.eq.s32.totalorder %s26, 0
    %p177 = por %p175, %p176
    %p178 = scmp.ne.s32.totalorder %s170, %s172
    %p179 = scmp.eq.s32.totalorder %s31, 1
    %p180 = por %p178, %p179
    %p181 = scmp.ne.s32.totalorder %s172, %s173
    %p182 = scmp.eq.s32.totalorder %s31, 0
    %p183 = por %p181, %p182
    %p184 = scmp.ne.s32.totalorder %s172, %s173
    %p185 = scmp.eq.s32.totalorder %s32, 1
    %p186 = por %p184, %p185
    %p188 = scmp.ne.s32.totalorder %s173, %s187
    %p189 = scmp.eq.s32.totalorder %s32, 0
    %p190 = por %p188, %p189
    %s192 = sadd.s32 %s191, 1
    %p195 = scmp.eq.s32.totalorder %s26, 1
    %p196 = scmp.ne.s32.totalorder %s191, %s193
    %p197 = scmp.eq.s32.totalorder %s26, 0
    %p198 = por %p196, %p197
    %p199 = scmp.ne.s32.totalorder %s191, %s193
    %p200 = scmp.eq.s32.totalorder %s31, 1
    %p201 = por %p199, %p200
    %p202 = scmp.ne.s32.totalorder %s193, %s194
    %p203 = scmp.eq.s32.totalorder %s31, 0
    %p204 = por %p202, %p203
    %p205 = scmp.ne.s32.totalorder %s193, %s194
    %p206 = scmp.eq.s32.totalorder %s32, 1
    %p207 = por %p205, %p206
    %p209 = scmp.ne.s32.totalorder %s194, %s208
    %p210 = scmp.eq.s32.totalorder %s32, 0
    %p211 = por %p209, %p210
    %s213 = sadd.s32 %s212, 1
    %p216 = scmp.eq.s32.totalorder %s26, 1
    %p217 = scmp.ne.s32.totalorder %s212, %s214
    %p218 = scmp.eq.s32.totalorder %s26, 0
    %p219 = por %p217, %p218
    %p220 = scmp.ne.s32.totalorder %s212, %s214
    %p221 = scmp.eq.s32.totalorder %s31, 1
    %p222 = por %p220, %p221
    %p223 = scmp.ne.s32.totalorder %s214, %s215
    %p224 = scmp.eq.s32.totalorder %s31, 0
    %p225 = por %p223, %p224
    %p226 = scmp.ne.s32.totalorder %s214, %s215
    %p227 = scmp.eq.s32.totalorder %s32, 1
    %p228 = por %p226, %p227
    %p230 = scmp.ne.s32.totalorder %s215, %s229
    %p231 = scmp.eq.s32.totalorder %s32, 0
    %p232 = por %p230, %p231
    %s234 = sadd.s32 %s233, 1
    %p237 = scmp.eq.s32.totalorder %s26, 1
    %p238 = scmp.ne.s32.totalorder %s233, %s235
    %p239 = scmp.eq.s32.totalorder %s26, 0
    %p240 = por %p238, %p239
    %p241 = scmp.ne.s32.totalorder %s233, %s235
    %p242 = scmp.eq.s32.totalorder %s31, 1
    %p243 = por %p241, %p242
    %p244 = scmp.ne.s32.totalorder %s235, %s236
    %p245 = scmp.eq.s32.totalorder %s31, 0
    %p246 = por %p244, %p245
    %p247 = scmp.ne.s32.totalorder %s235, %s236
    %p248 = scmp.eq.s32.totalorder %s32, 1
    %p249 = por %p247, %p248
    %p251 = scmp.ne.s32.totalorder %s236, %s250
    %p252 = scmp.eq.s32.totalorder %s32, 0
    %p253 = por %p251, %p252
    %s255 = sadd.s32 %s254, 1
    %p258 = scmp.eq.s32.totalorder %s26, 1
    %p259 = scmp.ne.s32.totalorder %s254, %s256
    %p260 = scmp.eq.s32.totalorder %s26, 0
    %p261 = por %p259, %p260
    %p262 = scmp.ne.s32.totalorder %s254, %s256
    %p263 = scmp.eq.s32.totalorder %s31, 1
    %p264 = por %p262, %p263
    %p265 = scmp.ne.s32.totalorder %s256, %s257
    %p266 = scmp.eq.s32.totalorder %s31, 0
    %p267 = por %p265, %p266
    %p268 = scmp.ne.s32.totalorder %s256, %s257
    %p269 = scmp.eq.s32.totalorder %s32, 1
    %p270 = por %p268, %p269
    %p272 = scmp.ne.s32.totalorder %s257, %s271
    %p273 = scmp.eq.s32.totalorder %s32, 0
    %p274 = por %p272, %p273
    %s276 = sadd.s32 %s275, 1
    %p279 = scmp.eq.s32.totalorder %s26, 1
    %p280 = scmp.ne.s32.totalorder %s275, %s277
    %p281 = scmp.eq.s32.totalorder %s26, 0
    %p282 = por %p280, %p281
    %p283 = scmp.ne.s32.totalorder %s275, %s277
    %p284 = scmp.eq.s32.totalorder %s31, 1
    %p285 = por %p283, %p284
    %p286 = scmp.ne.s32.totalorder %s277, %s278
    %p287 = scmp.eq.s32.totalorder %s31, 0
    %p288 = por %p286, %p287
    %p289 = scmp.ne.s32.totalorder %s277, %s278
    %p290 = scmp.eq.s32.totalorder %s32, 1
    %p291 = por %p289, %p290
    %p293 = scmp.ne.s32.totalorder %s278, %s292
    %p294 = scmp.eq.s32.totalorder %s32, 0
    %p295 = por %p293, %p294
    %s297 = sadd.s32 %s296, 1
    %p300 = scmp.eq.s32.totalorder %s26, 1
    %p301 = scmp.ne.s32.totalorder %s296, %s298
    %p302 = scmp.eq.s32.totalorder %s26, 0
    %p303 = por %p301, %p302
    %p304 = scmp.ne.s32.totalorder %s296, %s298
    %p305 = scmp.eq.s32.totalorder %s31, 1
    %p306 = por %p304, %p305
    %p307 = scmp.ne.s32.totalorder %s298, %s299
    %p308 = scmp.eq.s32.totalorder %s31, 0
    %p309 = por %p307, %p308
    %p310 = scmp.ne.s32.totalorder %s298, %s299
    %p311 = scmp.eq.s32.totalorder %s32, 1
    %p312 = por %p310, %p311
    %p314 = scmp.ne.s32.totalorder %s299, %s313
    %p315 = scmp.eq.s32.totalorder %s32, 0
    %p316 = por %p314, %p315
    %s318 = sadd.s32 %s317, 1
    %p321 = scmp.eq.s32.totalorder %s26, 1
    %p322 = scmp.ne.s32.totalorder %s317, %s319
    %p323 = scmp.eq.s32.totalorder %s26, 0
    %p324 = por %p322, %p323
    %p325 = scmp.ne.s32.totalorder %s317, %s319
    %p326 = scmp.eq.s32.totalorder %s31, 1
    %p327 = por %p325, %p326
    %p328 = scmp.ne.s32.totalorder %s319, %s320
    %p329 = scmp.eq.s32.totalorder %s31, 0
    %p330 = por %p328, %p329
    %p331 = scmp.ne.s32.totalorder %s319, %s320
    %p332 = scmp.eq.s32.totalorder %s32, 1
    %p333 = por %p331, %p332
    %p335 = scmp.ne.s32.totalorder %s320, %s334
    %p336 = scmp.eq.s32.totalorder %s32, 0
    %p337 = por %p335, %p336
    %s339 = sadd.s32 %s338, 1
    %p342 = scmp.eq.s32.totalorder %s26, 1
    %p343 = scmp.ne.s32.totalorder %s338, %s340
    %p344 = scmp.eq.s32.totalorder %s26, 0
    %p345 = por %p343, %p344
    %p346 = scmp.ne.s32.totalorder %s338, %s340
    %p347 = scmp.eq.s32.totalorder %s31, 1
    %p348 = por %p346, %p347
    %p349 = scmp.ne.s32.totalorder %s340, %s341
    %p350 = scmp.eq.s32.totalorder %s31, 0
    %p351 = por %p349, %p350
    %p352 = scmp.ne.s32.totalorder %s340, %s341
    %p353 = scmp.eq.s32.totalorder %s32, 1
    %p354 = por %p352, %p353
    %p356 = scmp.ne.s32.totalorder %s341, %s355
    %p357 = scmp.eq.s32.totalorder %s32, 0
    %p358 = por %p356, %p357
    %s360 = sadd.s32 %s359, 1
    %p363 = scmp.eq.s32.totalorder %s26, 1
    %p364 = scmp.ne.s32.totalorder %s359, %s361
    %p365 = scmp.eq.s32.totalorder %s26, 0
    %p366 = por %p364, %p365
    %p367 = scmp.ne.s32.totalorder %s359, %s361
    %p368 = scmp.eq.s32.totalorder %s31, 1
    %p369 = por %p367, %p368
    %p370 = scmp.ne.s32.totalorder %s361, %s362
    %p371 = scmp.eq.s32.totalorder %s31, 0
    %p372 = por %p370, %p371
    %p373 = scmp.ne.s32.totalorder %s361, %s362
    %p374 = scmp.eq.s32.totalorder %s32, 1
    %p375 = por %p373, %p374
    %p377 = scmp.ne.s32.totalorder %s362, %s376
    %p378 = scmp.eq.s32.totalorder %s32, 0
    %p379 = por %p377, %p378
    %s381 = sadd.s32 %s380, 1
    %p384 = scmp.eq.s32.totalorder %s26, 1
    %p385 = scmp.ne.s32.totalorder %s380, %s382
    %p386 = scmp.eq.s32.totalorder %s26, 0
    %p387 = por %p385, %p386
    %p388 = scmp.ne.s32.totalorder %s380, %s382
    %p389 = scmp.eq.s32.totalorder %s31, 1
    %p390 = por %p388, %p389
    %p391 = scmp.ne.s32.totalorder %s382, %s383
    %p392 = scmp.eq.s32.totalorder %s31, 0
    %p393 = por %p391, %p392
    %p394 = scmp.ne.s32.totalorder %s382, %s383
    %p395 = scmp.eq.s32.totalorder %s32, 1
    %p396 = por %p394, %p395
    %p398 = scmp.ne.s32.totalorder %s383, %s397
    %p399 = scmp.eq.s32.totalorder %s32, 0
    %p400 = por %p398, %p399
    %s402 = sadd.s32 %s401, 1
    %p405 = scmp.eq.s32.totalorder %s26, 1
    %p406 = scmp.ne.s32.totalorder %s401, %s403
    %p407 = scmp.eq.s32.totalorder %s26, 0
    %p408 = por %p406, %p407
    %p409 = scmp.ne.s32.totalorder %s401, %s403
    %p410 = scmp.eq.s32.totalorder %s31, 1
    %p411 = por %p409, %p410
    %p412 = scmp.ne.s32.totalorder %s403, %s404
    %p413 = scmp.eq.s32.totalorder %s31, 0
    %p414 = por %p412, %p413
    %p415 = scmp.ne.s32.totalorder %s403, %s404
    %p416 = scmp.eq.s32.totalorder %s32, 1
    %p417 = por %p415, %p416
    %p419 = scmp.ne.s32.totalorder %s404, %s418
    %p420 = scmp.eq.s32.totalorder %s32, 0
    %p421 = por %p419, %p420
    %s423 = sadd.s32 %s422, 1
    %p426 = scmp.eq.s32.totalorder %s26, 1
    %p427 = scmp.ne.s32.totalorder %s422, %s424
    %p428 = scmp.eq.s32.totalorder %s26, 0
    %p429 = por %p427, %p428
    %p430 = scmp.ne.s32.totalorder %s422, %s424
    %p431 = scmp.eq.s32.totalorder %s31, 1
    %p432 = por %p430, %p431
    %p433 = scmp.ne.s32.totalorder %s424, %s425
    %p434 = scmp.eq.s32.totalorder %s31, 0
    %p435 = por %p433, %p434
    %p436 = scmp.ne.s32.totalorder %s424, %s425
    %p437 = scmp.eq.s32.totalorder %s32, 1
    %p438 = por %p436, %p437
    %p440 = scmp.ne.s32.totalorder %s425, %s439
    %p441 = scmp.eq.s32.totalorder %s32, 0
    %p442 = por %p440, %p441
    %s444 = sadd.s32 %s443, 1
    %p447 = scmp.eq.s32.totalorder %s26, 1
    %p448 = scmp.ne.s32.totalorder %s443, %s445
    %p449 = scmp.eq.s32.totalorder %s26, 0
    %p450 = por %p448, %p449
    %p451 = scmp.ne.s32.totalorder %s443, %s445
    %p452 = scmp.eq.s32.totalorder %s31, 1
    %p453 = por %p451, %p452
    %p454 = scmp.ne.s32.totalorder %s445, %s446
    %p455 = scmp.eq.s32.totalorder %s31, 0
    %p456 = por %p454, %p455
    %p457 = scmp.ne.s32.totalorder %s445, %s446
    %p458 = scmp.eq.s32.totalorder %s32, 1
    %p459 = por %p457, %p458
    %p461 = scmp.ne.s32.totalorder %s446, %s460
    %p462 = scmp.eq.s32.totalorder %s32, 0
    %p463 = por %p461, %p462
    %s464 = ssub.s32 %s26, %s33
    %p465 = scmp.eq.s32.totalorder %s464, 0
    %s467 = sadd.s32 %s466, 1
    %s468 = scalar_select %p465, %s466, %s467
    %p471 = pneg %p465
    %p472 = scmp.eq.s32.totalorder %s26, 1
    %p473 = por %p471, %p472
    %p474 = scmp.ne.s32.totalorder %s466, %s469
    %p475 = scmp.eq.s32.totalorder %s26, 0
    %p476 = por %p474, %p475
    %p477 = scmp.ne.s32.totalorder %s466, %s469
    %p478 = scmp.eq.s32.totalorder %s31, 1
    %p479 = por %p477, %p478
    %p480 = scmp.ne.s32.totalorder %s469, %s470
    %p481 = scmp.eq.s32.totalorder %s31, 0
    %p482 = por %p480, %p481
    %p483 = scmp.ne.s32.totalorder %s469, %s470
    %p484 = scmp.eq.s32.totalorder %s32, 1
    %p485 = por %p483, %p484
    %p487 = scmp.ne.s32.totalorder %s470, %s486
    %p488 = scmp.eq.s32.totalorder %s32, 0
    %p489 = por %p487, %p488
    %p490 = scmp.le.s32.totalorder 1, %s26
    %p491 = scmp.lt.s32.totalorder %s26, 3
    %p492 = pnand %p490, %p491
    %p493 = pneg %p492
    // Predicated region
    $region9: #{decoder_forward.2} parent=5 // pred_check
      _
    $region10: #{decoder_forward.2} parent=5 // pred_check_branch
      %495 = sbr.rel (%p492) target = $region12
    $region11: #{decoder_forward.2} parent=5 // pred_region
      %s496 = ssub.s32 %s26, 1
      // Predicated region
      $region13: #{decoder_forward.2} parent=11 // pred_check
        %p497 = pneg %p99
      $region14: #{decoder_forward.2} parent=11 // pred_check_branch
        %499 = sbr.rel (%p497) target = $region16
      $region15: #{decoder_forward.2} parent=11 // pred_region
        _
      $region16: #{decoder_forward.2} parent=11 // pred_fallthru
        _
      // Predicated region
      $region17: #{decoder_forward.2} parent=11 // pred_check
        %p500 = pneg %p120
      $region18: #{decoder_forward.2} parent=11 // pred_check_branch
        %502 = sbr.rel (%p500) target = $region20
      $region19: #{decoder_forward.2} parent=11 // pred_region
        _
      $region20: #{decoder_forward.2} parent=11 // pred_fallthru
        _
      // Predicated region
      $region21: #{decoder_forward.2} parent=11 // pred_check
        %p503 = pneg %p141
      $region22: #{decoder_forward.2} parent=11 // pred_check_branch
        %505 = sbr.rel (%p503) target = $region24
      $region23: #{decoder_forward.2} parent=11 // pred_region
        _
      $region24: #{decoder_forward.2} parent=11 // pred_fallthru
        _
      // Predicated region
      $region25: #{decoder_forward.2} parent=11 // pred_check
        %p506 = pneg %p162
      $region26: #{decoder_forward.2} parent=11 // pred_check_branch
        %508 = sbr.rel (%p506) target = $region28
      $region27: #{decoder_forward.2} parent=11 // pred_region
        _
      $region28: #{decoder_forward.2} parent=11 // pred_fallthru
        _
      // Predicated region
      $region29: #{decoder_forward.2} parent=11 // pred_check
        %p509 = pneg %p183
      $region30: #{decoder_forward.2} parent=11 // pred_check_branch
        %511 = sbr.rel (%p509) target = $region32
      $region31: #{decoder_forward.2} parent=11 // pred_region
        _
      $region32: #{decoder_forward.2} parent=11 // pred_fallthru
        _
      // Predicated region
      $region33: #{decoder_forward.2} parent=11 // pred_check
        %p512 = pneg %p204
      $region34: #{decoder_forward.2} parent=11 // pred_check_branch
        %514 = sbr.rel (%p512) target = $region36
      $region35: #{decoder_forward.2} parent=11 // pred_region
        _
      $region36: #{decoder_forward.2} parent=11 // pred_fallthru
        _
      // Predicated region
      $region37: #{decoder_forward.2} parent=11 // pred_check
        %p515 = pneg %p225
      $region38: #{decoder_forward.2} parent=11 // pred_check_branch
        %517 = sbr.rel (%p515) target = $region40
      $region39: #{decoder_forward.2} parent=11 // pred_region
        _
      $region40: #{decoder_forward.2} parent=11 // pred_fallthru
        _
      // Predicated region
      $region41: #{decoder_forward.2} parent=11 // pred_check
        %p518 = pneg %p246
      $region42: #{decoder_forward.2} parent=11 // pred_check_branch
        %520 = sbr.rel (%p518) target = $region44
      $region43: #{decoder_forward.2} parent=11 // pred_region
        _
      $region44: #{decoder_forward.2} parent=11 // pred_fallthru
        _
      // Predicated region
      $region45: #{decoder_forward.2} parent=11 // pred_check
        %p521 = pneg %p267
      $region46: #{decoder_forward.2} parent=11 // pred_check_branch
        %523 = sbr.rel (%p521) target = $region48
      $region47: #{decoder_forward.2} parent=11 // pred_region
        _
      $region48: #{decoder_forward.2} parent=11 // pred_fallthru
        _
      // Predicated region
      $region49: #{decoder_forward.2} parent=11 // pred_check
        %p524 = pneg %p288
      $region50: #{decoder_forward.2} parent=11 // pred_check_branch
        %526 = sbr.rel (%p524) target = $region52
      $region51: #{decoder_forward.2} parent=11 // pred_region
        _
      $region52: #{decoder_forward.2} parent=11 // pred_fallthru
        _
      // Predicated region
      $region53: #{decoder_forward.2} parent=11 // pred_check
        %p527 = pneg %p309
      $region54: #{decoder_forward.2} parent=11 // pred_check_branch
        %529 = sbr.rel (%p527) target = $region56
      $region55: #{decoder_forward.2} parent=11 // pred_region
        _
      $region56: #{decoder_forward.2} parent=11 // pred_fallthru
        _
      // Predicated region
      $region57: #{decoder_forward.2} parent=11 // pred_check
        %p530 = pneg %p330
      $region58: #{decoder_forward.2} parent=11 // pred_check_branch
        %532 = sbr.rel (%p530) target = $region60
      $region59: #{decoder_forward.2} parent=11 // pred_region
        _
      $region60: #{decoder_forward.2} parent=11 // pred_fallthru
        _
      // Predicated region
      $region61: #{decoder_forward.2} parent=11 // pred_check
        %p533 = pneg %p351
      $region62: #{decoder_forward.2} parent=11 // pred_check_branch
        %535 = sbr.rel (%p533) target = $region64
      $region63: #{decoder_forward.2} parent=11 // pred_region
        _
      $region64: #{decoder_forward.2} parent=11 // pred_fallthru
        _
      // Predicated region
      $region65: #{decoder_forward.2} parent=11 // pred_check
        %p536 = pneg %p372
      $region66: #{decoder_forward.2} parent=11 // pred_check_branch
        %538 = sbr.rel (%p536) target = $region68
      $region67: #{decoder_forward.2} parent=11 // pred_region
        _
      $region68: #{decoder_forward.2} parent=11 // pred_fallthru
        _
      // Predicated region
      $region69: #{decoder_forward.2} parent=11 // pred_check
        %p539 = pneg %p393
      $region70: #{decoder_forward.2} parent=11 // pred_check_branch
        %541 = sbr.rel (%p539) target = $region72
      $region71: #{decoder_forward.2} parent=11 // pred_region
        _
      $region72: #{decoder_forward.2} parent=11 // pred_fallthru
        _
      // Predicated region
      $region73: #{decoder_forward.2} parent=11 // pred_check
        %p542 = pneg %p414
      $region74: #{decoder_forward.2} parent=11 // pred_check_branch
        %544 = sbr.rel (%p542) target = $region76
      $region75: #{decoder_forward.2} parent=11 // pred_region
        _
      $region76: #{decoder_forward.2} parent=11 // pred_fallthru
        _
      // Predicated region
      $region77: #{decoder_forward.2} parent=11 // pred_check
        %p545 = pneg %p435
      $region78: #{decoder_forward.2} parent=11 // pred_check_branch
        %547 = sbr.rel (%p545) target = $region80
      $region79: #{decoder_forward.2} parent=11 // pred_region
        _
      $region80: #{decoder_forward.2} parent=11 // pred_fallthru
        _
      // Predicated region
      $region81: #{decoder_forward.2} parent=11 // pred_check
        %p548 = pneg %p456
      $region82: #{decoder_forward.2} parent=11 // pred_check_branch
        %550 = sbr.rel (%p548) target = $region84
      $region83: #{decoder_forward.2} parent=11 // pred_region
        _
      $region84: #{decoder_forward.2} parent=11 // pred_fallthru
        _
    $region12: #{decoder_forward.2} parent=5 // pred_fallthru
      _
    %p551 = scmp.lt.s32.totalorder %s26, 2
    // Predicated region
    $region85: #{decoder_forward.2} parent=5 // pred_check
      %p552 = pneg %p551
    $region86: #{decoder_forward.2} parent=5 // pred_check_branch
      %554 = sbr.rel (%p552) target = $region88
    $region87: #{decoder_forward.2} parent=5 // pred_region
      // Predicated region
      $region89: #{decoder_forward.2} parent=87 // pred_check
        %p555 = pneg %p46
      $region90: #{decoder_forward.2} parent=87 // pred_check_branch
        %557 = sbr.rel (%p555) target = $region92
      $region91: #{decoder_forward.2} parent=87 // pred_region
        %p558 = scmp.lt.s32.totalorder %s26, 1
        %s559 = scalar_select %p558, %s26, 1
        %s560 = smul.addr %s559, 8
        %s561 = scalar_lea.vmem %s0, %s560
      $region92: #{decoder_forward.2} parent=87 // pred_fallthru
        _
      // Predicated region
      $region93: #{decoder_forward.2} parent=87 // pred_check
        %p562 = pneg %p72
      $region94: #{decoder_forward.2} parent=87 // pred_check_branch
        %564 = sbr.rel (%p562) target = $region96
      $region95: #{decoder_forward.2} parent=87 // pred_region
        %p565 = scmp.lt.s32.totalorder %s26, 1
        %s566 = scalar_select %p565, %s26, 1
        %s567 = smul.addr %s566, 2
        %s568 = smul.addr %s567, 4
        %s569 = scalar_lea.vmem %s1, %s568
      $region96: #{decoder_forward.2} parent=87 // pred_fallthru
        _
    $region88: #{decoder_forward.2} parent=5 // pred_fallthru
      _
    %p570 = scmp.le.s32.totalorder 1, %s26
    %p571 = scmp.lt.s32.totalorder %s26, 3
    %p572 = pnand %p570, %p571
    %p573 = pneg %p572
    // Predicated region
    $region97: #{decoder_forward.2} parent=5 // pred_check
      _
    $region98: #{decoder_forward.2} parent=5 // pred_check_branch
      %575 = sbr.rel (%p572) target = $region100
    $region99: #{decoder_forward.2} parent=5 // pred_region
      %s576 = ssub.s32 %s26, 1
      %p577 = scmp.lt.s32.totalorder %s31, 1
      %s578 = scalar_select %p577, %s31, 1
      %s579 = smul.addr %s578, 8
      %s580 = scalar_lea.vmem %s0, %s579
      %p581 = pneg %p52
      %p582 = pneg %p49
      %p583 = scmp.lt.s32.totalorder %s31, 1
      %s584 = scalar_select %p583, %s31, 1
      %s585 = smul.addr %s584, 2
      %s586 = smul.addr %s585, 4
      %s587 = scalar_lea.vmem %s1, %s586
      %p588 = pneg %p78
      %p589 = pneg %p75
      %p590 = pneg %p99
      %p591 = pneg %p96
      %p592 = pneg %p120
      %p593 = pneg %p117
      %p594 = pneg %p141
      %p595 = pneg %p138
      %p596 = pneg %p162
      %p597 = pneg %p159
      %p598 = pneg %p183
      %p599 = pneg %p180
      %p600 = pneg %p204
      %p601 = pneg %p201
      %p602 = pneg %p225
      %p603 = pneg %p222
      %p604 = pneg %p246
      %p605 = pneg %p243
      %p606 = pneg %p267
      %p607 = pneg %p264
      %p608 = pneg %p288
      %p609 = pneg %p285
      %p610 = pneg %p309
      %p611 = pneg %p306
      %p612 = pneg %p330
      %p613 = pneg %p327
      %p614 = pneg %p351
      %p615 = pneg %p348
      %p616 = pneg %p372
      %p617 = pneg %p369
      %p618 = pneg %p393
      %p619 = pneg %p390
      %p620 = pneg %p414
      %p621 = pneg %p411
      %p622 = pneg %p435
      %p623 = pneg %p432
      %p624 = pneg %p456
      %p625 = pneg %p453
      %p626 = pneg %p482
      %p627 = pneg %p479
      %p628 = scmp.lt.s32.totalorder %s31, 1
      %s629 = scalar_select %p628, %s31, 1
      %s630 = smul.addr %s629, 4
      %s631 = scalar_lea.vmem %s20, %s630
      %p632 = scmp.lt.s32.totalorder %s31, 1
      %s633 = scalar_select %p632, %s31, 1
      %s634 = smul.addr %s633, 8
      %s635 = scalar_lea.vmem %s0, %s634
      %p636 = scmp.lt.s32.totalorder %s31, 1
      %s637 = scalar_select %p636, %s31, 1
      %s638 = smul.addr %s637, 2
      %s639 = smul.addr %s638, 4
      %s640 = scalar_lea.vmem %s1, %s639
      %p641 = scmp.lt.s32.totalorder %s31, 1
      %s642 = scalar_select %p641, %s31, 1
      %s643 = smul.addr %s642, 4
      %s644 = scalar_lea.vmem %s20, %s643
      %v646 = vld [vmem:[%s635] sm:$0xff]
      %v647 = vld [vmem:[%s640] sm:$0xf]
      %v648 = vld [vmem:[%s640 + $0x4] sm:$0xf]
      %v649 = vrot.slane %v646, 1
      %v650 = vlaneseq
      %v651 = vshrl.u32 %v650, 7
      %vm652 = vcmp.eq.s32.totalorder %v651, 7
      %v653 = vsel %vm652, 0.0, %v649
      %v654 = vpack.c.bf16 %v646, %v646
      %v655 = vld [vmem:[%s4] sm:$0x1]
      %v656 = vld [vmem:[%s2] sm:$0xf]
      %v657 = vld [vmem:[%s2 + $0x4] sm:$0xf]
      %v658 = vld [vmem:[%s2 + $0x8] sm:$0xf]
      %v659 = vld [vmem:[%s2 + $0xc] sm:$0xf]
      %v660 = vld [vmem:[%s2 + $0x10] sm:$0xf]
      %v661 = vld [vmem:[%s2 + $0x14] sm:$0xf]
      %v662 = vld [vmem:[%s2 + $0x18] sm:$0xf]
      %v663 = vld [vmem:[%s2 + $0x1c] sm:$0xf]
      %v665 = vperm.slane %v655, 0
      %v675 = vunpack.c.l.b16 %v656
      %v676 = vunpack.c.l.b16 %v657
      %v677 = vunpack.c.l.b16 %v658
      %v678 = vunpack.c.l.b16 %v659
      %v679 = vunpack.c.l.b16 %v660
      %v680 = vunpack.c.l.b16 %v661
      %v681 = vunpack.c.l.b16 %v662
      %v682 = vunpack.c.l.b16 %v663
      %v683 = vpack.c.b16 %v676, %v675
      %v684 = vpack.c.b16 %v678, %v677
      %v685 = vpack.c.b16 %v680, %v679
      %v686 = vpack.c.b16 %v682, %v681
      %vm691 = vcmask 523264
      %v693 = vsel %vm691, %v654, 0
      %695 = vmatpush.bf16.msra.mxu0 0
      %696 = vmatpush.bf16.msra.mxu0 0
      %697 = vmatpush.bf16.msra.mxu0 0
      %698 = vmatpush.bf16.msra.mxu0 0
      %699 = vmatpush.bf16.msra.mxu0 %v686
      %700 = vmatpush.bf16.msra.mxu0 %v685
      %701 = vmatpush.bf16.msra.mxu0 %v684
      %702 = vmatpush.bf16.msra.mxu0 %v683
      %703 = vmatmul.bf16.gmra.mxu0 %v693
      %v704 = vpop.f32.mrf.mxu0
      %v705 = vadd.f32 %v665, %v704
      %v706 = vpop.f32.mrf.mxu0
      %707 = vdwg.mxu0
      %v708 = vpack.c.bf16 %v653, %v653
      %v710 = vunpack.c.l.b16 %v654
      %v711 = vpack.c.b16 %v710, %v710
      %712 = vrot.lane.b32.xlu0 %v711, 64
      %v713 = vpop.permute.xlu0 %712
      %v716 = vsel %vm691, %v708, %v713
      %v718 = vld [vmem:[%s3] sm:$0xf]
      %v719 = vld [vmem:[%s3 + $0x4] sm:$0xf]
      %v720 = vld [vmem:[%s3 + $0x8] sm:$0xf]
      %v721 = vld [vmem:[%s3 + $0xc] sm:$0xf]
      %v722 = vld [vmem:[%s3 + $0x10] sm:$0xf]
      %v723 = vld [vmem:[%s3 + $0x14] sm:$0xf]
      %v724 = vld [vmem:[%s3 + $0x18] sm:$0xf]
      %v725 = vld [vmem:[%s3 + $0x1c] sm:$0xf]
      %v726 = vld [vmem:[%s3 + $0x20] sm:$0xf]
      %v727 = vld [vmem:[%s3 + $0x24] sm:$0xf]
      %v728 = vld [vmem:[%s3 + $0x28] sm:$0xf]
      %v729 = vld [vmem:[%s3 + $0x2c] sm:$0xf]
      %v730 = vld [vmem:[%s3 + $0x30] sm:$0xf]
      %v731 = vld [vmem:[%s3 + $0x34] sm:$0xf]
      %v732 = vld [vmem:[%s3 + $0x38] sm:$0xf]
      %v733 = vld [vmem:[%s3 + $0x3c] sm:$0xf]
      %v750 = vunpack.c.l.b16 %v718
      %v751 = vunpack.c.l.b16 %v719
      %v752 = vunpack.c.l.b16 %v720
      %v753 = vunpack.c.l.b16 %v721
      %v754 = vunpack.c.l.b16 %v722
      %v755 = vunpack.c.l.b16 %v723
      %v756 = vunpack.c.l.b16 %v724
      %v757 = vunpack.c.l.b16 %v725
      %v758 = vunpack.c.l.b16 %v726
      %v759 = vunpack.c.l.b16 %v727
      %v760 = vunpack.c.l.b16 %v728
      %v761 = vunpack.c.l.b16 %v729
      %v762 = vunpack.c.l.b16 %v730
      %v763 = vunpack.c.l.b16 %v731
      %v764 = vunpack.c.l.b16 %v732
      %v765 = vunpack.c.l.b16 %v733
      %v766 = vpack.c.b16 %v751, %v750
      %v767 = vpack.c.b16 %v753, %v752
      %v768 = vpack.c.b16 %v755, %v754
      %v769 = vpack.c.b16 %v757, %v756
      %v770 = vpack.c.b16 %v759, %v758
      %v771 = vpack.c.b16 %v761, %v760
      %v772 = vpack.c.b16 %v763, %v762
      %v773 = vpack.c.b16 %v765, %v764
      %782 = vmatpush.bf16.msra.mxu0 %v773
      %783 = vmatpush.bf16.msra.mxu0 %v772
      %784 = vmatpush.bf16.msra.mxu0 %v771
      %785 = vmatpush.bf16.msra.mxu0 %v770
      %786 = vmatpush.bf16.msra.mxu0 %v769
      %787 = vmatpush.bf16.msra.mxu0 %v768
      %788 = vmatpush.bf16.msra.mxu0 %v767
      %789 = vmatpush.bf16.msra.mxu0 %v766
      %790 = vmatmul.bf16.gmra.mxu0 %v716
      %v791 = vpop.f32.mrf.mxu0
      %v792 = vadd.f32 %v665, %v791
      %v793 = vpop.f32.mrf.mxu0
      %794 = vdwg.mxu0
      %v795 = vld [vmem:[%s6] sm:$0x1]
      %v796 = vld [vmem:[%s7] sm:$0x1]
      %v797 = vrot.slane %v792, 7
      %vm798 = vcmp.eq.s32.totalorder %v651, 0
      %v799 = vsel %vm798, 0.0, %v797
      %v800 = vrot.slane %v705, 1
      %v801 = vsel %vm652, 0.0, %v800
      %804 = vrot.lane.b32.xlu0 %v705, 64
      %v805 = vpop.permute.xlu0 %804
      %806 = vrot.lane.b32.xlu0 %v792, 64
      %v807 = vpop.permute.xlu0 %806
      %v810 = vsel %vm691, %v799, %v805
      %v811 = vsel %vm691, %v705, %v807
      %v812 = vpack.c.bf16 %v811, %v810
      %v813 = vpack.c.bf16 %v801, %v792
      %v814 = vld [vmem:[%s5] sm:$0xf]
      %v815 = vld [vmem:[%s5 + $0x4] sm:$0xf]
      %v816 = vld [vmem:[%s5 + $0x8] sm:$0xf]
      %v817 = vld [vmem:[%s5 + $0xc] sm:$0xf]
      %v818 = vld [vmem:[%s5 + $0x10] sm:$0xf]
      %v819 = vld [vmem:[%s5 + $0x14] sm:$0xf]
      %v820 = vld [vmem:[%s5 + $0x18] sm:$0xf]
      %v821 = vld [vmem:[%s5 + $0x1c] sm:$0xf]
      %v822 = vld [vmem:[%s5 + $0x20] sm:$0xf]
      %v823 = vld [vmem:[%s5 + $0x24] sm:$0xf]
      %v824 = vld [vmem:[%s5 + $0x28] sm:$0xf]
      %v825 = vld [vmem:[%s5 + $0x2c] sm:$0xf]
      %v826 = vld [vmem:[%s5 + $0x30] sm:$0xf]
      %v827 = vld [vmem:[%s5 + $0x34] sm:$0xf]
      %v828 = vld [vmem:[%s5 + $0x38] sm:$0xf]
      %v829 = vld [vmem:[%s5 + $0x3c] sm:$0xf]
      %v830 = vld [vmem:[%s5 + $0x40] sm:$0xf]
      %v831 = vld [vmem:[%s5 + $0x44] sm:$0xf]
      %v832 = vld [vmem:[%s5 + $0x48] sm:$0xf]
      %v833 = vld [vmem:[%s5 + $0x4c] sm:$0xf]
      %v834 = vld [vmem:[%s5 + $0x50] sm:$0xf]
      %v835 = vld [vmem:[%s5 + $0x54] sm:$0xf]
      %v836 = vld [vmem:[%s5 + $0x58] sm:$0xf]
      %v837 = vld [vmem:[%s5 + $0x5c] sm:$0xf]
      %v862 = vunpack.c.l.b16 %v814
      %v863 = vunpack.c.l.b16 %v815
      %v864 = vunpack.c.l.b16 %v816
      %v865 = vunpack.c.l.b16 %v817
      %v866 = vunpack.c.l.b16 %v818
      %v867 = vunpack.c.l.b16 %v819
      %v868 = vunpack.c.l.b16 %v820
      %v869 = vunpack.c.l.b16 %v821
      %v870 = vunpack.c.l.b16 %v822
      %v871 = vunpack.c.l.b16 %v823
      %v872 = vunpack.c.l.b16 %v824
      %v873 = vunpack.c.l.b16 %v825
      %v874 = vunpack.c.l.b16 %v826
      %v875 = vunpack.c.l.b16 %v827
      %v876 = vunpack.c.l.b16 %v828
      %v877 = vunpack.c.l.b16 %v829
      %v878 = vunpack.c.l.b16 %v830
      %v879 = vunpack.c.l.b16 %v831
      %v880 = vunpack.c.l.b16 %v832
      %v881 = vunpack.c.l.b16 %v833
      %v882 = vunpack.c.l.b16 %v834
      %v883 = vunpack.c.l.b16 %v835
      %v884 = vunpack.c.l.b16 %v836
      %v885 = vunpack.c.l.b16 %v837
      %v886 = vpack.c.b16 %v863, %v862
      %v887 = vpack.c.b16 %v865, %v864
      %v888 = vpack.c.b16 %v867, %v866
      %v889 = vpack.c.b16 %v869, %v868
      %v890 = vpack.c.b16 %v871, %v870
      %v891 = vpack.c.b16 %v873, %v872
      %v892 = vpack.c.b16 %v875, %v874
      %v893 = vpack.c.b16 %v877, %v876
      %v894 = vpack.c.b16 %v879, %v878
      %v895 = vpack.c.b16 %v881, %v880
      %v896 = vpack.c.b16 %v883, %v882
      %v897 = vpack.c.b16 %v885, %v884
      %v911 = vsel %vm691, %v813, 0
      %913 = vmatpush.bf16.msra.mxu0 %v893
      %914 = vmatpush.bf16.msra.mxu0 %v892
      %915 = vmatpush.bf16.msra.mxu0 %v891
      %916 = vmatpush.bf16.msra.mxu0 %v890
      %917 = vmatpush.bf16.msra.mxu0 %v889
      %918 = vmatpush.bf16.msra.mxu0 %v888
      %919 = vmatpush.bf16.msra.mxu0 %v887
      %920 = vmatpush.bf16.msra.mxu0 %v886
      %921 = vmatmul.bf16.gmra.mxu0 %v812
      %v922 = vpop.f32.mrf.mxu0
      %v923 = vadd.f32 0.0, %v922
      %v924 = vpop.f32.mrf.mxu0
      %v925 = vadd.f32 0.0, %v924
      %926 = vdwg.mxu0
      %927 = vmatpush.bf16.msra.mxu0 0
      %928 = vmatpush.bf16.msra.mxu0 0
      %929 = vmatpush.bf16.msra.mxu0 0
      %930 = vmatpush.bf16.msra.mxu0 0
      %931 = vmatpush.bf16.msra.mxu0 %v897
      %932 = vmatpush.bf16.msra.mxu0 %v896
      %933 = vmatpush.bf16.msra.mxu0 %v895
      %934 = vmatpush.bf16.msra.mxu0 %v894
      %935 = vmatmul.bf16.gmra.mxu0 %v911
      %v936 = vpop.f32.mrf.mxu0
      %v937 = vadd.f32 %v923, %v936
      %v938 = vpop.f32.mrf.mxu0
      %v939 = vadd.f32 %v925, %v938
      %940 = vdwg.mxu0
      %v942 = vperm.slane %v795, 0
      %v944 = vmul.f32 %v937, %v942
      %v945 = vmul.f32 %v939, %v942
      %v947 = vperm.slane %v796, 0
      %v949 = vadd.f32 %v944, %v947
      %v950 = vadd.f32 %v945, %v947
      %v951 = vmax.f32 %v949, 0.0
      %v952 = vmax.f32 %v950, 0.0
      %v953 = vld [vmem:[%s9] sm:$0x1]
      %v954 = vld [vmem:[%s10] sm:$0x1]
      %v955 = vrot.slane %v952, 7
      %v956 = vsel %vm798, 0.0, %v955
      %v957 = vrot.slane %v951, 1
      %v958 = vsel %vm652, 0.0, %v957
      %961 = vrot.lane.b32.xlu0 %v951, 64
      %v962 = vpop.permute.xlu0 %961
      %963 = vrot.lane.b32.xlu0 %v952, 64
      %v964 = vpop.permute.xlu0 %963
      %v967 = vsel %vm691, %v956, %v962
      %v968 = vsel %vm691, %v951, %v964
      %v969 = vpack.c.bf16 %v968, %v967
      %v970 = vpack.c.bf16 %v958, %v952
      %v971 = vld [vmem:[%s8] sm:$0xf]
      %v972 = vld [vmem:[%s8 + $0x4] sm:$0xf]
      %v973 = vld [vmem:[%s8 + $0x8] sm:$0xf]
      %v974 = vld [vmem:[%s8 + $0xc] sm:$0xf]
      %v975 = vld [vmem:[%s8 + $0x10] sm:$0xf]
      %v976 = vld [vmem:[%s8 + $0x14] sm:$0xf]
      %v977 = vld [vmem:[%s8 + $0x18] sm:$0xf]
      %v978 = vld [vmem:[%s8 + $0x1c] sm:$0xf]
      %v979 = vld [vmem:[%s8 + $0x20] sm:$0xf]
      %v980 = vld [vmem:[%s8 + $0x24] sm:$0xf]
      %v981 = vld [vmem:[%s8 + $0x28] sm:$0xf]
      %v982 = vld [vmem:[%s8 + $0x2c] sm:$0xf]
      %v983 = vld [vmem:[%s8 + $0x30] sm:$0xf]
      %v984 = vld [vmem:[%s8 + $0x34] sm:$0xf]
      %v985 = vld [vmem:[%s8 + $0x38] sm:$0xf]
      %v986 = vld [vmem:[%s8 + $0x3c] sm:$0xf]
      %v987 = vld [vmem:[%s8 + $0x40] sm:$0xf]
      %v988 = vld [vmem:[%s8 + $0x44] sm:$0xf]
      %v989 = vld [vmem:[%s8 + $0x48] sm:$0xf]
      %v990 = vld [vmem:[%s8 + $0x4c] sm:$0xf]
      %v991 = vld [vmem:[%s8 + $0x50] sm:$0xf]
      %v992 = vld [vmem:[%s8 + $0x54] sm:$0xf]
      %v993 = vld [vmem:[%s8 + $0x58] sm:$0xf]
      %v994 = vld [vmem:[%s8 + $0x5c] sm:$0xf]
      %v1019 = vunpack.c.l.b16 %v971
      %v1020 = vunpack.c.l.b16 %v972
      %v1021 = vunpack.c.l.b16 %v973
      %v1022 = vunpack.c.l.b16 %v974
      %v1023 = vunpack.c.l.b16 %v975
      %v1024 = vunpack.c.l.b16 %v976
      %v1025 = vunpack.c.l.b16 %v977
      %v1026 = vunpack.c.l.b16 %v978
      %v1027 = vunpack.c.l.b16 %v979
      %v1028 = vunpack.c.l.b16 %v980
      %v1029 = vunpack.c.l.b16 %v981
      %v1030 = vunpack.c.l.b16 %v982
      %v1031 = vunpack.c.l.b16 %v983
      %v1032 = vunpack.c.l.b16 %v984
      %v1033 = vunpack.c.l.b16 %v985
      %v1034 = vunpack.c.l.b16 %v986
      %v1035 = vunpack.c.l.b16 %v987
      %v1036 = vunpack.c.l.b16 %v988
      %v1037 = vunpack.c.l.b16 %v989
      %v1038 = vunpack.c.l.b16 %v990
      %v1039 = vunpack.c.l.b16 %v991
      %v1040 = vunpack.c.l.b16 %v992
      %v1041 = vunpack.c.l.b16 %v993
      %v1042 = vunpack.c.l.b16 %v994
      %v1043 = vpack.c.b16 %v1020, %v1019
      %v1044 = vpack.c.b16 %v1022, %v1021
      %v1045 = vpack.c.b16 %v1024, %v1023
      %v1046 = vpack.c.b16 %v1026, %v1025
      %v1047 = vpack.c.b16 %v1028, %v1027
      %v1048 = vpack.c.b16 %v1030, %v1029
      %v1049 = vpack.c.b16 %v1032, %v1031
      %v1050 = vpack.c.b16 %v1034, %v1033
      %v1051 = vpack.c.b16 %v1036, %v1035
      %v1052 = vpack.c.b16 %v1038, %v1037
      %v1053 = vpack.c.b16 %v1040, %v1039
      %v1054 = vpack.c.b16 %v1042, %v1041
      %v1068 = vsel %vm691, %v970, 0
      %1070 = vmatpush.bf16.msra.mxu0 %v1050
      %1071 = vmatpush.bf16.msra.mxu0 %v1049
      %1072 = vmatpush.bf16.msra.mxu0 %v1048
      %1073 = vmatpush.bf16.msra.mxu0 %v1047
      %1074 = vmatpush.bf16.msra.mxu0 %v1046
      %1075 = vmatpush.bf16.msra.mxu0 %v1045
      %1076 = vmatpush.bf16.msra.mxu0 %v1044
      %1077 = vmatpush.bf16.msra.mxu0 %v1043
      %1078 = vmatmul.bf16.gmra.mxu0 %v969
      %v1079 = vpop.f32.mrf.mxu0
      %v1080 = vadd.f32 0.0, %v1079
      %v1081 = vpop.f32.mrf.mxu0
      %v1082 = vadd.f32 0.0, %v1081
      %1083 = vdwg.mxu0
      %1084 = vmatpush.bf16.msra.mxu0 0
      %1085 = vmatpush.bf16.msra.mxu0 0
      %1086 = vmatpush.bf16.msra.mxu0 0
      %1087 = vmatpush.bf16.msra.mxu0 0
      %1088 = vmatpush.bf16.msra.mxu0 %v1054
      %1089 = vmatpush.bf16.msra.mxu0 %v1053
      %1090 = vmatpush.bf16.msra.mxu0 %v1052
      %1091 = vmatpush.bf16.msra.mxu0 %v1051
      %1092 = vmatmul.bf16.gmra.mxu0 %v1068
      %v1093 = vpop.f32.mrf.mxu0
      %v1094 = vadd.f32 %v1080, %v1093
      %v1095 = vpop.f32.mrf.mxu0
      %v1096 = vadd.f32 %v1082, %v1095
      %1097 = vdwg.mxu0
      %v1099 = vperm.slane %v953, 0
      %v1101 = vmul.f32 %v1094, %v1099
      %v1102 = vmul.f32 %v1096, %v1099
      %v1104 = vperm.slane %v954, 0
      %v1106 = vadd.f32 %v1101, %v1104
      %v1107 = vadd.f32 %v1102, %v1104
      %v1108 = vmax.f32 %v1106, 0.0
      %v1109 = vmax.f32 %v1107, 0.0
      %v1110 = vld [vmem:[%s12] sm:$0x1]
      %v1111 = vld [vmem:[%s13] sm:$0x1]
      %v1112 = vrot.slane %v1109, 7
      %v1113 = vsel %vm798, 0.0, %v1112
      %v1114 = vrot.slane %v1108, 1
      %v1115 = vsel %vm652, 0.0, %v1114
      %1118 = vrot.lane.b32.xlu0 %v1108, 64
      %v1119 = vpop.permute.xlu0 %1118
      %1120 = vrot.lane.b32.xlu0 %v1109, 64
      %v1121 = vpop.permute.xlu0 %1120
      %v1124 = vsel %vm691, %v1113, %v1119
      %v1125 = vsel %vm691, %v1108, %v1121
      %v1126 = vpack.c.bf16 %v1125, %v1124
      %v1127 = vpack.c.bf16 %v1115, %v1109
      %v1128 = vld [vmem:[%s11] sm:$0xf]
      %v1129 = vld [vmem:[%s11 + $0x4] sm:$0xf]
      %v1130 = vld [vmem:[%s11 + $0x8] sm:$0xf]
      %v1131 = vld [vmem:[%s11 + $0xc] sm:$0xf]
      %v1132 = vld [vmem:[%s11 + $0x10] sm:$0xf]
      %v1133 = vld [vmem:[%s11 + $0x14] sm:$0xf]
      %v1134 = vld [vmem:[%s11 + $0x18] sm:$0xf]
      %v1135 = vld [vmem:[%s11 + $0x1c] sm:$0xf]
      %v1136 = vld [vmem:[%s11 + $0x20] sm:$0xf]
      %v1137 = vld [vmem:[%s11 + $0x24] sm:$0xf]
      %v1138 = vld [vmem:[%s11 + $0x28] sm:$0xf]
      %v1139 = vld [vmem:[%s11 + $0x2c] sm:$0xf]
      %v1140 = vld [vmem:[%s11 + $0x30] sm:$0xf]
      %v1141 = vld [vmem:[%s11 + $0x34] sm:$0xf]
      %v1142 = vld [vmem:[%s11 + $0x38] sm:$0xf]
      %v1143 = vld [vmem:[%s11 + $0x3c] sm:$0xf]
      %v1144 = vld [vmem:[%s11 + $0x40] sm:$0xf]
      %v1145 = vld [vmem:[%s11 + $0x44] sm:$0xf]
      %v1146 = vld [vmem:[%s11 + $0x48] sm:$0xf]
      %v1147 = vld [vmem:[%s11 + $0x4c] sm:$0xf]
      %v1148 = vld [vmem:[%s11 + $0x50] sm:$0xf]
      %v1149 = vld [vmem:[%s11 + $0x54] sm:$0xf]
      %v1150 = vld [vmem:[%s11 + $0x58] sm:$0xf]
      %v1151 = vld [vmem:[%s11 + $0x5c] sm:$0xf]
      %v1176 = vunpack.c.l.b16 %v1128
      %v1177 = vunpack.c.l.b16 %v1129
      %v1178 = vunpack.c.l.b16 %v1130
      %v1179 = vunpack.c.l.b16 %v1131
      %v1180 = vunpack.c.l.b16 %v1132
      %v1181 = vunpack.c.l.b16 %v1133
      %v1182 = vunpack.c.l.b16 %v1134
      %v1183 = vunpack.c.l.b16 %v1135
      %v1184 = vunpack.c.l.b16 %v1136
      %v1185 = vunpack.c.l.b16 %v1137
      %v1186 = vunpack.c.l.b16 %v1138
      %v1187 = vunpack.c.l.b16 %v1139
      %v1188 = vunpack.c.l.b16 %v1140
      %v1189 = vunpack.c.l.b16 %v1141
      %v1190 = vunpack.c.l.b16 %v1142
      %v1191 = vunpack.c.l.b16 %v1143
      %v1192 = vunpack.c.l.b16 %v1144
      %v1193 = vunpack.c.l.b16 %v1145
      %v1194 = vunpack.c.l.b16 %v1146
      %v1195 = vunpack.c.l.b16 %v1147
      %v1196 = vunpack.c.l.b16 %v1148
      %v1197 = vunpack.c.l.b16 %v1149
      %v1198 = vunpack.c.l.b16 %v1150
      %v1199 = vunpack.c.l.b16 %v1151
      %v1200 = vpack.c.b16 %v1177, %v1176
      %v1201 = vpack.c.b16 %v1179, %v1178
      %v1202 = vpack.c.b16 %v1181, %v1180
      %v1203 = vpack.c.b16 %v1183, %v1182
      %v1204 = vpack.c.b16 %v1185, %v1184
      %v1205 = vpack.c.b16 %v1187, %v1186
      %v1206 = vpack.c.b16 %v1189, %v1188
      %v1207 = vpack.c.b16 %v1191, %v1190
      %v1208 = vpack.c.b16 %v1193, %v1192
      %v1209 = vpack.c.b16 %v1195, %v1194
      %v1210 = vpack.c.b16 %v1197, %v1196
      %v1211 = vpack.c.b16 %v1199, %v1198
      %v1225 = vsel %vm691, %v1127, 0
      %1227 = vmatpush.bf16.msra.mxu0 %v1207
      %1228 = vmatpush.bf16.msra.mxu0 %v1206
      %1229 = vmatpush.bf16.msra.mxu0 %v1205
      %1230 = vmatpush.bf16.msra.mxu0 %v1204
      %1231 = vmatpush.bf16.msra.mxu0 %v1203
      %1232 = vmatpush.bf16.msra.mxu0 %v1202
      %1233 = vmatpush.bf16.msra.mxu0 %v1201
      %1234 = vmatpush.bf16.msra.mxu0 %v1200
      %1235 = vmatmul.bf16.gmra.mxu0 %v1126
      %v1236 = vpop.f32.mrf.mxu0
      %v1237 = vadd.f32 0.0, %v1236
      %v1238 = vpop.f32.mrf.mxu0
      %v1239 = vadd.f32 0.0, %v1238
      %1240 = vdwg.mxu0
      %1241 = vmatpush.bf16.msra.mxu0 0
      %1242 = vmatpush.bf16.msra.mxu0 0
      %1243 = vmatpush.bf16.msra.mxu0 0
      %1244 = vmatpush.bf16.msra.mxu0 0
      %1245 = vmatpush.bf16.msra.mxu0 %v1211
      %1246 = vmatpush.bf16.msra.mxu0 %v1210
      %1247 = vmatpush.bf16.msra.mxu0 %v1209
      %1248 = vmatpush.bf16.msra.mxu0 %v1208
      %1249 = vmatmul.bf16.gmra.mxu0 %v1225
      %v1250 = vpop.f32.mrf.mxu0
      %v1251 = vadd.f32 %v1237, %v1250
      %v1252 = vpop.f32.mrf.mxu0
      %v1253 = vadd.f32 %v1239, %v1252
      %1254 = vdwg.mxu0
      %v1256 = vperm.slane %v1110, 0
      %v1258 = vmul.f32 %v1251, %v1256
      %v1259 = vmul.f32 %v1253, %v1256
      %v1261 = vperm.slane %v1111, 0
      %v1263 = vadd.f32 %v1258, %v1261
      %v1264 = vadd.f32 %v1259, %v1261
      %v1265 = vadd.f32 %v705, %v1263
      %v1266 = vadd.f32 %v792, %v1264
      %v1267 = vsel %vm691, %v1265, 0.0
      %v1268 = vsel %vm691, %v1266, 0.0
      %v1269 = vadd.f32 %v1267, %v1268
      %v1270 = vrot.slane %v1269, 4
      %v1271 = vadd.f32 %v1269, %v1270
      %v1272 = vrot.slane %v1271, 2
      %v1273 = vadd.f32 %v1271, %v1272
      %v1274 = vrot.slane %v1273, 1
      %v1275 = vadd.f32 %v1273, %v1274
      %v1276 = vmul.f32 %v1275, 0.0625
      %v1277 = vmul.f32 %v1265, %v1265
      %v1278 = vmul.f32 %v1266, %v1266
      %v1279 = vsel %vm691, %v1277, 0.0
      %v1280 = vsel %vm691, %v1278, 0.0
      %v1281 = vadd.f32 %v1279, %v1280
      %v1282 = vrot.slane %v1281, 4
      %v1283 = vadd.f32 %v1281, %v1282
      %v1284 = vrot.slane %v1283, 2
      %v1285 = vadd.f32 %v1283, %v1284
      %v1286 = vrot.slane %v1285, 1
      %v1287 = vadd.f32 %v1285, %v1286
      %v1288 = vmul.f32 %v1287, 0.0625
      %v1289 = vmul.f32 %v1276, %v1276
      %v1290 = vsub.f32 %v1288, %v1289
      %v1291 = vmax.f32 %v1290, 0.0
      %v1292 = vsub.f32 %v1265, %v1276
      %v1293 = vsub.f32 %v1266, %v1276
      %v1294 = vadd.f32 %v1291, 1e-05
      %v1295 = vrsqrt.pop %v1294
      %v1296 = vmul.f32 %v1295, %v1294
      %v1297 = vmul.f32 %v1296, %v1295
      %v1298 = vmul.f32 0.5, %v1297
      %v1299 = vsub.f32 1.5, %v1298
      %v1300 = vmul.f32 %v1295, %v1299
      %vm1301 = vweird.f32 %v1294
      %vm1302 = vweird.f32 %v1295
      %vm1303 = vmor %vm1301, %vm1302
      %v1304 = vsel %vm1303, %v1295, %v1300
      %v1305 = vmul.f32 %v1292, %v1304
      %v1306 = vmul.f32 %v1293, %v1304
      %v1307 = vmax.f32 %v1305, 0.0
      %v1308 = vmax.f32 %v1306, 0.0
      %v1309 = vld [vmem:[%s14] sm:$0x1]
      %v1311 = vperm.slane %v1309, 0
      %v1313 = vmul.f32 %v1307, %v1311
      %v1314 = vmul.f32 %v1308, %v1311
      %v1315 = vld [vmem:[%s15] sm:$0x1]
      %v1317 = vperm.slane %v1315, 0
      %v1319 = vadd.f32 %v1313, %v1317
      %v1320 = vadd.f32 %v1314, %v1317
      %v1321 = vpack.c.bf16 %v1320, %v1319
      %v1322 = vld [vmem:[%s16] sm:$0xf]
      %v1323 = vld [vmem:[%s16 + $0x4] sm:$0xf]
      %v1324 = vld [vmem:[%s16 + $0x8] sm:$0xf]
      %v1325 = vld [vmem:[%s16 + $0xc] sm:$0xf]
      %v1326 = vld [vmem:[%s16 + $0x10] sm:$0xf]
      %v1327 = vld [vmem:[%s16 + $0x14] sm:$0xf]
      %v1328 = vld [vmem:[%s16 + $0x18] sm:$0xf]
      %v1329 = vld [vmem:[%s16 + $0x1c] sm:$0xf]
      %v1338 = vunpack.c.l.b16 %v1322
      %v1339 = vunpack.c.l.b16 %v1323
      %v1340 = vunpack.c.l.b16 %v1324
      %v1341 = vunpack.c.l.b16 %v1325
      %v1342 = vunpack.c.l.b16 %v1326
      %v1343 = vunpack.c.l.b16 %v1327
      %v1344 = vunpack.c.l.b16 %v1328
      %v1345 = vunpack.c.l.b16 %v1329
      %v1346 = vpack.c.b16 %v1339, %v1338
      %v1347 = vpack.c.b16 %v1341, %v1340
      %v1348 = vpack.c.b16 %v1343, %v1342
      %v1349 = vpack.c.b16 %v1345, %v1344
      %v1355 = vsel %vm691, %v1321, 0
      %1357 = vmatpush.bf16.msra.mxu0 0
      %1358 = vmatpush.bf16.msra.mxu0 0
      %1359 = vmatpush.bf16.msra.mxu0 0
      %1360 = vmatpush.bf16.msra.mxu0 0
      %1361 = vmatpush.bf16.msra.mxu0 %v1349
      %1362 = vmatpush.bf16.msra.mxu0 %v1348
      %1363 = vmatpush.bf16.msra.mxu0 %v1347
      %1364 = vmatpush.bf16.msra.mxu0 %v1346
      %1365 = vmatmul.bf16.gmra.mxu0 %v1355
      %v1366 = vpop.f32.mrf.mxu0
      %v1367 = vadd.f32 0.0, %v1366
      %v1368 = vpop.f32.mrf.mxu0
      %v1369 = vadd.f32 0.0, %v1368
      %1370 = vdwg.mxu0
      %v1371 = vld [vmem:[%s17] sm:$0xf]
      %v1372 = vld [vmem:[%s17 + $0x4] sm:$0xf]
      %v1373 = vld [vmem:[%s17 + $0x8] sm:$0xf]
      %v1374 = vld [vmem:[%s17 + $0xc] sm:$0xf]
      %v1375 = vld [vmem:[%s17 + $0x10] sm:$0xf]
      %v1376 = vld [vmem:[%s17 + $0x14] sm:$0xf]
      %v1377 = vld [vmem:[%s17 + $0x18] sm:$0xf]
      %v1378 = vld [vmem:[%s17 + $0x1c] sm:$0xf]
      %v1381 = vunpack.c.l.b16 %v647
      %v1382 = vunpack.c.l.b16 %v648
      %v1383 = vpack.c.b16 %v1382, %v1381
      %v1392 = vunpack.c.l.b16 %v1371
      %v1393 = vunpack.c.l.b16 %v1372
      %v1394 = vunpack.c.l.b16 %v1373
      %v1395 = vunpack.c.l.b16 %v1374
      %v1396 = vunpack.c.l.b16 %v1375
      %v1397 = vunpack.c.l.b16 %v1376
      %v1398 = vunpack.c.l.b16 %v1377
      %v1399 = vunpack.c.l.b16 %v1378
      %v1400 = vpack.c.b16 %v1393, %v1392
      %v1401 = vpack.c.b16 %v1395, %v1394
      %v1402 = vpack.c.b16 %v1397, %v1396
      %v1403 = vpack.c.b16 %v1399, %v1398
      %v1409 = vsel %vm691, %v1383, 0
      %1411 = vmatpush.bf16.msra.mxu0 0
      %1412 = vmatpush.bf16.msra.mxu0 0
      %1413 = vmatpush.bf16.msra.mxu0 0
      %1414 = vmatpush.bf16.msra.mxu0 0
      %1415 = vmatpush.bf16.msra.mxu0 %v1403
      %1416 = vmatpush.bf16.msra.mxu0 %v1402
      %1417 = vmatpush.bf16.msra.mxu0 %v1401
      %1418 = vmatpush.bf16.msra.mxu0 %v1400
      %1419 = vmatmul.bf16.gmra.mxu0 %v1409
      %v1420 = vpop.f32.mrf.mxu0
      %v1421 = vadd.f32 0.0, %v1420
      %v1422 = vpop.f32.mrf.mxu0
      %v1423 = vadd.f32 0.0, %v1422
      %1424 = vdwg.mxu0
      %v1425 = vld [vmem:[%s18] sm:$0xf]
      %v1426 = vld [vmem:[%s18 + $0x4] sm:$0xf]
      %v1427 = vld [vmem:[%s18 + $0x8] sm:$0xf]
      %v1428 = vld [vmem:[%s18 + $0xc] sm:$0xf]
      %v1429 = vld [vmem:[%s18 + $0x10] sm:$0xf]
      %v1430 = vld [vmem:[%s18 + $0x14] sm:$0xf]
      %v1431 = vld [vmem:[%s18 + $0x18] sm:$0xf]
      %v1432 = vld [vmem:[%s18 + $0x1c] sm:$0xf]
      %v1441 = vunpack.c.l.b16 %v1425
      %v1442 = vunpack.c.l.b16 %v1426
      %v1443 = vunpack.c.l.b16 %v1427
      %v1444 = vunpack.c.l.b16 %v1428
      %v1445 = vunpack.c.l.b16 %v1429
      %v1446 = vunpack.c.l.b16 %v1430
      %v1447 = vunpack.c.l.b16 %v1431
      %v1448 = vunpack.c.l.b16 %v1432
      %v1449 = vpack.c.b16 %v1442, %v1441
      %v1450 = vpack.c.b16 %v1444, %v1443
      %v1451 = vpack.c.b16 %v1446, %v1445
      %v1452 = vpack.c.b16 %v1448, %v1447
      %1457 = vmatpush.bf16.msra.mxu0 0
      %1458 = vmatpush.bf16.msra.mxu0 0
      %1459 = vmatpush.bf16.msra.mxu0 0
      %1460 = vmatpush.bf16.msra.mxu0 0
      %1461 = vmatpush.bf16.msra.mxu0 %v1452
      %1462 = vmatpush.bf16.msra.mxu0 %v1451
      %1463 = vmatpush.bf16.msra.mxu0 %v1450
      %1464 = vmatpush.bf16.msra.mxu0 %v1449
      %1465 = vmatmul.bf16.gmra.mxu0 %v1409
      %v1466 = vpop.f32.mrf.mxu0
      %v1467 = vadd.f32 0.0, %v1466
      %v1468 = vpop.f32.mrf.mxu0
      %v1469 = vadd.f32 0.0, %v1468
      %1470 = vdwg.mxu0
      %v1471 = vpack.c.bf16 %v1369, %v1367
      %v1472 = vpack.c.bf16 %v1423, %v1421
      %vm1473 = vcmask 130048
      %v1475 = vsel %vm1473, %v1471, 0
      %v1478 = vsel %vm1473, %v1472, 0
      %1480 = vmatpush.bf16.xpose.msra.mxu0 0
      %1481 = vmatpush.bf16.xpose.msra.mxu0 0
      %1482 = vmatpush.bf16.xpose.msra.mxu0 0
      %1483 = vmatpush.bf16.xpose.msra.mxu0 0
      %1484 = vmatpush.bf16.xpose.msra.mxu0 0
      %1485 = vmatpush.bf16.xpose.msra.mxu0 0
      %1486 = vmatpush.bf16.xpose.msra.mxu0 0
      %1487 = vmatpush.bf16.xpose.msra.mxu0 %v1478
      %1488 = vmatmul.bf16.gmra.mxu0 %v1475
      %v1489 = vpop.f32.mrf.mxu0
      %v1490 = vadd.f32 0.0, %v1489
      %v1491 = vpop.f32.mrf.mxu0
      %v1492 = vadd.f32 0.0, %v1491
      %1493 = vdwg.mxu0
      %v1494 = vsel %vm1473, %v1490, -inf
      %1495 = vmax.xlane.f32.xlu0 %v1494
      %v1496 = vpop.xlane.xlu0 %1495
      %v1497 = vsel %vm1473, %v1492, -inf
      %1498 = vmax.xlane.f32.xlu0 %v1497
      %v1499 = vpop.xlane.xlu0 %1498
      %v1500 = vsub.f32 %v1490, %v1496
      %v1501 = vsub.f32 %v1492, %v1499
      %v1502 = vmul.f32 %v1500, 1.442695
      %v1503 = vpow.pop %v1502
      %v1504 = vmul.f32 %v1501, 1.442695
      %v1505 = vpow.pop %v1504
      %v1506 = vsel %vm1473, %v1503, 0.0
      %1507 = vadd.xlane.f32.xlu0 %v1506
      %v1508 = vpop.xlane.xlu0 %1507
      %v1509 = vsel %vm1473, %v1505, 0.0
      %1510 = vadd.xlane.f32.xlu0 %v1509
      %v1511 = vpop.xlane.xlu0 %1510
      %v1512 = vrcp.pop %v1508
      %v1513 = vrcp.pop %v1511
      %v1514 = vmul.f32 %v1503, %v1512
      %v1515 = vmul.f32 %v1505, %v1513
      %v1516 = vpack.c.bf16 %v1515, %v1514
      %v1517 = vpack.c.bf16 %v1469, %v1467
      %v1519 = vsel %vm1473, %v1516, 0
      %1521 = vmatpush.bf16.msra.mxu0 0
      %1522 = vmatpush.bf16.msra.mxu0 0
      %1523 = vmatpush.bf16.msra.mxu0 0
      %1524 = vmatpush.bf16.msra.mxu0 0
      %1525 = vmatpush.bf16.msra.mxu0 0
      %1526 = vmatpush.bf16.msra.mxu0 0
      %1527 = vmatpush.bf16.msra.mxu0 0
      %1528 = vmatpush.bf16.msra.mxu0 %v1517
      %1529 = vmatmul.bf16.gmra.mxu0 %v1519
      %v1530 = vpop.f32.mrf.mxu0
      %v1531 = vadd.f32 0.0, %v1530
      %v1532 = vpop.f32.mrf.mxu0
      %v1533 = vadd.f32 0.0, %v1532
      %1534 = vdwg.mxu0
      %v1535 = vpack.c.bf16 %v1533, %v1531
      %v1536 = vld [vmem:[%s19] sm:$0xf]
      %v1537 = vld [vmem:[%s19 + $0x4] sm:$0xf]
      %s1538 = scalar_lea.vmem %s16, 32
      %v1539 = vld [vmem:[%s1538] sm:$0xf]
      %v1540 = vld [vmem:[%s1538 + $0x4] sm:$0xf]
      %v1541 = vld [vmem:[%s1538 + $0x8] sm:$0xf]
      %v1542 = vld [vmem:[%s1538 + $0xc] sm:$0xf]
      %v1543 = vld [vmem:[%s1538 + $0x10] sm:$0xf]
      %v1544 = vld [vmem:[%s1538 + $0x14] sm:$0xf]
      %v1545 = vld [vmem:[%s1538 + $0x18] sm:$0xf]
      %v1546 = vld [vmem:[%s1538 + $0x1c] sm:$0xf]
      %v1555 = vunpack.c.l.b16 %v1539
      %v1556 = vunpack.c.l.b16 %v1540
      %v1557 = vunpack.c.l.b16 %v1541
      %v1558 = vunpack.c.l.b16 %v1542
      %v1559 = vunpack.c.l.b16 %v1543
      %v1560 = vunpack.c.l.b16 %v1544
      %v1561 = vunpack.c.l.b16 %v1545
      %v1562 = vunpack.c.l.b16 %v1546
      %v1563 = vpack.c.b16 %v1556, %v1555
      %v1564 = vpack.c.b16 %v1558, %v1557
      %v1565 = vpack.c.b16 %v1560, %v1559
      %v1566 = vpack.c.b16 %v1562, %v1561
      %1571 = vmatpush.bf16.msra.mxu0 0
      %1572 = vmatpush.bf16.msra.mxu0 0
      %1573 = vmatpush.bf16.msra.mxu0 0
      %1574 = vmatpush.bf16.msra.mxu0 0
      %1575 = vmatpush.bf16.msra.mxu0 %v1566
      %1576 = vmatpush.bf16.msra.mxu0 %v1565
      %1577 = vmatpush.bf16.msra.mxu0 %v1564
      %1578 = vmatpush.bf16.msra.mxu0 %v1563
      %1579 = vmatmul.bf16.gmra.mxu0 %v1355
      %v1580 = vpop.f32.mrf.mxu0
      %v1581 = vadd.f32 0.0, %v1580
      %v1582 = vpop.f32.mrf.mxu0
      %v1583 = vadd.f32 0.0, %v1582
      %1584 = vdwg.mxu0
      %s1585 = scalar_lea.vmem %s17, 32
      %v1586 = vld [vmem:[%s1585] sm:$0xf]
      %v1587 = vld [vmem:[%s1585 + $0x4] sm:$0xf]
      %v1588 = vld [vmem:[%s1585 + $0x8] sm:$0xf]
      %v1589 = vld [vmem:[%s1585 + $0xc] sm:$0xf]
      %v1590 = vld [vmem:[%s1585 + $0x10] sm:$0xf]
      %v1591 = vld [vmem:[%s1585 + $0x14] sm:$0xf]
      %v1592 = vld [vmem:[%s1585 + $0x18] sm:$0xf]
      %v1593 = vld [vmem:[%s1585 + $0x1c] sm:$0xf]
      %v1602 = vunpack.c.l.b16 %v1586
      %v1603 = vunpack.c.l.b16 %v1587
      %v1604 = vunpack.c.l.b16 %v1588
      %v1605 = vunpack.c.l.b16 %v1589
      %v1606 = vunpack.c.l.b16 %v1590
      %v1607 = vunpack.c.l.b16 %v1591
      %v1608 = vunpack.c.l.b16 %v1592
      %v1609 = vunpack.c.l.b16 %v1593
      %v1610 = vpack.c.b16 %v1603, %v1602
      %v1611 = vpack.c.b16 %v1605, %v1604
      %v1612 = vpack.c.b16 %v1607, %v1606
      %v1613 = vpack.c.b16 %v1609, %v1608
      %1618 = vmatpush.bf16.msra.mxu0 0
      %1619 = vmatpush.bf16.msra.mxu0 0
      %1620 = vmatpush.bf16.msra.mxu0 0
      %1621 = vmatpush.bf16.msra.mxu0 0
      %1622 = vmatpush.bf16.msra.mxu0 %v1613
      %1623 = vmatpush.bf16.msra.mxu0 %v1612
      %1624 = vmatpush.bf16.msra.mxu0 %v1611
      %1625 = vmatpush.bf16.msra.mxu0 %v1610
      %1626 = vmatmul.bf16.gmra.mxu0 %v1409
      %v1627 = vpop.f32.mrf.mxu0
      %v1628 = vadd.f32 0.0, %v1627
      %v1629 = vpop.f32.mrf.mxu0
      %v1630 = vadd.f32 0.0, %v1629
      %1631 = vdwg.mxu0
      %s1632 = scalar_lea.vmem %s18, 32
      %v1633 = vld [vmem:[%s1632] sm:$0xf]
      %v1634 = vld [vmem:[%s1632 + $0x4] sm:$0xf]
      %v1635 = vld [vmem:[%s1632 + $0x8] sm:$0xf]
      %v1636 = vld [vmem:[%s1632 + $0xc] sm:$0xf]
      %v1637 = vld [vmem:[%s1632 + $0x10] sm:$0xf]
      %v1638 = vld [vmem:[%s1632 + $0x14] sm:$0xf]
      %v1639 = vld [vmem:[%s1632 + $0x18] sm:$0xf]
      %v1640 = vld [vmem:[%s1632 + $0x1c] sm:$0xf]
      %v1649 = vunpack.c.l.b16 %v1633
      %v1650 = vunpack.c.l.b16 %v1634
      %v1651 = vunpack.c.l.b16 %v1635
      %v1652 = vunpack.c.l.b16 %v1636
      %v1653 = vunpack.c.l.b16 %v1637
      %v1654 = vunpack.c.l.b16 %v1638
      %v1655 = vunpack.c.l.b16 %v1639
      %v1656 = vunpack.c.l.b16 %v1640
      %v1657 = vpack.c.b16 %v1650, %v1649
      %v1658 = vpack.c.b16 %v1652, %v1651
      %v1659 = vpack.c.b16 %v1654, %v1653
      %v1660 = vpack.c.b16 %v1656, %v1655
      %1665 = vmatpush.bf16.msra.mxu0 0
      %1666 = vmatpush.bf16.msra.mxu0 0
      %1667 = vmatpush.bf16.msra.mxu0 0
      %1668 = vmatpush.bf16.msra.mxu0 0
      %1669 = vmatpush.bf16.msra.mxu0 %v1660
      %1670 = vmatpush.bf16.msra.mxu0 %v1659
      %1671 = vmatpush.bf16.msra.mxu0 %v1658
      %1672 = vmatpush.bf16.msra.mxu0 %v1657
      %1673 = vmatmul.bf16.gmra.mxu0 %v1409
      %v1674 = vpop.f32.mrf.mxu0
      %v1675 = vadd.f32 0.0, %v1674
      %v1676 = vpop.f32.mrf.mxu0
      %v1677 = vadd.f32 0.0, %v1676
      %1678 = vdwg.mxu0
      %v1679 = vpack.c.bf16 %v1583, %v1581
      %v1680 = vpack.c.bf16 %v1630, %v1628
      %v1682 = vsel %vm1473, %v1679, 0
      %v1685 = vsel %vm1473, %v1680, 0
      %1687 = vmatpush.bf16.xpose.msra.mxu0 0
      %1688 = vmatpush.bf16.xpose.msra.mxu0 0
      %1689 = vmatpush.bf16.xpose.msra.mxu0 0
      %1690 = vmatpush.bf16.xpose.msra.mxu0 0
      %1691 = vmatpush.bf16.xpose.msra.mxu0 0
      %1692 = vmatpush.bf16.xpose.msra.mxu0 0
      %1693 = vmatpush.bf16.xpose.msra.mxu0 0
      %1694 = vmatpush.bf16.xpose.msra.mxu0 %v1685
      %1695 = vmatmul.bf16.gmra.mxu0 %v1682
      %v1696 = vpop.f32.mrf.mxu0
      %v1697 = vadd.f32 0.0, %v1696
      %v1698 = vpop.f32.mrf.mxu0
      %v1699 = vadd.f32 0.0, %v1698
      %1700 = vdwg.mxu0
      %v1701 = vsel %vm1473, %v1697, -inf
      %1702 = vmax.xlane.f32.xlu0 %v1701
      %v1703 = vpop.xlane.xlu0 %1702
      %v1704 = vsel %vm1473, %v1699, -inf
      %1705 = vmax.xlane.f32.xlu0 %v1704
      %v1706 = vpop.xlane.xlu0 %1705
      %v1707 = vsub.f32 %v1697, %v1703
      %v1708 = vsub.f32 %v1699, %v1706
      %v1709 = vmul.f32 %v1707, 1.442695
      %v1710 = vpow.pop %v1709
      %v1711 = vmul.f32 %v1708, 1.442695
      %v1712 = vpow.pop %v1711
      %v1713 = vsel %vm1473, %v1710, 0.0
      %1714 = vadd.xlane.f32.xlu0 %v1713
      %v1715 = vpop.xlane.xlu0 %1714
      %v1716 = vsel %vm1473, %v1712, 0.0
      %1717 = vadd.xlane.f32.xlu0 %v1716
      %v1718 = vpop.xlane.xlu0 %1717
      %v1719 = vrcp.pop %v1715
      %v1720 = vrcp.pop %v1718
      %v1721 = vmul.f32 %v1710, %v1719
      %v1722 = vmul.f32 %v1712, %v1720
      %v1723 = vpack.c.bf16 %v1722, %v1721
      %v1724 = vpack.c.bf16 %v1677, %v1675
      %v1726 = vsel %vm1473, %v1723, 0
      %1728 = vmatpush.bf16.msra.mxu0 0
      %1729 = vmatpush.bf16.msra.mxu0 0
      %1730 = vmatpush.bf16.msra.mxu0 0
      %1731 = vmatpush.bf16.msra.mxu0 0
      %1732 = vmatpush.bf16.msra.mxu0 0
      %1733 = vmatpush.bf16.msra.mxu0 0
      %1734 = vmatpush.bf16.msra.mxu0 0
      %1735 = vmatpush.bf16.msra.mxu0 %v1724
      %1736 = vmatmul.bf16.gmra.mxu0 %v1726
      %v1737 = vpop.f32.mrf.mxu0
      %v1738 = vadd.f32 0.0, %v1737
      %v1739 = vpop.f32.mrf.mxu0
      %v1740 = vadd.f32 0.0, %v1739
      %1741 = vdwg.mxu0
      %v1742 = vpack.c.bf16 %v1740, %v1738
      %s1743 = scalar_lea.vmem %s19, 8
      %v1744 = vld [vmem:[%s1743] sm:$0xf]
      %v1745 = vld [vmem:[%s1743 + $0x4] sm:$0xf]
      %v1748 = vunpack.c.l.b16 %v1744
      %v1749 = vunpack.c.l.b16 %v1745
      %v1750 = vpack.c.b16 %v1749, %v1748
      %v1753 = vsel %vm1473, %v1742, 0
      %1755 = vmatpush.bf16.msra.mxu0 0
      %1756 = vmatpush.bf16.msra.mxu0 0
      %1757 = vmatpush.bf16.msra.mxu0 0
      %1758 = vmatpush.bf16.msra.mxu0 0
      %1759 = vmatpush.bf16.msra.mxu0 0
      %1760 = vmatpush.bf16.msra.mxu0 0
      %1761 = vmatpush.bf16.msra.mxu0 0
      %1762 = vmatpush.bf16.msra.mxu0 %v1750
      %1763 = vmatmul.bf16.gmra.mxu0 %v1753
      %v1764 = vpop.f32.mrf.mxu0
      %v1765 = vadd.f32 0.0, %v1764
      %v1766 = vpop.f32.mrf.mxu0
      %v1767 = vadd.f32 0.0, %v1766
      %1768 = vdwg.mxu0
      %v1771 = vunpack.c.l.b16 %v1536
      %v1772 = vunpack.c.l.b16 %v1537
      %v1773 = vpack.c.b16 %v1772, %v1771
      %v1776 = vsel %vm1473, %v1535, 0
      %1778 = vmatpush.bf16.msra.mxu0 0
      %1779 = vmatpush.bf16.msra.mxu0 0
      %1780 = vmatpush.bf16.msra.mxu0 0
      %1781 = vmatpush.bf16.msra.mxu0 0
      %1782 = vmatpush.bf16.msra.mxu0 0
      %1783 = vmatpush.bf16.msra.mxu0 0
      %1784 = vmatpush.bf16.msra.mxu0 0
      %1785 = vmatpush.bf16.msra.mxu0 %v1773
      %1786 = vmatmul.bf16.gmra.mxu0 %v1776
      %v1787 = vpop.f32.mrf.mxu0
      %v1788 = vadd.f32 %v1765, %v1787
      %v1789 = vpop.f32.mrf.mxu0
      %v1790 = vadd.f32 %v1767, %v1789
      %1791 = vdwg.mxu0
      %s1792 = scalar_lea.vmem %s16, 64
      %v1793 = vld [vmem:[%s1792] sm:$0xf]
      %v1794 = vld [vmem:[%s1792 + $0x4] sm:$0xf]
      %v1795 = vld [vmem:[%s1792 + $0x8] sm:$0xf]
      %v1796 = vld [vmem:[%s1792 + $0xc] sm:$0xf]
      %v1797 = vld [vmem:[%s1792 + $0x10] sm:$0xf]
      %v1798 = vld [vmem:[%s1792 + $0x14] sm:$0xf]
      %v1799 = vld [vmem:[%s1792 + $0x18] sm:$0xf]
      %v1800 = vld [vmem:[%s1792 + $0x1c] sm:$0xf]
      %v1809 = vunpack.c.l.b16 %v1793
      %v1810 = vunpack.c.l.b16 %v1794
      %v1811 = vunpack.c.l.b16 %v1795
      %v1812 = vunpack.c.l.b16 %v1796
      %v1813 = vunpack.c.l.b16 %v1797
      %v1814 = vunpack.c.l.b16 %v1798
      %v1815 = vunpack.c.l.b16 %v1799
      %v1816 = vunpack.c.l.b16 %v1800
      %v1817 = vpack.c.b16 %v1810, %v1809
      %v1818 = vpack.c.b16 %v1812, %v1811
      %v1819 = vpack.c.b16 %v1814, %v1813
      %v1820 = vpack.c.b16 %v1816, %v1815
      %1825 = vmatpush.bf16.msra.mxu0 0
      %1826 = vmatpush.bf16.msra.mxu0 0
      %1827 = vmatpush.bf16.msra.mxu0 0
      %1828 = vmatpush.bf16.msra.mxu0 0
      %1829 = vmatpush.bf16.msra.mxu0 %v1820
      %1830 = vmatpush.bf16.msra.mxu0 %v1819
      %1831 = vmatpush.bf16.msra.mxu0 %v1818
      %1832 = vmatpush.bf16.msra.mxu0 %v1817
      %1833 = vmatmul.bf16.gmra.mxu0 %v1355
      %v1834 = vpop.f32.mrf.mxu0
      %v1835 = vadd.f32 0.0, %v1834
      %v1836 = vpop.f32.mrf.mxu0
      %v1837 = vadd.f32 0.0, %v1836
      %1838 = vdwg.mxu0
      %s1839 = scalar_lea.vmem %s17, 64
      %v1840 = vld [vmem:[%s1839] sm:$0xf]
      %v1841 = vld [vmem:[%s1839 + $0x4] sm:$0xf]
      %v1842 = vld [vmem:[%s1839 + $0x8] sm:$0xf]
      %v1843 = vld [vmem:[%s1839 + $0xc] sm:$0xf]
      %v1844 = vld [vmem:[%s1839 + $0x10] sm:$0xf]
      %v1845 = vld [vmem:[%s1839 + $0x14] sm:$0xf]
      %v1846 = vld [vmem:[%s1839 + $0x18] sm:$0xf]
      %v1847 = vld [vmem:[%s1839 + $0x1c] sm:$0xf]
      %v1856 = vunpack.c.l.b16 %v1840
      %v1857 = vunpack.c.l.b16 %v1841
      %v1858 = vunpack.c.l.b16 %v1842
      %v1859 = vunpack.c.l.b16 %v1843
      %v1860 = vunpack.c.l.b16 %v1844
      %v1861 = vunpack.c.l.b16 %v1845
      %v1862 = vunpack.c.l.b16 %v1846
      %v1863 = vunpack.c.l.b16 %v1847
      %v1864 = vpack.c.b16 %v1857, %v1856
      %v1865 = vpack.c.b16 %v1859, %v1858
      %v1866 = vpack.c.b16 %v1861, %v1860
      %v1867 = vpack.c.b16 %v1863, %v1862
      %1872 = vmatpush.bf16.msra.mxu0 0
      %1873 = vmatpush.bf16.msra.mxu0 0
      %1874 = vmatpush.bf16.msra.mxu0 0
      %1875 = vmatpush.bf16.msra.mxu0 0
      %1876 = vmatpush.bf16.msra.mxu0 %v1867
      %1877 = vmatpush.bf16.msra.mxu0 %v1866
      %1878 = vmatpush.bf16.msra.mxu0 %v1865
      %1879 = vmatpush.bf16.msra.mxu0 %v1864
      %1880 = vmatmul.bf16.gmra.mxu0 %v1409
      %v1881 = vpop.f32.mrf.mxu0
      %v1882 = vadd.f32 0.0, %v1881
      %v1883 = vpop.f32.mrf.mxu0
      %v1884 = vadd.f32 0.0, %v1883
      %1885 = vdwg.mxu0
      %s1886 = scalar_lea.vmem %s18, 64
      %v1887 = vld [vmem:[%s1886] sm:$0xf]
      %v1888 = vld [vmem:[%s1886 + $0x4] sm:$0xf]
      %v1889 = vld [vmem:[%s1886 + $0x8] sm:$0xf]
      %v1890 = vld [vmem:[%s1886 + $0xc] sm:$0xf]
      %v1891 = vld [vmem:[%s1886 + $0x10] sm:$0xf]
      %v1892 = vld [vmem:[%s1886 + $0x14] sm:$0xf]
      %v1893 = vld [vmem:[%s1886 + $0x18] sm:$0xf]
      %v1894 = vld [vmem:[%s1886 + $0x1c] sm:$0xf]
      %v1903 = vunpack.c.l.b16 %v1887
      %v1904 = vunpack.c.l.b16 %v1888
      %v1905 = vunpack.c.l.b16 %v1889
      %v1906 = vunpack.c.l.b16 %v1890
      %v1907 = vunpack.c.l.b16 %v1891
      %v1908 = vunpack.c.l.b16 %v1892
      %v1909 = vunpack.c.l.b16 %v1893
      %v1910 = vunpack.c.l.b16 %v1894
      %v1911 = vpack.c.b16 %v1904, %v1903
      %v1912 = vpack.c.b16 %v1906, %v1905
      %v1913 = vpack.c.b16 %v1908, %v1907
      %v1914 = vpack.c.b16 %v1910, %v1909
      %1919 = vmatpush.bf16.msra.mxu0 0
      %1920 = vmatpush.bf16.msra.mxu0 0
      %1921 = vmatpush.bf16.msra.mxu0 0
      %1922 = vmatpush.bf16.msra.mxu0 0
      %1923 = vmatpush.bf16.msra.mxu0 %v1914
      %1924 = vmatpush.bf16.msra.mxu0 %v1913
      %1925 = vmatpush.bf16.msra.mxu0 %v1912
      %1926 = vmatpush.bf16.msra.mxu0 %v1911
      %1927 = vmatmul.bf16.gmra.mxu0 %v1409
      %v1928 = vpop.f32.mrf.mxu0
      %v1929 = vadd.f32 0.0, %v1928
      %v1930 = vpop.f32.mrf.mxu0
      %v1931 = vadd.f32 0.0, %v1930
      %1932 = vdwg.mxu0
      %v1933 = vpack.c.bf16 %v1837, %v1835
      %v1934 = vpack.c.bf16 %v1884, %v1882
      %v1936 = vsel %vm1473, %v1933, 0
      %v1939 = vsel %vm1473, %v1934, 0
      %1941 = vmatpush.bf16.xpose.msra.mxu0 0
      %1942 = vmatpush.bf16.xpose.msra.mxu0 0
      %1943 = vmatpush.bf16.xpose.msra.mxu0 0
      %1944 = vmatpush.bf16.xpose.msra.mxu0 0
      %1945 = vmatpush.bf16.xpose.msra.mxu0 0
      %1946 = vmatpush.bf16.xpose.msra.mxu0 0
      %1947 = vmatpush.bf16.xpose.msra.mxu0 0
      %1948 = vmatpush.bf16.xpose.msra.mxu0 %v1939
      %1949 = vmatmul.bf16.gmra.mxu0 %v1936
      %v1950 = vpop.f32.mrf.mxu0
      %v1951 = vadd.f32 0.0, %v1950
      %v1952 = vpop.f32.mrf.mxu0
      %v1953 = vadd.f32 0.0, %v1952
      %1954 = vdwg.mxu0
      %v1955 = vsel %vm1473, %v1951, -inf
      %1956 = vmax.xlane.f32.xlu0 %v1955
      %v1957 = vpop.xlane.xlu0 %1956
      %v1958 = vsel %vm1473, %v1953, -inf
      %1959 = vmax.xlane.f32.xlu0 %v1958
      %v1960 = vpop.xlane.xlu0 %1959
      %v1961 = vsub.f32 %v1951, %v1957
      %v1962 = vsub.f32 %v1953, %v1960
      %v1963 = vmul.f32 %v1961, 1.442695
      %v1964 = vpow.pop %v1963
      %v1965 = vmul.f32 %v1962, 1.442695
      %v1966 = vpow.pop %v1965
      %v1967 = vsel %vm1473, %v1964, 0.0
      %1968 = vadd.xlane.f32.xlu0 %v1967
      %v1969 = vpop.xlane.xlu0 %1968
      %v1970 = vsel %vm1473, %v1966, 0.0
      %1971 = vadd.xlane.f32.xlu0 %v1970
      %v1972 = vpop.xlane.xlu0 %1971
      %v1973 = vrcp.pop %v1969
      %v1974 = vrcp.pop %v1972
      %v1975 = vmul.f32 %v1964, %v1973
      %v1976 = vmul.f32 %v1966, %v1974
      %v1977 = vpack.c.bf16 %v1976, %v1975
      %v1978 = vpack.c.bf16 %v1931, %v1929
      %v1980 = vsel %vm1473, %v1977, 0
      %1982 = vmatpush.bf16.msra.mxu0 0
      %1983 = vmatpush.bf16.msra.mxu0 0
      %1984 = vmatpush.bf16.msra.mxu0 0
      %1985 = vmatpush.bf16.msra.mxu0 0
      %1986 = vmatpush.bf16.msra.mxu0 0
      %1987 = vmatpush.bf16.msra.mxu0 0
      %1988 = vmatpush.bf16.msra.mxu0 0
      %1989 = vmatpush.bf16.msra.mxu0 %v1978
      %1990 = vmatmul.bf16.gmra.mxu0 %v1980
      %v1991 = vpop.f32.mrf.mxu0
      %v1992 = vadd.f32 0.0, %v1991
      %v1993 = vpop.f32.mrf.mxu0
      %v1994 = vadd.f32 0.0, %v1993
      %1995 = vdwg.mxu0
      %v1996 = vpack.c.bf16 %v1994, %v1992
      %s1997 = scalar_lea.vmem %s19, 16
      %v1998 = vld [vmem:[%s1997] sm:$0xf]
      %v1999 = vld [vmem:[%s1997 + $0x4] sm:$0xf]
      %v2002 = vunpack.c.l.b16 %v1998
      %v2003 = vunpack.c.l.b16 %v1999
      %v2004 = vpack.c.b16 %v2003, %v2002
      %v2007 = vsel %vm1473, %v1996, 0
      %2009 = vmatpush.bf16.msra.mxu0 0
      %2010 = vmatpush.bf16.msra.mxu0 0
      %2011 = vmatpush.bf16.msra.mxu0 0
      %2012 = vmatpush.bf16.msra.mxu0 0
      %2013 = vmatpush.bf16.msra.mxu0 0
      %2014 = vmatpush.bf16.msra.mxu0 0
      %2015 = vmatpush.bf16.msra.mxu0 0
      %2016 = vmatpush.bf16.msra.mxu0 %v2004
      %2017 = vmatmul.bf16.gmra.mxu0 %v2007
      %v2018 = vpop.f32.mrf.mxu0
      %v2019 = vadd.f32 0.0, %v2018
      %v2020 = vpop.f32.mrf.mxu0
      %v2021 = vadd.f32 0.0, %v2020
      %2022 = vdwg.mxu0
      %v2023 = vadd.f32 %v1788, %v2019
      %v2024 = vadd.f32 %v1790, %v2021
      %s2025 = scalar_lea.vmem %s16, 96
      %v2026 = vld [vmem:[%s2025] sm:$0xf]
      %v2027 = vld [vmem:[%s2025 + $0x4] sm:$0xf]
      %v2028 = vld [vmem:[%s2025 + $0x8] sm:$0xf]
      %v2029 = vld [vmem:[%s2025 + $0xc] sm:$0xf]
      %v2030 = vld [vmem:[%s2025 + $0x10] sm:$0xf]
      %v2031 = vld [vmem:[%s2025 + $0x14] sm:$0xf]
      %v2032 = vld [vmem:[%s2025 + $0x18] sm:$0xf]
      %v2033 = vld [vmem:[%s2025 + $0x1c] sm:$0xf]
      %v2042 = vunpack.c.l.b16 %v2026
      %v2043 = vunpack.c.l.b16 %v2027
      %v2044 = vunpack.c.l.b16 %v2028
      %v2045 = vunpack.c.l.b16 %v2029
      %v2046 = vunpack.c.l.b16 %v2030
      %v2047 = vunpack.c.l.b16 %v2031
      %v2048 = vunpack.c.l.b16 %v2032
      %v2049 = vunpack.c.l.b16 %v2033
      %v2050 = vpack.c.b16 %v2043, %v2042
      %v2051 = vpack.c.b16 %v2045, %v2044
      %v2052 = vpack.c.b16 %v2047, %v2046
      %v2053 = vpack.c.b16 %v2049, %v2048
      %2058 = vmatpush.bf16.msra.mxu0 0
      %2059 = vmatpush.bf16.msra.mxu0 0
      %2060 = vmatpush.bf16.msra.mxu0 0
      %2061 = vmatpush.bf16.msra.mxu0 0
      %2062 = vmatpush.bf16.msra.mxu0 %v2053
      %2063 = vmatpush.bf16.msra.mxu0 %v2052
      %2064 = vmatpush.bf16.msra.mxu0 %v2051
      %2065 = vmatpush.bf16.msra.mxu0 %v2050
      %2066 = vmatmul.bf16.gmra.mxu0 %v1355
      %v2067 = vpop.f32.mrf.mxu0
      %v2068 = vadd.f32 0.0, %v2067
      %v2069 = vpop.f32.mrf.mxu0
      %v2070 = vadd.f32 0.0, %v2069
      %2071 = vdwg.mxu0
      %s2072 = scalar_lea.vmem %s17, 96
      %v2073 = vld [vmem:[%s2072] sm:$0xf]
      %v2074 = vld [vmem:[%s2072 + $0x4] sm:$0xf]
      %v2075 = vld [vmem:[%s2072 + $0x8] sm:$0xf]
      %v2076 = vld [vmem:[%s2072 + $0xc] sm:$0xf]
      %v2077 = vld [vmem:[%s2072 + $0x10] sm:$0xf]
      %v2078 = vld [vmem:[%s2072 + $0x14] sm:$0xf]
      %v2079 = vld [vmem:[%s2072 + $0x18] sm:$0xf]
      %v2080 = vld [vmem:[%s2072 + $0x1c] sm:$0xf]
      %v2089 = vunpack.c.l.b16 %v2073
      %v2090 = vunpack.c.l.b16 %v2074
      %v2091 = vunpack.c.l.b16 %v2075
      %v2092 = vunpack.c.l.b16 %v2076
      %v2093 = vunpack.c.l.b16 %v2077
      %v2094 = vunpack.c.l.b16 %v2078
      %v2095 = vunpack.c.l.b16 %v2079
      %v2096 = vunpack.c.l.b16 %v2080
      %v2097 = vpack.c.b16 %v2090, %v2089
      %v2098 = vpack.c.b16 %v2092, %v2091
      %v2099 = vpack.c.b16 %v2094, %v2093
      %v2100 = vpack.c.b16 %v2096, %v2095
      %2105 = vmatpush.bf16.msra.mxu0 0
      %2106 = vmatpush.bf16.msra.mxu0 0
      %2107 = vmatpush.bf16.msra.mxu0 0
      %2108 = vmatpush.bf16.msra.mxu0 0
      %2109 = vmatpush.bf16.msra.mxu0 %v2100
      %2110 = vmatpush.bf16.msra.mxu0 %v2099
      %2111 = vmatpush.bf16.msra.mxu0 %v2098
      %2112 = vmatpush.bf16.msra.mxu0 %v2097
      %2113 = vmatmul.bf16.gmra.mxu0 %v1409
      %v2114 = vpop.f32.mrf.mxu0
      %v2115 = vadd.f32 0.0, %v2114
      %v2116 = vpop.f32.mrf.mxu0
      %v2117 = vadd.f32 0.0, %v2116
      %2118 = vdwg.mxu0
      %s2119 = scalar_lea.vmem %s18, 96
      %v2120 = vld [vmem:[%s2119] sm:$0xf]
      %v2121 = vld [vmem:[%s2119 + $0x4] sm:$0xf]
      %v2122 = vld [vmem:[%s2119 + $0x8] sm:$0xf]
      %v2123 = vld [vmem:[%s2119 + $0xc] sm:$0xf]
      %v2124 = vld [vmem:[%s2119 + $0x10] sm:$0xf]
      %v2125 = vld [vmem:[%s2119 + $0x14] sm:$0xf]
      %v2126 = vld [vmem:[%s2119 + $0x18] sm:$0xf]
      %v2127 = vld [vmem:[%s2119 + $0x1c] sm:$0xf]
      %v2136 = vunpack.c.l.b16 %v2120
      %v2137 = vunpack.c.l.b16 %v2121
      %v2138 = vunpack.c.l.b16 %v2122
      %v2139 = vunpack.c.l.b16 %v2123
      %v2140 = vunpack.c.l.b16 %v2124
      %v2141 = vunpack.c.l.b16 %v2125
      %v2142 = vunpack.c.l.b16 %v2126
      %v2143 = vunpack.c.l.b16 %v2127
      %v2144 = vpack.c.b16 %v2137, %v2136
      %v2145 = vpack.c.b16 %v2139, %v2138
      %v2146 = vpack.c.b16 %v2141, %v2140
      %v2147 = vpack.c.b16 %v2143, %v2142
      %2152 = vmatpush.bf16.msra.mxu0 0
      %2153 = vmatpush.bf16.msra.mxu0 0
      %2154 = vmatpush.bf16.msra.mxu0 0
      %2155 = vmatpush.bf16.msra.mxu0 0
      %2156 = vmatpush.bf16.msra.mxu0 %v2147
      %2157 = vmatpush.bf16.msra.mxu0 %v2146
      %2158 = vmatpush.bf16.msra.mxu0 %v2145
      %2159 = vmatpush.bf16.msra.mxu0 %v2144
      %2160 = vmatmul.bf16.gmra.mxu0 %v1409
      %v2161 = vpop.f32.mrf.mxu0
      %v2162 = vadd.f32 0.0, %v2161
      %v2163 = vpop.f32.mrf.mxu0
      %v2164 = vadd.f32 0.0, %v2163
      %2165 = vdwg.mxu0
      %v2166 = vpack.c.bf16 %v2070, %v2068
      %v2167 = vpack.c.bf16 %v2117, %v2115
      %v2169 = vsel %vm1473, %v2166, 0
      %v2172 = vsel %vm1473, %v2167, 0
      %2174 = vmatpush.bf16.xpose.msra.mxu0 0
      %2175 = vmatpush.bf16.xpose.msra.mxu0 0
      %2176 = vmatpush.bf16.xpose.msra.mxu0 0
      %2177 = vmatpush.bf16.xpose.msra.mxu0 0
      %2178 = vmatpush.bf16.xpose.msra.mxu0 0
      %2179 = vmatpush.bf16.xpose.msra.mxu0 0
      %2180 = vmatpush.bf16.xpose.msra.mxu0 0
      %2181 = vmatpush.bf16.xpose.msra.mxu0 %v2172
      %2182 = vmatmul.bf16.gmra.mxu0 %v2169
      %v2183 = vpop.f32.mrf.mxu0
      %v2184 = vadd.f32 0.0, %v2183
      %v2185 = vpop.f32.mrf.mxu0
      %v2186 = vadd.f32 0.0, %v2185
      %2187 = vdwg.mxu0
      %v2188 = vsel %vm1473, %v2184, -inf
      %2189 = vmax.xlane.f32.xlu0 %v2188
      %v2190 = vpop.xlane.xlu0 %2189
      %v2191 = vsel %vm1473, %v2186, -inf
      %2192 = vmax.xlane.f32.xlu0 %v2191
      %v2193 = vpop.xlane.xlu0 %2192
      %v2194 = vsub.f32 %v2184, %v2190
      %v2195 = vsub.f32 %v2186, %v2193
      %v2196 = vmul.f32 %v2194, 1.442695
      %v2197 = vpow.pop %v2196
      %v2198 = vmul.f32 %v2195, 1.442695
      %v2199 = vpow.pop %v2198
      %v2200 = vsel %vm1473, %v2197, 0.0
      %2201 = vadd.xlane.f32.xlu0 %v2200
      %v2202 = vpop.xlane.xlu0 %2201
      %v2203 = vsel %vm1473, %v2199, 0.0
      %2204 = vadd.xlane.f32.xlu0 %v2203
      %v2205 = vpop.xlane.xlu0 %2204
      %v2206 = vrcp.pop %v2202
      %v2207 = vrcp.pop %v2205
      %v2208 = vmul.f32 %v2197, %v2206
      %v2209 = vmul.f32 %v2199, %v2207
      %v2210 = vpack.c.bf16 %v2209, %v2208
      %v2211 = vpack.c.bf16 %v2164, %v2162
      %v2213 = vsel %vm1473, %v2210, 0
      %2215 = vmatpush.bf16.msra.mxu0 0
      %2216 = vmatpush.bf16.msra.mxu0 0
      %2217 = vmatpush.bf16.msra.mxu0 0
      %2218 = vmatpush.bf16.msra.mxu0 0
      %2219 = vmatpush.bf16.msra.mxu0 0
      %2220 = vmatpush.bf16.msra.mxu0 0
      %2221 = vmatpush.bf16.msra.mxu0 0
      %2222 = vmatpush.bf16.msra.mxu0 %v2211
      %2223 = vmatmul.bf16.gmra.mxu0 %v2213
      %v2224 = vpop.f32.mrf.mxu0
      %v2225 = vadd.f32 0.0, %v2224
      %v2226 = vpop.f32.mrf.mxu0
      %v2227 = vadd.f32 0.0, %v2226
      %2228 = vdwg.mxu0
      %v2229 = vpack.c.bf16 %v2227, %v2225
      %s2230 = scalar_lea.vmem %s19, 24
      %v2231 = vld [vmem:[%s2230] sm:$0xf]
      %v2232 = vld [vmem:[%s2230 + $0x4] sm:$0xf]
      %v2235 = vunpack.c.l.b16 %v2231
      %v2236 = vunpack.c.l.b16 %v2232
      %v2237 = vpack.c.b16 %v2236, %v2235
      %v2240 = vsel %vm1473, %v2229, 0
      %2242 = vmatpush.bf16.msra.mxu0 0
      %2243 = vmatpush.bf16.msra.mxu0 0
      %2244 = vmatpush.bf16.msra.mxu0 0
      %2245 = vmatpush.bf16.msra.mxu0 0
      %2246 = vmatpush.bf16.msra.mxu0 0
      %2247 = vmatpush.bf16.msra.mxu0 0
      %2248 = vmatpush.bf16.msra.mxu0 0
      %2249 = vmatpush.bf16.msra.mxu0 %v2237
      %2250 = vmatmul.bf16.gmra.mxu0 %v2240
      %v2251 = vpop.f32.mrf.mxu0
      %v2252 = vadd.f32 0.0, %v2251
      %v2253 = vpop.f32.mrf.mxu0
      %v2254 = vadd.f32 0.0, %v2253
      %2255 = vdwg.mxu0
      %v2256 = vadd.f32 %v2023, %v2252
      %v2257 = vadd.f32 %v2024, %v2254
      %v2258 = vadd.f32 %v1319, %v2256
      %v2259 = vadd.f32 %v1320, %v2257
      %2261 = vrot.lane.b32.xlu0 %v2259, 64
      %v2262 = vpop.permute.xlu0 %2261
      %v2264 = vsel %vm691, %v2258, %v2262
      %v2265 = vpack.c.bf16 %v2264, %v2264
      %2266 = vst [vmem:[%s644] sm:$0xf] %v2265
      %p2267 = scmp.lt.s32.totalorder %s31, 1
      %s2268 = scalar_select %p2267, %s31, 1
      %s2269 = smul.addr %s2268, 4
      %s2270 = scalar_lea.vmem %s20, %s2269
      // Predicated region
      $region101: #{decoder_forward.2} parent=99 // pred_check
        %p2271 = pneg %p479
      $region102: #{decoder_forward.2} parent=99 // pred_check_branch
        %2273 = sbr.rel (%p2271) target = $region104
      $region103: #{decoder_forward.2} parent=99 // pred_region
        _
      $region104: #{decoder_forward.2} parent=99 // pred_fallthru
        _
    $region100: #{decoder_forward.2} parent=5 // pred_fallthru
      _
    %p2274 = scmp.le.s32.totalorder 2, %s26
    // Predicated region
    $region105: #{decoder_forward.2} parent=5 // pred_check
      %p2275 = pneg %p2274
    $region106: #{decoder_forward.2} parent=5 // pred_check_branch
      %2277 = sbr.rel (%p2275) target = $region108
    $region107: #{decoder_forward.2} parent=5 // pred_region
      %s2278 = ssub.s32 %s26, 2
      // Predicated region
      $region109: #{decoder_forward.2} parent=107 // pred_check
        %p2279 = pneg %p485
      $region110: #{decoder_forward.2} parent=107 // pred_check_branch
        %2281 = sbr.rel (%p2279) target = $region112
      $region111: #{decoder_forward.2} parent=107 // pred_region
        %p2282 = scmp.lt.s32.totalorder %s32, 1
        %s2283 = scalar_select %p2282, %s32, 1
        %s2284 = smul.addr %s2283, 4
        %s2285 = scalar_lea.vmem %s20, %s2284
      $region112: #{decoder_forward.2} parent=107 // pred_fallthru
        _
    $region108: #{decoder_forward.2} parent=5 // pred_fallthru
      _
  $region6: #{decoder_forward.2} parent=0 // loop_footer
    %s30 = sadd.s32 1, %s26
  $region7: #{decoder_forward.2} parent=0 // loop_footer_branch
    %25 = sbr.rel target = $region3
  $region8: #{decoder_forward.2} parent=0 // loop_exit
    _

// kernel: decoder_forward.3
$region0: #{decoder_forward.3}
  #allocation0 [shape = 'u32[]', space=smem, size = 0x4, offset = 0x4, fixed_abs, tag = 'smem constant byte address 0x4 - core index']
  #allocation1 [shape = 'u32[72,128]{1,0:T(1,128)}', space=vmem, size = 0x9000, scoped, tag = 'internal scratch']
  %s0 = inlined_call_operand.vmem [shape: bf16[2,16,64], index: 0, kind: input, shape index: {}]
  %s1 = inlined_call_operand.vmem [shape: bf16[2,32,64], index: 1, kind: input, shape index: {}]
  %s2 = inlined_call_operand.vmem [shape: bf16[64,64], index: 2, kind: input, shape index: {}]
  %s3 = inlined_call_operand.vmem [shape: bf16[128,64], index: 3, kind: input, shape index: {}]
  %s4 = inlined_call_operand.vmem [shape: f32[1,64], index: 4, kind: input, shape index: {}]
  %s5 = inlined_call_operand.vmem [shape: bf16[192,64], index: 5, kind: input, shape index: {}]
  %s6 = inlined_call_operand.vmem [shape: f32[1,64], index: 6, kind: input, shape index: {}]
  %s7 = inlined_call_operand.vmem [shape: f32[1,64], index: 7, kind: input, shape index: {}]
  %s8 = inlined_call_operand.vmem [shape: bf16[192,64], index: 8, kind: input, shape index: {}]
  %s9 = inlined_call_operand.vmem [shape: f32[1,64], index: 9, kind: input, shape index: {}]
  %s10 = inlined_call_operand.vmem [shape: f32[1,64], index: 10, kind: input, shape index: {}]
  %s11 = inlined_call_operand.vmem [shape: bf16[192,64], index: 11, kind: input, shape index: {}]
  %s12 = inlined_call_operand.vmem [shape: f32[1,64], index: 12, kind: input, shape index: {}]
  %s13 = inlined_call_operand.vmem [shape: f32[1,64], index: 13, kind: input, shape index: {}]
  %s14 = inlined_call_operand.vmem [shape: f32[1,64], index: 14, kind: input, shape index: {}]
  %s15 = inlined_call_operand.vmem [shape: f32[1,64], index: 15, kind: input, shape index: {}]
  %s16 = inlined_call_operand.vmem [shape: bf16[4,64,16], index: 16, kind: input, shape index: {}]
  %s17 = inlined_call_operand.vmem [shape: bf16[4,64,16], index: 17, kind: input, shape index: {}]
  %s18 = inlined_call_operand.vmem [shape: bf16[4,64,16], index: 18, kind: input, shape index: {}]
  %s19 = inlined_call_operand.vmem [shape: bf16[4,16,64], index: 19, kind: input, shape index: {}]
  %s20 = inlined_call_operand.vmem [shape: bf16[2,16,128], index: 20, kind: output, shape index: {}]
  %s21 = sld [smem:[#allocation0]]
  $region113: #{decoder_forward.3} parent=0
    _
  %s23 = ssub.s32 1, %s21
  %s24 = scalar_select 0, %s23, %s21
  loop: start=0, step=1, limit=4
  $region2: #{decoder_forward.3} parent=0 // loop_pre_header
    _
  $region3: #{decoder_forward.3} parent=0 // loop_header
    %s26 = sphi 0, %s30
    %p27 = scmp.ge.s32.totalorder %s26, 4
    %s36 = sphi 0, %s38
    %s39 = sphi 0, %s36
    %s40 = sphi 0, %s39
    %s56 = sphi 0, %s40
    %s62 = sphi 0, %s64
    %s65 = sphi 0, %s62
    %s66 = sphi 0, %s65
    %s82 = sphi 0, %s66
    %s86 = sphi 0, %s86
    %s88 = sphi 0, %s86
    %s89 = sphi 0, %s88
    %s103 = sphi 0, %s89
    %s107 = sphi 0, %s107
    %s109 = sphi 0, %s107
    %s110 = sphi 0, %s109
    %s124 = sphi 0, %s110
    %s128 = sphi 0, %s128
    %s130 = sphi 0, %s128
    %s131 = sphi 0, %s130
    %s145 = sphi 0, %s131
    %s149 = sphi 0, %s149
    %s151 = sphi 0, %s149
    %s152 = sphi 0, %s151
    %s166 = sphi 0, %s152
    %s170 = sphi 0, %s170
    %s172 = sphi 0, %s170
    %s173 = sphi 0, %s172
    %s187 = sphi 0, %s173
    %s191 = sphi 0, %s191
    %s193 = sphi 0, %s191
    %s194 = sphi 0, %s193
    %s208 = sphi 0, %s194
    %s212 = sphi 0, %s212
    %s214 = sphi 0, %s212
    %s215 = sphi 0, %s214
    %s229 = sphi 0, %s215
    %s233 = sphi 0, %s233
    %s235 = sphi 0, %s233
    %s236 = sphi 0, %s235
    %s250 = sphi 0, %s236
    %s254 = sphi 0, %s254
    %s256 = sphi 0, %s254
    %s257 = sphi 0, %s256
    %s271 = sphi 0, %s257
    %s275 = sphi 0, %s275
    %s277 = sphi 0, %s275
    %s278 = sphi 0, %s277
    %s292 = sphi 0, %s278
    %s296 = sphi 0, %s296
    %s298 = sphi 0, %s296
    %s299 = sphi 0, %s298
    %s313 = sphi 0, %s299
    %s317 = sphi 0, %s317
    %s319 = sphi 0, %s317
    %s320 = sphi 0, %s319
    %s334 = sphi 0, %s320
    %s338 = sphi 0, %s338
    %s340 = sphi 0, %s338
    %s341 = sphi 0, %s340
    %s355 = sphi 0, %s341
    %s359 = sphi 0, %s359
    %s361 = sphi 0, %s359
    %s362 = sphi 0, %s361
    %s376 = sphi 0, %s362
    %s380 = sphi 0, %s380
    %s382 = sphi 0, %s380
    %s383 = sphi 0, %s382
    %s397 = sphi 0, %s383
    %s401 = sphi 0, %s401
    %s403 = sphi 0, %s401
    %s404 = sphi 0, %s403
    %s418 = sphi 0, %s404
    %s422 = sphi 0, %s422
    %s424 = sphi 0, %s422
    %s425 = sphi 0, %s424
    %s439 = sphi 0, %s425
    %s443 = sphi 0, %s443
    %s445 = sphi 0, %s443
    %s446 = sphi 0, %s445
    %s460 = sphi 0, %s446
    %s466 = sphi 0, %s468
    %s469 = sphi 0, %s466
    %s470 = sphi 0, %s469
    %s486 = sphi 0, %s470
  $region4: #{decoder_forward.3} parent=0 // loop_header_branch
    %29 = sbr.rel (%p27) target = $region8
  $region5: #{decoder_forward.3} parent=0 // loop_body
    %s31 = ssub.s32 %s26, 1
    %s32 = ssub.s32 %s26, 2
    %s33 = sadd.s32 %s26, 1
    %s34 = ssub.s32 %s26, %s33
    %p35 = scmp.eq.s32.totalorder %s34, 0
    %s37 = sadd.s32 %s36, 1
    %s38 = scalar_select %p35, %s36, %s37
    %p41 = pneg %p35
    %p42 = scmp.eq.s32.totalorder %s26, 1
    %p43 = por %p41, %p42
    %p44 = scmp.ne.s32.totalorder %s36, %s39
    %p45 = scmp.eq.s32.totalorder %s26, 0
    %p46 = por %p44, %p45
    %p47 = scmp.ne.s32.totalorder %s36, %s39
    %p48 = scmp.eq.s32.totalorder %s31, 1
    %p49 = por %p47, %p48
    %p50 = scmp.ne.s32.totalorder %s39, %s40
    %p51 = scmp.eq.s32.totalorder %s31, 0
    %p52 = por %p50, %p51
    %p53 = scmp.ne.s32.totalorder %s39, %s40
    %p54 = scmp.eq.s32.totalorder %s32, 1
    %p55 = por %p53, %p54
    %p57 = scmp.ne.s32.totalorder %s40, %s56
    %p58 = scmp.eq.s32.totalorder %s32, 0
    %p59 = por %p57, %p58
    %s60 = ssub.s32 %s26, %s33
    %p61 = scmp.eq.s32.totalorder %s60, 0
    %s63 = sadd.s32 %s62, 1
    %s64 = scalar_select %p61, %s62, %s63
    %p67 = pneg %p61
    %p68 = scmp.eq.s32.totalorder %s26, 1
    %p69 = por %p67, %p68
    %p70 = scmp.ne.s32.totalorder %s62, %s65
    %p71 = scmp.eq.s32.totalorder %s26, 0
    %p72 = por %p70, %p71
    %p73 = scmp.ne.s32.totalorder %s62, %s65
    %p74 = scmp.eq.s32.totalorder %s31, 1
    %p75 = por %p73, %p74
    %p76 = scmp.ne.s32.totalorder %s65, %s66
    %p77 = scmp.eq.s32.totalorder %s31, 0
    %p78 = por %p76, %p77
    %p79 = scmp.ne.s32.totalorder %s65, %s66
    %p80 = scmp.eq.s32.totalorder %s32, 1
    %p81 = por %p79, %p80
    %p83 = scmp.ne.s32.totalorder %s66, %s82
    %p84 = scmp.eq.s32.totalorder %s32, 0
    %p85 = por %p83, %p84
    %s87 = sadd.s32 %s86, 1
    %p90 = scmp.eq.s32.totalorder %s26, 1
    %p91 = scmp.ne.s32.totalorder %s86, %s88
    %p92 = scmp.eq.s32.totalorder %s26, 0
    %p93 = por %p91, %p92
    %p94 = scmp.ne.s32.totalorder %s86, %s88
    %p95 = scmp.eq.s32.totalorder %s31, 1
    %p96 = por %p94, %p95
    %p97 = scmp.ne.s32.totalorder %s88, %s89
    %p98 = scmp.eq.s32.totalorder %s31, 0
    %p99 = por %p97, %p98
    %p100 = scmp.ne.s32.totalorder %s88, %s89
    %p101 = scmp.eq.s32.totalorder %s32, 1
    %p102 = por %p100, %p101
    %p104 = scmp.ne.s32.totalorder %s89, %s103
    %p105 = scmp.eq.s32.totalorder %s32, 0
    %p106 = por %p104, %p105
    %s108 = sadd.s32 %s107, 1
    %p111 = scmp.eq.s32.totalorder %s26, 1
    %p112 = scmp.ne.s32.totalorder %s107, %s109
    %p113 = scmp.eq.s32.totalorder %s26, 0
    %p114 = por %p112, %p113
    %p115 = scmp.ne.s32.totalorder %s107, %s109
    %p116 = scmp.eq.s32.totalorder %s31, 1
    %p117 = por %p115, %p116
    %p118 = scmp.ne.s32.totalorder %s109, %s110
    %p119 = scmp.eq.s32.totalorder %s31, 0
    %p120 = por %p118, %p119
    %p121 = scmp.ne.s32.totalorder %s109, %s110
    %p122 = scmp.eq.s32.totalorder %s32, 1
    %p123 = por %p121, %p122
    %p125 = scmp.ne.s32.totalorder %s110, %s124
    %p126 = scmp.eq.s32.totalorder %s32, 0
    %p127 = por %p125, %p126
    %s129 = sadd.s32 %s128, 1
    %p132 = scmp.eq.s32.totalorder %s26, 1
    %p133 = scmp.ne.s32.totalorder %s128, %s130
    %p134 = scmp.eq.s32.totalorder %s26, 0
    %p135 = por %p133, %p134
    %p136 = scmp.ne.s32.totalorder %s128, %s130
    %p137 = scmp.eq.s32.totalorder %s31, 1
    %p138 = por %p136, %p137
    %p139 = scmp.ne.s32.totalorder %s130, %s131
    %p140 = scmp.eq.s32.totalorder %s31, 0
    %p141 = por %p139, %p140
    %p142 = scmp.ne.s32.totalorder %s130, %s131
    %p143 = scmp.eq.s32.totalorder %s32, 1
    %p144 = por %p142, %p143
    %p146 = scmp.ne.s32.totalorder %s131, %s145
    %p147 = scmp.eq.s32.totalorder %s32, 0
    %p148 = por %p146, %p147
    %s150 = sadd.s32 %s149, 1
    %p153 = scmp.eq.s32.totalorder %s26, 1
    %p154 = scmp.ne.s32.totalorder %s149, %s151
    %p155 = scmp.eq.s32.totalorder %s26, 0
    %p156 = por %p154, %p155
    %p157 = scmp.ne.s32.totalorder %s149, %s151
    %p158 = scmp.eq.s32.totalorder %s31, 1
    %p159 = por %p157, %p158
    %p160 = scmp.ne.s32.totalorder %s151, %s152
    %p161 = scmp.eq.s32.totalorder %s31, 0
    %p162 = por %p160, %p161
    %p163 = scmp.ne.s32.totalorder %s151, %s152
    %p164 = scmp.eq.s32.totalorder %s32, 1
    %p165 = por %p163, %p164
    %p167 = scmp.ne.s32.totalorder %s152, %s166
    %p168 = scmp.eq.s32.totalorder %s32, 0
    %p169 = por %p167, %p168
    %s171 = sadd.s32 %s170, 1
    %p174 = scmp.eq.s32.totalorder %s26, 1
    %p175 = scmp.ne.s32.totalorder %s170, %s172
    %p176 = scmp.eq.s32.totalorder %s26, 0
    %p177 = por %p175, %p176
    %p178 = scmp.ne.s32.totalorder %s170, %s172
    %p179 = scmp.eq.s32.totalorder %s31, 1
    %p180 = por %p178, %p179
    %p181 = scmp.ne.s32.totalorder %s172, %s173
    %p182 = scmp.eq.s32.totalorder %s31, 0
    %p183 = por %p181, %p182
    %p184 = scmp.ne.s32.totalorder %s172, %s173
    %p185 = scmp.eq.s32.totalorder %s32, 1
    %p186 = por %p184, %p185
    %p188 = scmp.ne.s32.totalorder %s173, %s187
    %p189 = scmp.eq.s32.totalorder %s32, 0
    %p190 = por %p188, %p189
    %s192 = sadd.s32 %s191, 1
    %p195 = scmp.eq.s32.totalorder %s26, 1
    %p196 = scmp.ne.s32.totalorder %s191, %s193
    %p197 = scmp.eq.s32.totalorder %s26, 0
    %p198 = por %p196, %p197
    %p199 = scmp.ne.s32.totalorder %s191, %s193
    %p200 = scmp.eq.s32.totalorder %s31, 1
    %p201 = por %p199, %p200
    %p202 = scmp.ne.s32.totalorder %s193, %s194
    %p203 = scmp.eq.s32.totalorder %s31, 0
    %p204 = por %p202, %p203
    %p205 = scmp.ne.s32.totalorder %s193, %s194
    %p206 = scmp.eq.s32.totalorder %s32, 1
    %p207 = por %p205, %p206
    %p209 = scmp.ne.s32.totalorder %s194, %s208
    %p210 = scmp.eq.s32.totalorder %s32, 0
    %p211 = por %p209, %p210
    %s213 = sadd.s32 %s212, 1
    %p216 = scmp.eq.s32.totalorder %s26, 1
    %p217 = scmp.ne.s32.totalorder %s212, %s214
    %p218 = scmp.eq.s32.totalorder %s26, 0
    %p219 = por %p217, %p218
    %p220 = scmp.ne.s32.totalorder %s212, %s214
    %p221 = scmp.eq.s32.totalorder %s31, 1
    %p222 = por %p220, %p221
    %p223 = scmp.ne.s32.totalorder %s214, %s215
    %p224 = scmp.eq.s32.totalorder %s31, 0
    %p225 = por %p223, %p224
    %p226 = scmp.ne.s32.totalorder %s214, %s215
    %p227 = scmp.eq.s32.totalorder %s32, 1
    %p228 = por %p226, %p227
    %p230 = scmp.ne.s32.totalorder %s215, %s229
    %p231 = scmp.eq.s32.totalorder %s32, 0
    %p232 = por %p230, %p231
    %s234 = sadd.s32 %s233, 1
    %p237 = scmp.eq.s32.totalorder %s26, 1
    %p238 = scmp.ne.s32.totalorder %s233, %s235
    %p239 = scmp.eq.s32.totalorder %s26, 0
    %p240 = por %p238, %p239
    %p241 = scmp.ne.s32.totalorder %s233, %s235
    %p242 = scmp.eq.s32.totalorder %s31, 1
    %p243 = por %p241, %p242
    %p244 = scmp.ne.s32.totalorder %s235, %s236
    %p245 = scmp.eq.s32.totalorder %s31, 0
    %p246 = por %p244, %p245
    %p247 = scmp.ne.s32.totalorder %s235, %s236
    %p248 = scmp.eq.s32.totalorder %s32, 1
    %p249 = por %p247, %p248
    %p251 = scmp.ne.s32.totalorder %s236, %s250
    %p252 = scmp.eq.s32.totalorder %s32, 0
    %p253 = por %p251, %p252
    %s255 = sadd.s32 %s254, 1
    %p258 = scmp.eq.s32.totalorder %s26, 1
    %p259 = scmp.ne.s32.totalorder %s254, %s256
    %p260 = scmp.eq.s32.totalorder %s26, 0
    %p261 = por %p259, %p260
    %p262 = scmp.ne.s32.totalorder %s254, %s256
    %p263 = scmp.eq.s32.totalorder %s31, 1
    %p264 = por %p262, %p263
    %p265 = scmp.ne.s32.totalorder %s256, %s257
    %p266 = scmp.eq.s32.totalorder %s31, 0
    %p267 = por %p265, %p266
    %p268 = scmp.ne.s32.totalorder %s256, %s257
    %p269 = scmp.eq.s32.totalorder %s32, 1
    %p270 = por %p268, %p269
    %p272 = scmp.ne.s32.totalorder %s257, %s271
    %p273 = scmp.eq.s32.totalorder %s32, 0
    %p274 = por %p272, %p273
    %s276 = sadd.s32 %s275, 1
    %p279 = scmp.eq.s32.totalorder %s26, 1
    %p280 = scmp.ne.s32.totalorder %s275, %s277
    %p281 = scmp.eq.s32.totalorder %s26, 0
    %p282 = por %p280, %p281
    %p283 = scmp.ne.s32.totalorder %s275, %s277
    %p284 = scmp.eq.s32.totalorder %s31, 1
    %p285 = por %p283, %p284
    %p286 = scmp.ne.s32.totalorder %s277, %s278
    %p287 = scmp.eq.s32.totalorder %s31, 0
    %p288 = por %p286, %p287
    %p289 = scmp.ne.s32.totalorder %s277, %s278
    %p290 = scmp.eq.s32.totalorder %s32, 1
    %p291 = por %p289, %p290
    %p293 = scmp.ne.s32.totalorder %s278, %s292
    %p294 = scmp.eq.s32.totalorder %s32, 0
    %p295 = por %p293, %p294
    %s297 = sadd.s32 %s296, 1
    %p300 = scmp.eq.s32.totalorder %s26, 1
    %p301 = scmp.ne.s32.totalorder %s296, %s298
    %p302 = scmp.eq.s32.totalorder %s26, 0
    %p303 = por %p301, %p302
    %p304 = scmp.ne.s32.totalorder %s296, %s298
    %p305 = scmp.eq.s32.totalorder %s31, 1
    %p306 = por %p304, %p305
    %p307 = scmp.ne.s32.totalorder %s298, %s299
    %p308 = scmp.eq.s32.totalorder %s31, 0
    %p309 = por %p307, %p308
    %p310 = scmp.ne.s32.totalorder %s298, %s299
    %p311 = scmp.eq.s32.totalorder %s32, 1
    %p312 = por %p310, %p311
    %p314 = scmp.ne.s32.totalorder %s299, %s313
    %p315 = scmp.eq.s32.totalorder %s32, 0
    %p316 = por %p314, %p315
    %s318 = sadd.s32 %s317, 1
    %p321 = scmp.eq.s32.totalorder %s26, 1
    %p322 = scmp.ne.s32.totalorder %s317, %s319
    %p323 = scmp.eq.s32.totalorder %s26, 0
    %p324 = por %p322, %p323
    %p325 = scmp.ne.s32.totalorder %s317, %s319
    %p326 = scmp.eq.s32.totalorder %s31, 1
    %p327 = por %p325, %p326
    %p328 = scmp.ne.s32.totalorder %s319, %s320
    %p329 = scmp.eq.s32.totalorder %s31, 0
    %p330 = por %p328, %p329
    %p331 = scmp.ne.s32.totalorder %s319, %s320
    %p332 = scmp.eq.s32.totalorder %s32, 1
    %p333 = por %p331, %p332
    %p335 = scmp.ne.s32.totalorder %s320, %s334
    %p336 = scmp.eq.s32.totalorder %s32, 0
    %p337 = por %p335, %p336
    %s339 = sadd.s32 %s338, 1
    %p342 = scmp.eq.s32.totalorder %s26, 1
    %p343 = scmp.ne.s32.totalorder %s338, %s340
    %p344 = scmp.eq.s32.totalorder %s26, 0
    %p345 = por %p343, %p344
    %p346 = scmp.ne.s32.totalorder %s338, %s340
    %p347 = scmp.eq.s32.totalorder %s31, 1
    %p348 = por %p346, %p347
    %p349 = scmp.ne.s32.totalorder %s340, %s341
    %p350 = scmp.eq.s32.totalorder %s31, 0
    %p351 = por %p349, %p350
    %p352 = scmp.ne.s32.totalorder %s340, %s341
    %p353 = scmp.eq.s32.totalorder %s32, 1
    %p354 = por %p352, %p353
    %p356 = scmp.ne.s32.totalorder %s341, %s355
    %p357 = scmp.eq.s32.totalorder %s32, 0
    %p358 = por %p356, %p357
    %s360 = sadd.s32 %s359, 1
    %p363 = scmp.eq.s32.totalorder %s26, 1
    %p364 = scmp.ne.s32.totalorder %s359, %s361
    %p365 = scmp.eq.s32.totalorder %s26, 0
    %p366 = por %p364, %p365
    %p367 = scmp.ne.s32.totalorder %s359, %s361
    %p368 = scmp.eq.s32.totalorder %s31, 1
    %p369 = por %p367, %p368
    %p370 = scmp.ne.s32.totalorder %s361, %s362
    %p371 = scmp.eq.s32.totalorder %s31, 0
    %p372 = por %p370, %p371
    %p373 = scmp.ne.s32.totalorder %s361, %s362
    %p374 = scmp.eq.s32.totalorder %s32, 1
    %p375 = por %p373, %p374
    %p377 = scmp.ne.s32.totalorder %s362, %s376
    %p378 = scmp.eq.s32.totalorder %s32, 0
    %p379 = por %p377, %p378
    %s381 = sadd.s32 %s380, 1
    %p384 = scmp.eq.s32.totalorder %s26, 1
    %p385 = scmp.ne.s32.totalorder %s380, %s382
    %p386 = scmp.eq.s32.totalorder %s26, 0
    %p387 = por %p385, %p386
    %p388 = scmp.ne.s32.totalorder %s380, %s382
    %p389 = scmp.eq.s32.totalorder %s31, 1
    %p390 = por %p388, %p389
    %p391 = scmp.ne.s32.totalorder %s382, %s383
    %p392 = scmp.eq.s32.totalorder %s31, 0
    %p393 = por %p391, %p392
    %p394 = scmp.ne.s32.totalorder %s382, %s383
    %p395 = scmp.eq.s32.totalorder %s32, 1
    %p396 = por %p394, %p395
    %p398 = scmp.ne.s32.totalorder %s383, %s397
    %p399 = scmp.eq.s32.totalorder %s32, 0
    %p400 = por %p398, %p399
    %s402 = sadd.s32 %s401, 1
    %p405 = scmp.eq.s32.totalorder %s26, 1
    %p406 = scmp.ne.s32.totalorder %s401, %s403
    %p407 = scmp.eq.s32.totalorder %s26, 0
    %p408 = por %p406, %p407
    %p409 = scmp.ne.s32.totalorder %s401, %s403
    %p410 = scmp.eq.s32.totalorder %s31, 1
    %p411 = por %p409, %p410
    %p412 = scmp.ne.s32.totalorder %s403, %s404
    %p413 = scmp.eq.s32.totalorder %s31, 0
    %p414 = por %p412, %p413
    %p415 = scmp.ne.s32.totalorder %s403, %s404
    %p416 = scmp.eq.s32.totalorder %s32, 1
    %p417 = por %p415, %p416
    %p419 = scmp.ne.s32.totalorder %s404, %s418
    %p420 = scmp.eq.s32.totalorder %s32, 0
    %p421 = por %p419, %p420
    %s423 = sadd.s32 %s422, 1
    %p426 = scmp.eq.s32.totalorder %s26, 1
    %p427 = scmp.ne.s32.totalorder %s422, %s424
    %p428 = scmp.eq.s32.totalorder %s26, 0
    %p429 = por %p427, %p428
    %p430 = scmp.ne.s32.totalorder %s422, %s424
    %p431 = scmp.eq.s32.totalorder %s31, 1
    %p432 = por %p430, %p431
    %p433 = scmp.ne.s32.totalorder %s424, %s425
    %p434 = scmp.eq.s32.totalorder %s31, 0
    %p435 = por %p433, %p434
    %p436 = scmp.ne.s32.totalorder %s424, %s425
    %p437 = scmp.eq.s32.totalorder %s32, 1
    %p438 = por %p436, %p437
    %p440 = scmp.ne.s32.totalorder %s425, %s439
    %p441 = scmp.eq.s32.totalorder %s32, 0
    %p442 = por %p440, %p441
    %s444 = sadd.s32 %s443, 1
    %p447 = scmp.eq.s32.totalorder %s26, 1
    %p448 = scmp.ne.s32.totalorder %s443, %s445
    %p449 = scmp.eq.s32.totalorder %s26, 0
    %p450 = por %p448, %p449
    %p451 = scmp.ne.s32.totalorder %s443, %s445
    %p452 = scmp.eq.s32.totalorder %s31, 1
    %p453 = por %p451, %p452
    %p454 = scmp.ne.s32.totalorder %s445, %s446
    %p455 = scmp.eq.s32.totalorder %s31, 0
    %p456 = por %p454, %p455
    %p457 = scmp.ne.s32.totalorder %s445, %s446
    %p458 = scmp.eq.s32.totalorder %s32, 1
    %p459 = por %p457, %p458
    %p461 = scmp.ne.s32.totalorder %s446, %s460
    %p462 = scmp.eq.s32.totalorder %s32, 0
    %p463 = por %p461, %p462
    %s464 = ssub.s32 %s26, %s33
    %p465 = scmp.eq.s32.totalorder %s464, 0
    %s467 = sadd.s32 %s466, 1
    %s468 = scalar_select %p465, %s466, %s467
    %p471 = pneg %p465
    %p472 = scmp.eq.s32.totalorder %s26, 1
    %p473 = por %p471, %p472
    %p474 = scmp.ne.s32.totalorder %s466, %s469
    %p475 = scmp.eq.s32.totalorder %s26, 0
    %p476 = por %p474, %p475
    %p477 = scmp.ne.s32.totalorder %s466, %s469
    %p478 = scmp.eq.s32.totalorder %s31, 1
    %p479 = por %p477, %p478
    %p480 = scmp.ne.s32.totalorder %s469, %s470
    %p481 = scmp.eq.s32.totalorder %s31, 0
    %p482 = por %p480, %p481
    %p483 = scmp.ne.s32.totalorder %s469, %s470
    %p484 = scmp.eq.s32.totalorder %s32, 1
    %p485 = por %p483, %p484
    %p487 = scmp.ne.s32.totalorder %s470, %s486
    %p488 = scmp.eq.s32.totalorder %s32, 0
    %p489 = por %p487, %p488
    %p490 = scmp.le.s32.totalorder 1, %s26
    %p491 = scmp.lt.s32.totalorder %s26, 3
    %p492 = pnand %p490, %p491
    %p493 = pneg %p492
    // Predicated region
    $region9: #{decoder_forward.3} parent=5 // pred_check
      _
    $region10: #{decoder_forward.3} parent=5 // pred_check_branch
      %495 = sbr.rel (%p492) target = $region12
    $region11: #{decoder_forward.3} parent=5 // pred_region
      %s496 = ssub.s32 %s26, 1
      // Predicated region
      $region13: #{decoder_forward.3} parent=11 // pred_check
        %p497 = pneg %p99
      $region14: #{decoder_forward.3} parent=11 // pred_check_branch
        %499 = sbr.rel (%p497) target = $region16
      $region15: #{decoder_forward.3} parent=11 // pred_region
        _
      $region16: #{decoder_forward.3} parent=11 // pred_fallthru
        _
      // Predicated region
      $region17: #{decoder_forward.3} parent=11 // pred_check
        %p500 = pneg %p120
      $region18: #{decoder_forward.3} parent=11 // pred_check_branch
        %502 = sbr.rel (%p500) target = $region20
      $region19: #{decoder_forward.3} parent=11 // pred_region
        _
      $region20: #{decoder_forward.3} parent=11 // pred_fallthru
        _
      // Predicated region
      $region21: #{decoder_forward.3} parent=11 // pred_check
        %p503 = pneg %p141
      $region22: #{decoder_forward.3} parent=11 // pred_check_branch
        %505 = sbr.rel (%p503) target = $region24
      $region23: #{decoder_forward.3} parent=11 // pred_region
        _
      $region24: #{decoder_forward.3} parent=11 // pred_fallthru
        _
      // Predicated region
      $region25: #{decoder_forward.3} parent=11 // pred_check
        %p506 = pneg %p162
      $region26: #{decoder_forward.3} parent=11 // pred_check_branch
        %508 = sbr.rel (%p506) target = $region28
      $region27: #{decoder_forward.3} parent=11 // pred_region
        _
      $region28: #{decoder_forward.3} parent=11 // pred_fallthru
        _
      // Predicated region
      $region29: #{decoder_forward.3} parent=11 // pred_check
        %p509 = pneg %p183
      $region30: #{decoder_forward.3} parent=11 // pred_check_branch
        %511 = sbr.rel (%p509) target = $region32
      $region31: #{decoder_forward.3} parent=11 // pred_region
        _
      $region32: #{decoder_forward.3} parent=11 // pred_fallthru
        _
      // Predicated region
      $region33: #{decoder_forward.3} parent=11 // pred_check
        %p512 = pneg %p204
      $region34: #{decoder_forward.3} parent=11 // pred_check_branch
        %514 = sbr.rel (%p512) target = $region36
      $region35: #{decoder_forward.3} parent=11 // pred_region
        _
      $region36: #{decoder_forward.3} parent=11 // pred_fallthru
        _
      // Predicated region
      $region37: #{decoder_forward.3} parent=11 // pred_check
        %p515 = pneg %p225
      $region38: #{decoder_forward.3} parent=11 // pred_check_branch
        %517 = sbr.rel (%p515) target = $region40
      $region39: #{decoder_forward.3} parent=11 // pred_region
        _
      $region40: #{decoder_forward.3} parent=11 // pred_fallthru
        _
      // Predicated region
      $region41: #{decoder_forward.3} parent=11 // pred_check
        %p518 = pneg %p246
      $region42: #{decoder_forward.3} parent=11 // pred_check_branch
        %520 = sbr.rel (%p518) target = $region44
      $region43: #{decoder_forward.3} parent=11 // pred_region
        _
      $region44: #{decoder_forward.3} parent=11 // pred_fallthru
        _
      // Predicated region
      $region45: #{decoder_forward.3} parent=11 // pred_check
        %p521 = pneg %p267
      $region46: #{decoder_forward.3} parent=11 // pred_check_branch
        %523 = sbr.rel (%p521) target = $region48
      $region47: #{decoder_forward.3} parent=11 // pred_region
        _
      $region48: #{decoder_forward.3} parent=11 // pred_fallthru
        _
      // Predicated region
      $region49: #{decoder_forward.3} parent=11 // pred_check
        %p524 = pneg %p288
      $region50: #{decoder_forward.3} parent=11 // pred_check_branch
        %526 = sbr.rel (%p524) target = $region52
      $region51: #{decoder_forward.3} parent=11 // pred_region
        _
      $region52: #{decoder_forward.3} parent=11 // pred_fallthru
        _
      // Predicated region
      $region53: #{decoder_forward.3} parent=11 // pred_check
        %p527 = pneg %p309
      $region54: #{decoder_forward.3} parent=11 // pred_check_branch
        %529 = sbr.rel (%p527) target = $region56
      $region55: #{decoder_forward.3} parent=11 // pred_region
        _
      $region56: #{decoder_forward.3} parent=11 // pred_fallthru
        _
      // Predicated region
      $region57: #{decoder_forward.3} parent=11 // pred_check
        %p530 = pneg %p330
      $region58: #{decoder_forward.3} parent=11 // pred_check_branch
        %532 = sbr.rel (%p530) target = $region60
      $region59: #{decoder_forward.3} parent=11 // pred_region
        _
      $region60: #{decoder_forward.3} parent=11 // pred_fallthru
        _
      // Predicated region
      $region61: #{decoder_forward.3} parent=11 // pred_check
        %p533 = pneg %p351
      $region62: #{decoder_forward.3} parent=11 // pred_check_branch
        %535 = sbr.rel (%p533) target = $region64
      $region63: #{decoder_forward.3} parent=11 // pred_region
        _
      $region64: #{decoder_forward.3} parent=11 // pred_fallthru
        _
      // Predicated region
      $region65: #{decoder_forward.3} parent=11 // pred_check
        %p536 = pneg %p372
      $region66: #{decoder_forward.3} parent=11 // pred_check_branch
        %538 = sbr.rel (%p536) target = $region68
      $region67: #{decoder_forward.3} parent=11 // pred_region
        _
      $region68: #{decoder_forward.3} parent=11 // pred_fallthru
        _
      // Predicated region
      $region69: #{decoder_forward.3} parent=11 // pred_check
        %p539 = pneg %p393
      $region70: #{decoder_forward.3} parent=11 // pred_check_branch
        %541 = sbr.rel (%p539) target = $region72
      $region71: #{decoder_forward.3} parent=11 // pred_region
        _
      $region72: #{decoder_forward.3} parent=11 // pred_fallthru
        _
      // Predicated region
      $region73: #{decoder_forward.3} parent=11 // pred_check
        %p542 = pneg %p414
      $region74: #{decoder_forward.3} parent=11 // pred_check_branch
        %544 = sbr.rel (%p542) target = $region76
      $region75: #{decoder_forward.3} parent=11 // pred_region
        _
      $region76: #{decoder_forward.3} parent=11 // pred_fallthru
        _
      // Predicated region
      $region77: #{decoder_forward.3} parent=11 // pred_check
        %p545 = pneg %p435
      $region78: #{decoder_forward.3} parent=11 // pred_check_branch
        %547 = sbr.rel (%p545) target = $region80
      $region79: #{decoder_forward.3} parent=11 // pred_region
        _
      $region80: #{decoder_forward.3} parent=11 // pred_fallthru
        _
      // Predicated region
      $region81: #{decoder_forward.3} parent=11 // pred_check
        %p548 = pneg %p456
      $region82: #{decoder_forward.3} parent=11 // pred_check_branch
        %550 = sbr.rel (%p548) target = $region84
      $region83: #{decoder_forward.3} parent=11 // pred_region
        _
      $region84: #{decoder_forward.3} parent=11 // pred_fallthru
        _
    $region12: #{decoder_forward.3} parent=5 // pred_fallthru
      _
    %p551 = scmp.lt.s32.totalorder %s26, 2
    // Predicated region
    $region85: #{decoder_forward.3} parent=5 // pred_check
      %p552 = pneg %p551
    $region86: #{decoder_forward.3} parent=5 // pred_check_branch
      %554 = sbr.rel (%p552) target = $region88
    $region87: #{decoder_forward.3} parent=5 // pred_region
      // Predicated region
      $region89: #{decoder_forward.3} parent=87 // pred_check
        %p555 = pneg %p46
      $region90: #{decoder_forward.3} parent=87 // pred_check_branch
        %557 = sbr.rel (%p555) target = $region92
      $region91: #{decoder_forward.3} parent=87 // pred_region
        %p558 = scmp.lt.s32.totalorder %s26, 1
        %s559 = scalar_select %p558, %s26, 1
        %s560 = smul.addr %s559, 2
        %s561 = smul.addr %s560, 4
        %s562 = scalar_lea.vmem %s0, %s561
      $region92: #{decoder_forward.3} parent=87 // pred_fallthru
        _
      // Predicated region
      $region93: #{decoder_forward.3} parent=87 // pred_check
        %p563 = pneg %p72
      $region94: #{decoder_forward.3} parent=87 // pred_check_branch
        %565 = sbr.rel (%p563) target = $region96
      $region95: #{decoder_forward.3} parent=87 // pred_region
        %p566 = scmp.lt.s32.totalorder %s26, 1
        %s567 = scalar_select %p566, %s26, 1
        %s568 = smul.addr %s567, 4
        %s569 = smul.addr %s568, 4
        %s570 = scalar_lea.vmem %s1, %s569
      $region96: #{decoder_forward.3} parent=87 // pred_fallthru
        _
    $region88: #{decoder_forward.3} parent=5 // pred_fallthru
      _
    %p571 = scmp.le.s32.totalorder 1, %s26
    %p572 = scmp.lt.s32.totalorder %s26, 3
    %p573 = pnand %p571, %p572
    %p574 = pneg %p573
    // Predicated region
    $region97: #{decoder_forward.3} parent=5 // pred_check
      _
    $region98: #{decoder_forward.3} parent=5 // pred_check_branch
      %576 = sbr.rel (%p573) target = $region100
    $region99: #{decoder_forward.3} parent=5 // pred_region
      %s577 = ssub.s32 %s26, 1
      %p578 = scmp.lt.s32.totalorder %s31, 1
      %s579 = scalar_select %p578, %s31, 1
      %s580 = smul.addr %s579, 2
      %s581 = smul.addr %s580, 4
      %s582 = scalar_lea.vmem %s0, %s581
      %p583 = pneg %p52
      %p584 = pneg %p49
      %p585 = scmp.lt.s32.totalorder %s31, 1
      %s586 = scalar_select %p585, %s31, 1
      %s587 = smul.addr %s586, 4
      %s588 = smul.addr %s587, 4
      %s589 = scalar_lea.vmem %s1, %s588
      %p590 = pneg %p78
      %p591 = pneg %p75
      %p592 = pneg %p99
      %p593 = pneg %p96
      %p594 = pneg %p120
      %p595 = pneg %p117
      %p596 = pneg %p141
      %p597 = pneg %p138
      %p598 = pneg %p162
      %p599 = pneg %p159
      %p600 = pneg %p183
      %p601 = pneg %p180
      %p602 = pneg %p204
      %p603 = pneg %p201
      %p604 = pneg %p225
      %p605 = pneg %p222
      %p606 = pneg %p246
      %p607 = pneg %p243
      %p608 = pneg %p267
      %p609 = pneg %p264
      %p610 = pneg %p288
      %p611 = pneg %p285
      %p612 = pneg %p309
      %p613 = pneg %p306
      %p614 = pneg %p330
      %p615 = pneg %p327
      %p616 = pneg %p351
      %p617 = pneg %p348
      %p618 = pneg %p372
      %p619 = pneg %p369
      %p620 = pneg %p393
      %p621 = pneg %p390
      %p622 = pneg %p414
      %p623 = pneg %p411
      %p624 = pneg %p435
      %p625 = pneg %p432
      %p626 = pneg %p456
      %p627 = pneg %p453
      %p628 = pneg %p482
      %p629 = pneg %p479
      %p630 = scmp.lt.s32.totalorder %s31, 1
      %s631 = scalar_select %p630, %s31, 1
      %s632 = smul.addr %s631, 2
      %s633 = smul.addr %s632, 4
      %s634 = scalar_lea.vmem %s20, %s633
      %p635 = scmp.lt.s32.totalorder %s31, 1
      %s636 = scalar_select %p635, %s31, 1
      %s637 = smul.addr %s636, 2
      %s638 = smul.addr %s637, 4
      %s639 = scalar_lea.vmem %s0, %s638
      %p640 = scmp.lt.s32.totalorder %s31, 1
      %s641 = scalar_select %p640, %s31, 1
      %s642 = smul.addr %s641, 4
      %s643 = smul.addr %s642, 4
      %s644 = scalar_lea.vmem %s1, %s643
      %p645 = scmp.lt.s32.totalorder %s31, 1
      %s646 = scalar_select %p645, %s31, 1
      %s647 = smul.addr %s646, 2
      %s648 = smul.addr %s647, 4
      %s649 = scalar_lea.vmem %s20, %s648
      %v651 = vld [vmem:[%s639] sm:$0xf]
      %v652 = vld [vmem:[%s639 + $0x4] sm:$0xf]
      %v653 = vunpack.c.l.bf16 %v651
      %v654 = vunpack.c.l.bf16 %v652
      %v655 = vld [vmem:[%s644] sm:$0xf]
      %v656 = vld [vmem:[%s644 + $0x4] sm:$0xf]
      %v657 = vld [vmem:[%s644 + $0x8] sm:$0xf]
      %v658 = vld [vmem:[%s644 + $0xc] sm:$0xf]
      %v659 = vrot.slane %v653, 1
      %v660 = vrot.slane %v654, 1
      %v661 = vlaneseq
      %v662 = vshrl.u32 %v661, 7
      %vm663 = vcmp.lt.s32.totalorder %v662, 7
      %v664 = vsel %vm663, %v659, %v660
      %v665 = vsel %vm663, %v660, %v659
      %v666 = vadd.s32 %v662, 8
      %vm667 = vcmp.eq.s32.totalorder %v662, 15
      %vm668 = vcmp.eq.s32.totalorder %v666, 15
      %v669 = vsel %vm667, 0.0, %v664
      %v670 = vsel %vm668, 0.0, %v665
      %v671 = vld [vmem:[%s4] sm:$0x1]
      %v672 = vld [vmem:[%s2] sm:$0xf]
      %v673 = vld [vmem:[%s2 + $0x4] sm:$0xf]
      %v674 = vld [vmem:[%s2 + $0x8] sm:$0xf]
      %v675 = vld [vmem:[%s2 + $0xc] sm:$0xf]
      %v676 = vld [vmem:[%s2 + $0x10] sm:$0xf]
      %v677 = vld [vmem:[%s2 + $0x14] sm:$0xf]
      %v678 = vld [vmem:[%s2 + $0x18] sm:$0xf]
      %v679 = vld [vmem:[%s2 + $0x1c] sm:$0xf]
      %v681 = vperm.slane %v671, 0
      %v685 = vunpack.c.l.b16 %v651
      %v686 = vunpack.c.l.b16 %v652
      %v687 = vpack.c.b16 %v686, %v685
      %v696 = vunpack.c.l.b16 %v672
      %v697 = vunpack.c.l.b16 %v673
      %v698 = vunpack.c.l.b16 %v674
      %v699 = vunpack.c.l.b16 %v675
      %v700 = vunpack.c.l.b16 %v676
      %v701 = vunpack.c.l.b16 %v677
      %v702 = vunpack.c.l.b16 %v678
      %v703 = vunpack.c.l.b16 %v679
      %v704 = vpack.c.b16 %v697, %v696
      %v705 = vpack.c.b16 %v699, %v698
      %v706 = vpack.c.b16 %v701, %v700
      %v707 = vpack.c.b16 %v703, %v702
      %vm712 = vcmask 523264
      %v714 = vsel %vm712, %v687, 0
      %716 = vmatpush.bf16.msra.mxu0 0
      %717 = vmatpush.bf16.msra.mxu0 0
      %718 = vmatpush.bf16.msra.mxu0 0
      %719 = vmatpush.bf16.msra.mxu0 0
      %720 = vmatpush.bf16.msra.mxu0 %v707
      %721 = vmatpush.bf16.msra.mxu0 %v706
      %722 = vmatpush.bf16.msra.mxu0 %v705
      %723 = vmatpush.bf16.msra.mxu0 %v704
      %724 = vmatmul.bf16.gmra.mxu0 %v714
      %v725 = vpop.f32.mrf.mxu0
      %v726 = vadd.f32 %v681, %v725
      %v727 = vpop.f32.mrf.mxu0
      %v728 = vadd.f32 %v681, %v727
      %729 = vdwg.mxu0
      %v730 = vpack.c.bf16 %v669, %v669
      %v731 = vpack.c.bf16 %v670, %v670
      %v734 = vunpack.c.l.b16 %v730
      %v735 = vunpack.c.l.b16 %v731
      %v736 = vpack.c.b16 %v735, %v734
      %737 = vrot.lane.b32.xlu0 %v687, 64
      %v738 = vpop.permute.xlu0 %737
      %v741 = vsel %vm712, %v736, %v738
      %v743 = vld [vmem:[%s3] sm:$0xf]
      %v744 = vld [vmem:[%s3 + $0x4] sm:$0xf]
      %v745 = vld [vmem:[%s3 + $0x8] sm:$0xf]
      %v746 = vld [vmem:[%s3 + $0xc] sm:$0xf]
      %v747 = vld [vmem:[%s3 + $0x10] sm:$0xf]
      %v748 = vld [vmem:[%s3 + $0x14] sm:$0xf]
      %v749 = vld [vmem:[%s3 + $0x18] sm:$0xf]
      %v750 = vld [vmem:[%s3 + $0x1c] sm:$0xf]
      %v751 = vld [vmem:[%s3 + $0x20] sm:$0xf]
      %v752 = vld [vmem:[%s3 + $0x24] sm:$0xf]
      %v753 = vld [vmem:[%s3 + $0x28] sm:$0xf]
      %v754 = vld [vmem:[%s3 + $0x2c] sm:$0xf]
      %v755 = vld [vmem:[%s3 + $0x30] sm:$0xf]
      %v756 = vld [vmem:[%s3 + $0x34] sm:$0xf]
      %v757 = vld [vmem:[%s3 + $0x38] sm:$0xf]
      %v758 = vld [vmem:[%s3 + $0x3c] sm:$0xf]
      %v775 = vunpack.c.l.b16 %v743
      %v776 = vunpack.c.l.b16 %v744
      %v777 = vunpack.c.l.b16 %v745
      %v778 = vunpack.c.l.b16 %v746
      %v779 = vunpack.c.l.b16 %v747
      %v780 = vunpack.c.l.b16 %v748
      %v781 = vunpack.c.l.b16 %v749
      %v782 = vunpack.c.l.b16 %v750
      %v783 = vunpack.c.l.b16 %v751
      %v784 = vunpack.c.l.b16 %v752
      %v785 = vunpack.c.l.b16 %v753
      %v786 = vunpack.c.l.b16 %v754
      %v787 = vunpack.c.l.b16 %v755
      %v788 = vunpack.c.l.b16 %v756
      %v789 = vunpack.c.l.b16 %v757
      %v790 = vunpack.c.l.b16 %v758
      %v791 = vpack.c.b16 %v776, %v775
      %v792 = vpack.c.b16 %v778, %v777
      %v793 = vpack.c.b16 %v780, %v779
      %v794 = vpack.c.b16 %v782, %v781
      %v795 = vpack.c.b16 %v784, %v783
      %v796 = vpack.c.b16 %v786, %v785
      %v797 = vpack.c.b16 %v788, %v787
      %v798 = vpack.c.b16 %v790, %v789
      %807 = vmatpush.bf16.msra.mxu0 %v798
      %808 = vmatpush.bf16.msra.mxu0 %v797
      %809 = vmatpush.bf16.msra.mxu0 %v796
      %810 = vmatpush.bf16.msra.mxu0 %v795
      %811 = vmatpush.bf16.msra.mxu0 %v794
      %812 = vmatpush.bf16.msra.mxu0 %v793
      %813 = vmatpush.bf16.msra.mxu0 %v792
      %814 = vmatpush.bf16.msra.mxu0 %v791
      %815 = vmatmul.bf16.gmra.mxu0 %v741
      %v816 = vpop.f32.mrf.mxu0
      %v817 = vadd.f32 %v681, %v816
      %v818 = vpop.f32.mrf.mxu0
      %v819 = vadd.f32 %v681, %v818
      %820 = vdwg.mxu0
      %v821 = vld [vmem:[%s6] sm:$0x1]
      %v822 = vld [vmem:[%s7] sm:$0x1]
      %v823 = vrot.slane %v817, 7
      %v824 = vrot.slane %v819, 7
      %vm825 = vcmp.lt.s32.totalorder %v662, 1
      %v826 = vsel %vm825, %v823, %v824
      %v827 = vsel %vm825, %v824, %v823
      %vm828 = vcmp.eq.s32.totalorder %v662, 0
      %vm829 = vcmp.eq.s32.totalorder %v666, 0
      %v830 = vsel %vm828, 0.0, %v827
      %v831 = vsel %vm829, 0.0, %v826
      %v832 = vrot.slane %v726, 1
      %v833 = vrot.slane %v728, 1
      %v834 = vsel %vm663, %v832, %v833
      %v835 = vsel %vm663, %v833, %v832
      %v836 = vsel %vm667, 0.0, %v834
      %v837 = vsel %vm668, 0.0, %v835
      %842 = vrot.lane.b32.xlu0 %v726, 64
      %v843 = vpop.permute.xlu0 %842
      %844 = vrot.lane.b32.xlu0 %v728, 64
      %v845 = vpop.permute.xlu0 %844
      %846 = vrot.lane.b32.xlu0 %v817, 64
      %v847 = vpop.permute.xlu0 %846
      %848 = vrot.lane.b32.xlu0 %v819, 64
      %v849 = vpop.permute.xlu0 %848
      %v854 = vsel %vm712, %v830, %v843
      %v855 = vsel %vm712, %v831, %v845
      %v856 = vsel %vm712, %v726, %v847
      %v857 = vsel %vm712, %v728, %v849
      %v858 = vpack.c.bf16 %v855, %v854
      %v859 = vpack.c.bf16 %v819, %v817
      %v860 = vpack.c.bf16 %v857, %v856
      %v861 = vpack.c.bf16 %v837, %v836
      %v862 = vld [vmem:[%s5] sm:$0xf]
      %v863 = vld [vmem:[%s5 + $0x4] sm:$0xf]
      %v864 = vld [vmem:[%s5 + $0x8] sm:$0xf]
      %v865 = vld [vmem:[%s5 + $0xc] sm:$0xf]
      %v866 = vld [vmem:[%s5 + $0x10] sm:$0xf]
      %v867 = vld [vmem:[%s5 + $0x14] sm:$0xf]
      %v868 = vld [vmem:[%s5 + $0x18] sm:$0xf]
      %v869 = vld [vmem:[%s5 + $0x1c] sm:$0xf]
      %v870 = vld [vmem:[%s5 + $0x20] sm:$0xf]
      %v871 = vld [vmem:[%s5 + $0x24] sm:$0xf]
      %v872 = vld [vmem:[%s5 + $0x28] sm:$0xf]
      %v873 = vld [vmem:[%s5 + $0x2c] sm:$0xf]
      %v874 = vld [vmem:[%s5 + $0x30] sm:$0xf]
      %v875 = vld [vmem:[%s5 + $0x34] sm:$0xf]
      %v876 = vld [vmem:[%s5 + $0x38] sm:$0xf]
      %v877 = vld [vmem:[%s5 + $0x3c] sm:$0xf]
      %v878 = vld [vmem:[%s5 + $0x40] sm:$0xf]
      %v879 = vld [vmem:[%s5 + $0x44] sm:$0xf]
      %v880 = vld [vmem:[%s5 + $0x48] sm:$0xf]
      %v881 = vld [vmem:[%s5 + $0x4c] sm:$0xf]
      %v882 = vld [vmem:[%s5 + $0x50] sm:$0xf]
      %v883 = vld [vmem:[%s5 + $0x54] sm:$0xf]
      %v884 = vld [vmem:[%s5 + $0x58] sm:$0xf]
      %v885 = vld [vmem:[%s5 + $0x5c] sm:$0xf]
      %v910 = vunpack.c.l.b16 %v862
      %v911 = vunpack.c.l.b16 %v863
      %v912 = vunpack.c.l.b16 %v864
      %v913 = vunpack.c.l.b16 %v865
      %v914 = vunpack.c.l.b16 %v866
      %v915 = vunpack.c.l.b16 %v867
      %v916 = vunpack.c.l.b16 %v868
      %v917 = vunpack.c.l.b16 %v869
      %v918 = vunpack.c.l.b16 %v870
      %v919 = vunpack.c.l.b16 %v871
      %v920 = vunpack.c.l.b16 %v872
      %v921 = vunpack.c.l.b16 %v873
      %v922 = vunpack.c.l.b16 %v874
      %v923 = vunpack.c.l.b16 %v875
      %v924 = vunpack.c.l.b16 %v876
      %v925 = vunpack.c.l.b16 %v877
      %v926 = vunpack.c.l.b16 %v878
      %v927 = vunpack.c.l.b16 %v879
      %v928 = vunpack.c.l.b16 %v880
      %v929 = vunpack.c.l.b16 %v881
      %v930 = vunpack.c.l.b16 %v882
      %v931 = vunpack.c.l.b16 %v883
      %v932 = vunpack.c.l.b16 %v884
      %v933 = vunpack.c.l.b16 %v885
      %v934 = vpack.c.b16 %v911, %v910
      %v935 = vpack.c.b16 %v913, %v912
      %v936 = vpack.c.b16 %v915, %v914
      %v937 = vpack.c.b16 %v917, %v916
      %v938 = vpack.c.b16 %v919, %v918
      %v939 = vpack.c.b16 %v921, %v920
      %v940 = vpack.c.b16 %v923, %v922
      %v941 = vpack.c.b16 %v925, %v924
      %v942 = vpack.c.b16 %v927, %v926
      %v943 = vpack.c.b16 %v929, %v928
      %v944 = vpack.c.b16 %v931, %v930
      %v945 = vpack.c.b16 %v933, %v932
      %v959 = vsel %vm712, %v859, 0
      %v962 = vsel %vm712, %v861, 0
      %964 = vmatpush.bf16.msra.mxu0 %v941
      %965 = vmatpush.bf16.msra.mxu0 %v940
      %966 = vmatpush.bf16.msra.mxu0 %v939
      %967 = vmatpush.bf16.msra.mxu0 %v938
      %968 = vmatpush.bf16.msra.mxu0 %v937
      %969 = vmatpush.bf16.msra.mxu0 %v936
      %970 = vmatpush.bf16.msra.mxu0 %v935
      %971 = vmatpush.bf16.msra.mxu0 %v934
      %972 = vmatmul.bf16.gmra.mxu0 %v858
      %v973 = vpop.f32.mrf.mxu0
      %v974 = vadd.f32 0.0, %v973
      %v975 = vpop.f32.mrf.mxu0
      %v976 = vadd.f32 0.0, %v975
      %977 = vmatmul.bf16.gmra.mxu0 %v860
      %v978 = vpop.f32.mrf.mxu0
      %v979 = vadd.f32 0.0, %v978
      %v980 = vpop.f32.mrf.mxu0
      %v981 = vadd.f32 0.0, %v980
      %982 = vdwg.mxu0
      %983 = vmatpush.bf16.msra.mxu0 0
      %984 = vmatpush.bf16.msra.mxu0 0
      %985 = vmatpush.bf16.msra.mxu0 0
      %986 = vmatpush.bf16.msra.mxu0 0
      %987 = vmatpush.bf16.msra.mxu0 %v945
      %988 = vmatpush.bf16.msra.mxu0 %v944
      %989 = vmatpush.bf16.msra.mxu0 %v943
      %990 = vmatpush.bf16.msra.mxu0 %v942
      %991 = vmatmul.bf16.gmra.mxu0 %v959
      %v992 = vpop.f32.mrf.mxu0
      %v993 = vadd.f32 %v974, %v992
      %v994 = vpop.f32.mrf.mxu0
      %v995 = vadd.f32 %v976, %v994
      %996 = vmatmul.bf16.gmra.mxu0 %v962
      %v997 = vpop.f32.mrf.mxu0
      %v998 = vadd.f32 %v979, %v997
      %v999 = vpop.f32.mrf.mxu0
      %v1000 = vadd.f32 %v981, %v999
      %1001 = vdwg.mxu0
      %v1003 = vperm.slane %v821, 0
      %v1005 = vmul.f32 %v993, %v1003
      %v1006 = vmul.f32 %v995, %v1003
      %v1007 = vmul.f32 %v998, %v1003
      %v1008 = vmul.f32 %v1000, %v1003
      %v1010 = vperm.slane %v822, 0
      %v1012 = vadd.f32 %v1005, %v1010
      %v1013 = vadd.f32 %v1006, %v1010
      %v1014 = vadd.f32 %v1007, %v1010
      %v1015 = vadd.f32 %v1008, %v1010
      %v1016 = vmax.f32 %v1012, 0.0
      %v1017 = vmax.f32 %v1013, 0.0
      %v1018 = vmax.f32 %v1014, 0.0
      %v1019 = vmax.f32 %v1015, 0.0
      %v1020 = vld [vmem:[%s9] sm:$0x1]
      %v1021 = vld [vmem:[%s10] sm:$0x1]
      %v1022 = vrot.slane %v1018, 7
      %v1023 = vrot.slane %v1019, 7
      %v1024 = vsel %vm825, %v1022, %v1023
      %v1025 = vsel %vm825, %v1023, %v1022
      %v1026 = vsel %vm828, 0.0, %v1025
      %v1027 = vsel %vm829, 0.0, %v1024
      %v1028 = vrot.slane %v1016, 1
      %v1029 = vrot.slane %v1017, 1
      %v1030 = vsel %vm663, %v1028, %v1029
      %v1031 = vsel %vm663, %v1029, %v1028
      %v1032 = vsel %vm667, 0.0, %v1030
      %v1033 = vsel %vm668, 0.0, %v1031
      %1038 = vrot.lane.b32.xlu0 %v1016, 64
      %v1039 = vpop.permute.xlu0 %1038
      %1040 = vrot.lane.b32.xlu0 %v1017, 64
      %v1041 = vpop.permute.xlu0 %1040
      %1042 = vrot.lane.b32.xlu0 %v1018, 64
      %v1043 = vpop.permute.xlu0 %1042
      %1044 = vrot.lane.b32.xlu0 %v1019, 64
      %v1045 = vpop.permute.xlu0 %1044
      %v1050 = vsel %vm712, %v1026, %v1039
      %v1051 = vsel %vm712, %v1027, %v1041
      %v1052 = vsel %vm712, %v1016, %v1043
      %v1053 = vsel %vm712, %v1017, %v1045
      %v1054 = vpack.c.bf16 %v1051, %v1050
      %v1055 = vpack.c.bf16 %v1019, %v1018
      %v1056 = vpack.c.bf16 %v1053, %v1052
      %v1057 = vpack.c.bf16 %v1033, %v1032
      %v1058 = vld [vmem:[%s8] sm:$0xf]
      %v1059 = vld [vmem:[%s8 + $0x4] sm:$0xf]
      %v1060 = vld [vmem:[%s8 + $0x8] sm:$0xf]
      %v1061 = vld [vmem:[%s8 + $0xc] sm:$0xf]
      %v1062 = vld [vmem:[%s8 + $0x10] sm:$0xf]
      %v1063 = vld [vmem:[%s8 + $0x14] sm:$0xf]
      %v1064 = vld [vmem:[%s8 + $0x18] sm:$0xf]
      %v1065 = vld [vmem:[%s8 + $0x1c] sm:$0xf]
      %v1066 = vld [vmem:[%s8 + $0x20] sm:$0xf]
      %v1067 = vld [vmem:[%s8 + $0x24] sm:$0xf]
      %v1068 = vld [vmem:[%s8 + $0x28] sm:$0xf]
      %v1069 = vld [vmem:[%s8 + $0x2c] sm:$0xf]
      %v1070 = vld [vmem:[%s8 + $0x30] sm:$0xf]
      %v1071 = vld [vmem:[%s8 + $0x34] sm:$0xf]
      %v1072 = vld [vmem:[%s8 + $0x38] sm:$0xf]
      %v1073 = vld [vmem:[%s8 + $0x3c] sm:$0xf]
      %v1074 = vld [vmem:[%s8 + $0x40] sm:$0xf]
      %v1075 = vld [vmem:[%s8 + $0x44] sm:$0xf]
      %v1076 = vld [vmem:[%s8 + $0x48] sm:$0xf]
      %v1077 = vld [vmem:[%s8 + $0x4c] sm:$0xf]
      %v1078 = vld [vmem:[%s8 + $0x50] sm:$0xf]
      %v1079 = vld [vmem:[%s8 + $0x54] sm:$0xf]
      %v1080 = vld [vmem:[%s8 + $0x58] sm:$0xf]
      %v1081 = vld [vmem:[%s8 + $0x5c] sm:$0xf]
      %v1106 = vunpack.c.l.b16 %v1058
      %v1107 = vunpack.c.l.b16 %v1059
      %v1108 = vunpack.c.l.b16 %v1060
      %v1109 = vunpack.c.l.b16 %v1061
      %v1110 = vunpack.c.l.b16 %v1062
      %v1111 = vunpack.c.l.b16 %v1063
      %v1112 = vunpack.c.l.b16 %v1064
      %v1113 = vunpack.c.l.b16 %v1065
      %v1114 = vunpack.c.l.b16 %v1066
      %v1115 = vunpack.c.l.b16 %v1067
      %v1116 = vunpack.c.l.b16 %v1068
      %v1117 = vunpack.c.l.b16 %v1069
      %v1118 = vunpack.c.l.b16 %v1070
      %v1119 = vunpack.c.l.b16 %v1071
      %v1120 = vunpack.c.l.b16 %v1072
      %v1121 = vunpack.c.l.b16 %v1073
      %v1122 = vunpack.c.l.b16 %v1074
      %v1123 = vunpack.c.l.b16 %v1075
      %v1124 = vunpack.c.l.b16 %v1076
      %v1125 = vunpack.c.l.b16 %v1077
      %v1126 = vunpack.c.l.b16 %v1078
      %v1127 = vunpack.c.l.b16 %v1079
      %v1128 = vunpack.c.l.b16 %v1080
      %v1129 = vunpack.c.l.b16 %v1081
      %v1130 = vpack.c.b16 %v1107, %v1106
      %v1131 = vpack.c.b16 %v1109, %v1108
      %v1132 = vpack.c.b16 %v1111, %v1110
      %v1133 = vpack.c.b16 %v1113, %v1112
      %v1134 = vpack.c.b16 %v1115, %v1114
      %v1135 = vpack.c.b16 %v1117, %v1116
      %v1136 = vpack.c.b16 %v1119, %v1118
      %v1137 = vpack.c.b16 %v1121, %v1120
      %v1138 = vpack.c.b16 %v1123, %v1122
      %v1139 = vpack.c.b16 %v1125, %v1124
      %v1140 = vpack.c.b16 %v1127, %v1126
      %v1141 = vpack.c.b16 %v1129, %v1128
      %v1155 = vsel %vm712, %v1055, 0
      %v1158 = vsel %vm712, %v1057, 0
      %1160 = vmatpush.bf16.msra.mxu0 %v1137
      %1161 = vmatpush.bf16.msra.mxu0 %v1136
      %1162 = vmatpush.bf16.msra.mxu0 %v1135
      %1163 = vmatpush.bf16.msra.mxu0 %v1134
      %1164 = vmatpush.bf16.msra.mxu0 %v1133
      %1165 = vmatpush.bf16.msra.mxu0 %v1132
      %1166 = vmatpush.bf16.msra.mxu0 %v1131
      %1167 = vmatpush.bf16.msra.mxu0 %v1130
      %1168 = vmatmul.bf16.gmra.mxu0 %v1054
      %v1169 = vpop.f32.mrf.mxu0
      %v1170 = vadd.f32 0.0, %v1169
      %v1171 = vpop.f32.mrf.mxu0
      %v1172 = vadd.f32 0.0, %v1171
      %1173 = vmatmul.bf16.gmra.mxu0 %v1056
      %v1174 = vpop.f32.mrf.mxu0
      %v1175 = vadd.f32 0.0, %v1174
      %v1176 = vpop.f32.mrf.mxu0
      %v1177 = vadd.f32 0.0, %v1176
      %1178 = vdwg.mxu0
      %1179 = vmatpush.bf16.msra.mxu0 0
      %1180 = vmatpush.bf16.msra.mxu0 0
      %1181 = vmatpush.bf16.msra.mxu0 0
      %1182 = vmatpush.bf16.msra.mxu0 0
      %1183 = vmatpush.bf16.msra.mxu0 %v1141
      %1184 = vmatpush.bf16.msra.mxu0 %v1140
      %1185 = vmatpush.bf16.msra.mxu0 %v1139
      %1186 = vmatpush.bf16.msra.mxu0 %v1138
      %1187 = vmatmul.bf16.gmra.mxu0 %v1155
      %v1188 = vpop.f32.mrf.mxu0
      %v1189 = vadd.f32 %v1170, %v1188
      %v1190 = vpop.f32.mrf.mxu0
      %v1191 = vadd.f32 %v1172, %v1190
      %1192 = vmatmul.bf16.gmra.mxu0 %v1158
      %v1193 = vpop.f32.mrf.mxu0
      %v1194 = vadd.f32 %v1175, %v1193
      %v1195 = vpop.f32.mrf.mxu0
      %v1196 = vadd.f32 %v1177, %v1195
      %1197 = vdwg.mxu0
      %v1199 = vperm.slane %v1020, 0
      %v1201 = vmul.f32 %v1189, %v1199
      %v1202 = vmul.f32 %v1191, %v1199
      %v1203 = vmul.f32 %v1194, %v1199
      %v1204 = vmul.f32 %v1196, %v1199
      %v1206 = vperm.slane %v1021, 0
      %v1208 = vadd.f32 %v1201, %v1206
      %v1209 = vadd.f32 %v1202, %v1206
      %v1210 = vadd.f32 %v1203, %v1206
      %v1211 = vadd.f32 %v1204, %v1206
      %v1212 = vmax.f32 %v1208, 0.0
      %v1213 = vmax.f32 %v1209, 0.0
      %v1214 = vmax.f32 %v1210, 0.0
      %v1215 = vmax.f32 %v1211, 0.0
      %v1216 = vld [vmem:[%s12] sm:$0x1]
      %v1217 = vld [vmem:[%s13] sm:$0x1]
      %v1218 = vrot.slane %v1214, 7
      %v1219 = vrot.slane %v1215, 7
      %v1220 = vsel %vm825, %v1218, %v1219
      %v1221 = vsel %vm825, %v1219, %v1218
      %v1222 = vsel %vm828, 0.0, %v1221
      %v1223 = vsel %vm829, 0.0, %v1220
      %v1224 = vrot.slane %v1212, 1
      %v1225 = vrot.slane %v1213, 1
      %v1226 = vsel %vm663, %v1224, %v1225
      %v1227 = vsel %vm663, %v1225, %v1224
      %v1228 = vsel %vm667, 0.0, %v1226
      %v1229 = vsel %vm668, 0.0, %v1227
      %1234 = vrot.lane.b32.xlu0 %v1212, 64
      %v1235 = vpop.permute.xlu0 %1234
      %1236 = vrot.lane.b32.xlu0 %v1213, 64
      %v1237 = vpop.permute.xlu0 %1236
      %1238 = vrot.lane.b32.xlu0 %v1214, 64
      %v1239 = vpop.permute.xlu0 %1238
      %1240 = vrot.lane.b32.xlu0 %v1215, 64
      %v1241 = vpop.permute.xlu0 %1240
      %v1246 = vsel %vm712, %v1222, %v1235
      %v1247 = vsel %vm712, %v1223, %v1237
      %v1248 = vsel %vm712, %v1212, %v1239
      %v1249 = vsel %vm712, %v1213, %v1241
      %v1250 = vpack.c.bf16 %v1247, %v1246
      %v1251 = vpack.c.bf16 %v1215, %v1214
      %v1252 = vpack.c.bf16 %v1249, %v1248
      %v1253 = vpack.c.bf16 %v1229, %v1228
      %v1254 = vld [vmem:[%s11] sm:$0xf]
      %v1255 = vld [vmem:[%s11 + $0x4] sm:$0xf]
      %v1256 = vld [vmem:[%s11 + $0x8] sm:$0xf]
      %v1257 = vld [vmem:[%s11 + $0xc] sm:$0xf]
      %v1258 = vld [vmem:[%s11 + $0x10] sm:$0xf]
      %v1259 = vld [vmem:[%s11 + $0x14] sm:$0xf]
      %v1260 = vld [vmem:[%s11 + $0x18] sm:$0xf]
      %v1261 = vld [vmem:[%s11 + $0x1c] sm:$0xf]
      %v1262 = vld [vmem:[%s11 + $0x20] sm:$0xf]
      %v1263 = vld [vmem:[%s11 + $0x24] sm:$0xf]
      %v1264 = vld [vmem:[%s11 + $0x28] sm:$0xf]
      %v1265 = vld [vmem:[%s11 + $0x2c] sm:$0xf]
      %v1266 = vld [vmem:[%s11 + $0x30] sm:$0xf]
      %v1267 = vld [vmem:[%s11 + $0x34] sm:$0xf]
      %v1268 = vld [vmem:[%s11 + $0x38] sm:$0xf]
      %v1269 = vld [vmem:[%s11 + $0x3c] sm:$0xf]
      %v1270 = vld [vmem:[%s11 + $0x40] sm:$0xf]
      %v1271 = vld [vmem:[%s11 + $0x44] sm:$0xf]
      %v1272 = vld [vmem:[%s11 + $0x48] sm:$0xf]
      %v1273 = vld [vmem:[%s11 + $0x4c] sm:$0xf]
      %v1274 = vld [vmem:[%s11 + $0x50] sm:$0xf]
      %v1275 = vld [vmem:[%s11 + $0x54] sm:$0xf]
      %v1276 = vld [vmem:[%s11 + $0x58] sm:$0xf]
      %v1277 = vld [vmem:[%s11 + $0x5c] sm:$0xf]
      %v1302 = vunpack.c.l.b16 %v1254
      %v1303 = vunpack.c.l.b16 %v1255
      %v1304 = vunpack.c.l.b16 %v1256
      %v1305 = vunpack.c.l.b16 %v1257
      %v1306 = vunpack.c.l.b16 %v1258
      %v1307 = vunpack.c.l.b16 %v1259
      %v1308 = vunpack.c.l.b16 %v1260
      %v1309 = vunpack.c.l.b16 %v1261
      %v1310 = vunpack.c.l.b16 %v1262
      %v1311 = vunpack.c.l.b16 %v1263
      %v1312 = vunpack.c.l.b16 %v1264
      %v1313 = vunpack.c.l.b16 %v1265
      %v1314 = vunpack.c.l.b16 %v1266
      %v1315 = vunpack.c.l.b16 %v1267
      %v1316 = vunpack.c.l.b16 %v1268
      %v1317 = vunpack.c.l.b16 %v1269
      %v1318 = vunpack.c.l.b16 %v1270
      %v1319 = vunpack.c.l.b16 %v1271
      %v1320 = vunpack.c.l.b16 %v1272
      %v1321 = vunpack.c.l.b16 %v1273
      %v1322 = vunpack.c.l.b16 %v1274
      %v1323 = vunpack.c.l.b16 %v1275
      %v1324 = vunpack.c.l.b16 %v1276
      %v1325 = vunpack.c.l.b16 %v1277
      %v1326 = vpack.c.b16 %v1303, %v1302
      %v1327 = vpack.c.b16 %v1305, %v1304
      %v1328 = vpack.c.b16 %v1307, %v1306
      %v1329 = vpack.c.b16 %v1309, %v1308
      %v1330 = vpack.c.b16 %v1311, %v1310
      %v1331 = vpack.c.b16 %v1313, %v1312
      %v1332 = vpack.c.b16 %v1315, %v1314
      %v1333 = vpack.c.b16 %v1317, %v1316
      %v1334 = vpack.c.b16 %v1319, %v1318
      %v1335 = vpack.c.b16 %v1321, %v1320
      %v1336 = vpack.c.b16 %v1323, %v1322
      %v1337 = vpack.c.b16 %v1325, %v1324
      %v1351 = vsel %vm712, %v1251, 0
      %v1354 = vsel %vm712, %v1253, 0
      %1356 = vmatpush.bf16.msra.mxu0 %v1333
      %1357 = vmatpush.bf16.msra.mxu0 %v1332
      %1358 = vmatpush.bf16.msra.mxu0 %v1331
      %1359 = vmatpush.bf16.msra.mxu0 %v1330
      %1360 = vmatpush.bf16.msra.mxu0 %v1329
      %1361 = vmatpush.bf16.msra.mxu0 %v1328
      %1362 = vmatpush.bf16.msra.mxu0 %v1327
      %1363 = vmatpush.bf16.msra.mxu0 %v1326
      %1364 = vmatmul.bf16.gmra.mxu0 %v1250
      %v1365 = vpop.f32.mrf.mxu0
      %v1366 = vadd.f32 0.0, %v1365
      %v1367 = vpop.f32.mrf.mxu0
      %v1368 = vadd.f32 0.0, %v1367
      %1369 = vmatmul.bf16.gmra.mxu0 %v1252
      %v1370 = vpop.f32.mrf.mxu0
      %v1371 = vadd.f32 0.0, %v1370
      %v1372 = vpop.f32.mrf.mxu0
      %v1373 = vadd.f32 0.0, %v1372
      %1374 = vdwg.mxu0
      %1375 = vmatpush.bf16.msra.mxu0 0
      %1376 = vmatpush.bf16.msra.mxu0 0
      %1377 = vmatpush.bf16.msra.mxu0 0
      %1378 = vmatpush.bf16.msra.mxu0 0
      %1379 = vmatpush.bf16.msra.mxu0 %v1337
      %1380 = vmatpush.bf16.msra.mxu0 %v1336
      %1381 = vmatpush.bf16.msra.mxu0 %v1335
      %1382 = vmatpush.bf16.msra.mxu0 %v1334
      %1383 = vmatmul.bf16.gmra.mxu0 %v1351
      %v1384 = vpop.f32.mrf.mxu0
      %v1385 = vadd.f32 %v1366, %v1384
      %v1386 = vpop.f32.mrf.mxu0
      %v1387 = vadd.f32 %v1368, %v1386
      %1388 = vmatmul.bf16.gmra.mxu0 %v1354
      %v1389 = vpop.f32.mrf.mxu0
      %v1390 = vadd.f32 %v1371, %v1389
      %v1391 = vpop.f32.mrf.mxu0
      %v1392 = vadd.f32 %v1373, %v1391
      %1393 = vdwg.mxu0
      %v1395 = vperm.slane %v1216, 0
      %v1397 = vmul.f32 %v1385, %v1395
      %v1398 = vmul.f32 %v1387, %v1395
      %v1399 = vmul.f32 %v1390, %v1395
      %v1400 = vmul.f32 %v1392, %v1395
      %v1402 = vperm.slane %v1217, 0
      %v1404 = vadd.f32 %v1397, %v1402
      %v1405 = vadd.f32 %v1398, %v1402
      %v1406 = vadd.f32 %v1399, %v1402
      %v1407 = vadd.f32 %v1400, %v1402
      %v1408 = vadd.f32 %v726, %v1404
      %v1409 = vadd.f32 %v728, %v1405
      %v1410 = vadd.f32 %v817, %v1406
      %v1411 = vadd.f32 %v819, %v1407
      %v1412 = vsel %vm712, %v1408, 0.0
      %v1413 = vsel %vm712, %v1409, 0.0
      %v1414 = vadd.f32 %v1412, %v1413
      %v1415 = vsel %vm712, %v1410, 0.0
      %v1416 = vadd.f32 %v1414, %v1415
      %v1417 = vsel %vm712, %v1411, 0.0
      %v1418 = vadd.f32 %v1416, %v1417
      %v1419 = vrot.slane %v1418, 4
      %v1420 = vadd.f32 %v1418, %v1419
      %v1421 = vrot.slane %v1420, 2
      %v1422 = vadd.f32 %v1420, %v1421
      %v1423 = vrot.slane %v1422, 1
      %v1424 = vadd.f32 %v1422, %v1423
      %v1425 = vmul.f32 %v1424, 0.03125
      %v1426 = vmul.f32 %v1408, %v1408
      %v1427 = vmul.f32 %v1409, %v1409
      %v1428 = vmul.f32 %v1410, %v1410
      %v1429 = vmul.f32 %v1411, %v1411
      %v1430 = vsel %vm712, %v1426, 0.0
      %v1431 = vsel %vm712, %v1427, 0.0
      %v1432 = vadd.f32 %v1430, %v1431
      %v1433 = vsel %vm712, %v1428, 0.0
      %v1434 = vadd.f32 %v1432, %v1433
      %v1435 = vsel %vm712, %v1429, 0.0
      %v1436 = vadd.f32 %v1434, %v1435
      %v1437 = vrot.slane %v1436, 4
      %v1438 = vadd.f32 %v1436, %v1437
      %v1439 = vrot.slane %v1438, 2
      %v1440 = vadd.f32 %v1438, %v1439
      %v1441 = vrot.slane %v1440, 1
      %v1442 = vadd.f32 %v1440, %v1441
      %v1443 = vmul.f32 %v1442, 0.03125
      %v1444 = vmul.f32 %v1425, %v1425
      %v1445 = vsub.f32 %v1443, %v1444
      %v1446 = vmax.f32 %v1445, 0.0
      %v1447 = vsub.f32 %v1408, %v1425
      %v1448 = vsub.f32 %v1409, %v1425
      %v1449 = vsub.f32 %v1410, %v1425
      %v1450 = vsub.f32 %v1411, %v1425
      %v1451 = vadd.f32 %v1446, 1e-05
      %v1452 = vrsqrt.pop %v1451
      %v1453 = vmul.f32 %v1452, %v1451
      %v1454 = vmul.f32 %v1453, %v1452
      %v1455 = vmul.f32 0.5, %v1454
      %v1456 = vsub.f32 1.5, %v1455
      %v1457 = vmul.f32 %v1452, %v1456
      %vm1458 = vweird.f32 %v1451
      %vm1459 = vweird.f32 %v1452
      %vm1460 = vmor %vm1458, %vm1459
      %v1461 = vsel %vm1460, %v1452, %v1457
      %v1462 = vmul.f32 %v1447, %v1461
      %v1463 = vmul.f32 %v1448, %v1461
      %v1464 = vmul.f32 %v1449, %v1461
      %v1465 = vmul.f32 %v1450, %v1461
      %v1466 = vmax.f32 %v1462, 0.0
      %v1467 = vmax.f32 %v1463, 0.0
      %v1468 = vmax.f32 %v1464, 0.0
      %v1469 = vmax.f32 %v1465, 0.0
      %v1470 = vld [vmem:[%s14] sm:$0x1]
      %v1472 = vperm.slane %v1470, 0
      %v1474 = vmul.f32 %v1466, %v1472
      %v1475 = vmul.f32 %v1467, %v1472
      %v1476 = vmul.f32 %v1468, %v1472
      %v1477 = vmul.f32 %v1469, %v1472
      %v1478 = vld [vmem:[%s15] sm:$0x1]
      %v1480 = vperm.slane %v1478, 0
      %v1482 = vadd.f32 %v1474, %v1480
      %v1483 = vadd.f32 %v1475, %v1480
      %v1484 = vadd.f32 %v1476, %v1480
      %v1485 = vadd.f32 %v1477, %v1480
      %v1486 = vpack.c.bf16 %v1483, %v1482
      %v1487 = vpack.c.bf16 %v1485, %v1484
      %v1488 = vld [vmem:[%s16] sm:$0xf]
      %v1489 = vld [vmem:[%s16 + $0x4] sm:$0xf]
      %v1490 = vld [vmem:[%s16 + $0x8] sm:$0xf]
      %v1491 = vld [vmem:[%s16 + $0xc] sm:$0xf]
      %v1492 = vld [vmem:[%s16 + $0x10] sm:$0xf]
      %v1493 = vld [vmem:[%s16 + $0x14] sm:$0xf]
      %v1494 = vld [vmem:[%s16 + $0x18] sm:$0xf]
      %v1495 = vld [vmem:[%s16 + $0x1c] sm:$0xf]
      %v1504 = vunpack.c.l.b16 %v1488
      %v1505 = vunpack.c.l.b16 %v1489
      %v1506 = vunpack.c.l.b16 %v1490
      %v1507 = vunpack.c.l.b16 %v1491
      %v1508 = vunpack.c.l.b16 %v1492
      %v1509 = vunpack.c.l.b16 %v1493
      %v1510 = vunpack.c.l.b16 %v1494
      %v1511 = vunpack.c.l.b16 %v1495
      %v1512 = vpack.c.b16 %v1505, %v1504
      %v1513 = vpack.c.b16 %v1507, %v1506
      %v1514 = vpack.c.b16 %v1509, %v1508
      %v1515 = vpack.c.b16 %v1511, %v1510
      %v1521 = vsel %vm712, %v1486, 0
      %v1524 = vsel %vm712, %v1487, 0
      %1526 = vmatpush.bf16.msra.mxu0 0
      %1527 = vmatpush.bf16.msra.mxu0 0
      %1528 = vmatpush.bf16.msra.mxu0 0
      %1529 = vmatpush.bf16.msra.mxu0 0
      %1530 = vmatpush.bf16.msra.mxu0 %v1515
      %1531 = vmatpush.bf16.msra.mxu0 %v1514
      %1532 = vmatpush.bf16.msra.mxu0 %v1513
      %1533 = vmatpush.bf16.msra.mxu0 %v1512
      %1534 = vmatmul.bf16.gmra.mxu0 %v1521
      %v1535 = vpop.f32.mrf.mxu0
      %v1536 = vadd.f32 0.0, %v1535
      %v1537 = vpop.f32.mrf.mxu0
      %v1538 = vadd.f32 0.0, %v1537
      %1539 = vmatmul.bf16.gmra.mxu0 %v1524
      %v1540 = vpop.f32.mrf.mxu0
      %v1541 = vadd.f32 0.0, %v1540
      %v1542 = vpop.f32.mrf.mxu0
      %v1543 = vadd.f32 0.0, %v1542
      %1544 = vdwg.mxu0
      %v1545 = vld [vmem:[%s17] sm:$0xf]
      %v1546 = vld [vmem:[%s17 + $0x4] sm:$0xf]
      %v1547 = vld [vmem:[%s17 + $0x8] sm:$0xf]
      %v1548 = vld [vmem:[%s17 + $0xc] sm:$0xf]
      %v1549 = vld [vmem:[%s17 + $0x10] sm:$0xf]
      %v1550 = vld [vmem:[%s17 + $0x14] sm:$0xf]
      %v1551 = vld [vmem:[%s17 + $0x18] sm:$0xf]
      %v1552 = vld [vmem:[%s17 + $0x1c] sm:$0xf]
      %v1557 = vunpack.c.l.b16 %v655
      %v1558 = vunpack.c.l.b16 %v656
      %v1559 = vunpack.c.l.b16 %v657
      %v1560 = vunpack.c.l.b16 %v658
      %v1561 = vpack.c.b16 %v1558, %v1557
      %v1562 = vpack.c.b16 %v1560, %v1559
      %v1571 = vunpack.c.l.b16 %v1545
      %v1572 = vunpack.c.l.b16 %v1546
      %v1573 = vunpack.c.l.b16 %v1547
      %v1574 = vunpack.c.l.b16 %v1548
      %v1575 = vunpack.c.l.b16 %v1549
      %v1576 = vunpack.c.l.b16 %v1550
      %v1577 = vunpack.c.l.b16 %v1551
      %v1578 = vunpack.c.l.b16 %v1552
      %v1579 = vpack.c.b16 %v1572, %v1571
      %v1580 = vpack.c.b16 %v1574, %v1573
      %v1581 = vpack.c.b16 %v1576, %v1575
      %v1582 = vpack.c.b16 %v1578, %v1577
      %v1588 = vsel %vm712, %v1561, 0
      %v1591 = vsel %vm712, %v1562, 0
      %1593 = vmatpush.bf16.msra.mxu0 0
      %1594 = vmatpush.bf16.msra.mxu0 0
      %1595 = vmatpush.bf16.msra.mxu0 0
      %1596 = vmatpush.bf16.msra.mxu0 0
      %1597 = vmatpush.bf16.msra.mxu0 %v1582
      %1598 = vmatpush.bf16.msra.mxu0 %v1581
      %1599 = vmatpush.bf16.msra.mxu0 %v1580
      %1600 = vmatpush.bf16.msra.mxu0 %v1579
      %1601 = vmatmul.bf16.gmra.mxu0 %v1588
      %v1602 = vpop.f32.mrf.mxu0
      %v1603 = vadd.f32 0.0, %v1602
      %v1604 = vpop.f32.mrf.mxu0
      %v1605 = vadd.f32 0.0, %v1604
      %1606 = vmatmul.bf16.gmra.mxu0 %v1591
      %v1607 = vpop.f32.mrf.mxu0
      %v1608 = vadd.f32 0.0, %v1607
      %v1609 = vpop.f32.mrf.mxu0
      %v1610 = vadd.f32 0.0, %v1609
      %1611 = vdwg.mxu0
      %v1612 = vld [vmem:[%s18] sm:$0xf]
      %v1613 = vld [vmem:[%s18 + $0x4] sm:$0xf]
      %v1614 = vld [vmem:[%s18 + $0x8] sm:$0xf]
      %v1615 = vld [vmem:[%s18 + $0xc] sm:$0xf]
      %v1616 = vld [vmem:[%s18 + $0x10] sm:$0xf]
      %v1617 = vld [vmem:[%s18 + $0x14] sm:$0xf]
      %v1618 = vld [vmem:[%s18 + $0x18] sm:$0xf]
      %v1619 = vld [vmem:[%s18 + $0x1c] sm:$0xf]
      %v1628 = vunpack.c.l.b16 %v1612
      %v1629 = vunpack.c.l.b16 %v1613
      %v1630 = vunpack.c.l.b16 %v1614
      %v1631 = vunpack.c.l.b16 %v1615
      %v1632 = vunpack.c.l.b16 %v1616
      %v1633 = vunpack.c.l.b16 %v1617
      %v1634 = vunpack.c.l.b16 %v1618
      %v1635 = vunpack.c.l.b16 %v1619
      %v1636 = vpack.c.b16 %v1629, %v1628
      %v1637 = vpack.c.b16 %v1631, %v1630
      %v1638 = vpack.c.b16 %v1633, %v1632
      %v1639 = vpack.c.b16 %v1635, %v1634
      %1644 = vmatpush.bf16.msra.mxu0 0
      %1645 = vmatpush.bf16.msra.mxu0 0
      %1646 = vmatpush.bf16.msra.mxu0 0
      %1647 = vmatpush.bf16.msra.mxu0 0
      %1648 = vmatpush.bf16.msra.mxu0 %v1639
      %1649 = vmatpush.bf16.msra.mxu0 %v1638
      %1650 = vmatpush.bf16.msra.mxu0 %v1637
      %1651 = vmatpush.bf16.msra.mxu0 %v1636
      %1652 = vmatmul.bf16.gmra.mxu0 %v1588
      %v1653 = vpop.f32.mrf.mxu0
      %v1654 = vadd.f32 0.0, %v1653
      %v1655 = vpop.f32.mrf.mxu0
      %v1656 = vadd.f32 0.0, %v1655
      %1657 = vmatmul.bf16.gmra.mxu0 %v1591
      %v1658 = vpop.f32.mrf.mxu0
      %v1659 = vadd.f32 0.0, %v1658
      %v1660 = vpop.f32.mrf.mxu0
      %v1661 = vadd.f32 0.0, %v1660
      %1662 = vdwg.mxu0
      %v1663 = vpack.c.bf16 %v1538, %v1536
      %v1664 = vpack.c.bf16 %v1543, %v1541
      %v1665 = vpack.c.bf16 %v1605, %v1603
      %v1666 = vpack.c.bf16 %v1610, %v1608
      %vm1667 = vcmask 130048
      %v1669 = vsel %vm1667, %v1663, 0
      %v1672 = vsel %vm1667, %v1664, 0
      %v1675 = vsel %vm1667, %v1665, 0
      %v1678 = vsel %vm1667, %v1666, 0
      %1680 = vmatpush.bf16.xpose.msra.mxu0 0
      %1681 = vmatpush.bf16.xpose.msra.mxu0 0
      %1682 = vmatpush.bf16.xpose.msra.mxu0 0
      %1683 = vmatpush.bf16.xpose.msra.mxu0 0
      %1684 = vmatpush.bf16.xpose.msra.mxu0 0
      %1685 = vmatpush.bf16.xpose.msra.mxu0 0
      %1686 = vmatpush.bf16.xpose.msra.mxu0 %v1678
      %1687 = vmatpush.bf16.xpose.msra.mxu0 %v1675
      %1688 = vmatmul.bf16.gmra.mxu0 %v1669
      %v1689 = vpop.f32.mrf.mxu0
      %v1690 = vadd.f32 0.0, %v1689
      %v1691 = vpop.f32.mrf.mxu0
      %v1692 = vadd.f32 0.0, %v1691
      %1693 = vmatmul.bf16.gmra.mxu0 %v1672
      %v1694 = vpop.f32.mrf.mxu0
      %v1695 = vadd.f32 0.0, %v1694
      %v1696 = vpop.f32.mrf.mxu0
      %v1697 = vadd.f32 0.0, %v1696
      %1698 = vdwg.mxu0
      %vm1699 = vcmask 261120
      %v1700 = vsel %vm1699, %v1690, -inf
      %1701 = vmax.xlane.f32.xlu0 %v1700
      %v1702 = vpop.xlane.xlu0 %1701
      %v1703 = vsel %vm1699, %v1692, -inf
      %1704 = vmax.xlane.f32.xlu0 %v1703
      %v1705 = vpop.xlane.xlu0 %1704
      %v1706 = vsel %vm1699, %v1695, -inf
      %1707 = vmax.xlane.f32.xlu0 %v1706
      %v1708 = vpop.xlane.xlu0 %1707
      %v1709 = vsel %vm1699, %v1697, -inf
      %1710 = vmax.xlane.f32.xlu0 %v1709
      %v1711 = vpop.xlane.xlu0 %1710
      %v1712 = vsub.f32 %v1690, %v1702
      %v1713 = vsub.f32 %v1692, %v1705
      %v1714 = vsub.f32 %v1695, %v1708
      %v1715 = vsub.f32 %v1697, %v1711
      %v1716 = vmul.f32 %v1712, 1.442695
      %v1717 = vpow.pop %v1716
      %v1718 = vmul.f32 %v1713, 1.442695
      %v1719 = vpow.pop %v1718
      %v1720 = vmul.f32 %v1714, 1.442695
      %v1721 = vpow.pop %v1720
      %v1722 = vmul.f32 %v1715, 1.442695
      %v1723 = vpow.pop %v1722
      %v1724 = vsel %vm1699, %v1717, 0.0
      %1725 = vadd.xlane.f32.xlu0 %v1724
      %v1726 = vpop.xlane.xlu0 %1725
      %v1727 = vsel %vm1699, %v1719, 0.0
      %1728 = vadd.xlane.f32.xlu0 %v1727
      %v1729 = vpop.xlane.xlu0 %1728
      %v1730 = vsel %vm1699, %v1721, 0.0
      %1731 = vadd.xlane.f32.xlu0 %v1730
      %v1732 = vpop.xlane.xlu0 %1731
      %v1733 = vsel %vm1699, %v1723, 0.0
      %1734 = vadd.xlane.f32.xlu0 %v1733
      %v1735 = vpop.xlane.xlu0 %1734
      %v1736 = vrcp.pop %v1726
      %v1737 = vrcp.pop %v1729
      %v1738 = vrcp.pop %v1732
      %v1739 = vrcp.pop %v1735
      %v1740 = vmul.f32 %v1717, %v1736
      %v1741 = vmul.f32 %v1719, %v1737
      %v1742 = vmul.f32 %v1721, %v1738
      %v1743 = vmul.f32 %v1723, %v1739
      %v1744 = vpack.c.bf16 %v1741, %v1740
      %v1745 = vpack.c.bf16 %v1743, %v1742
      %v1746 = vpack.c.bf16 %v1656, %v1654
      %v1747 = vpack.c.bf16 %v1661, %v1659
      %v1749 = vsel %vm1699, %v1744, 0
      %v1752 = vsel %vm1699, %v1745, 0
      %1754 = vmatpush.bf16.msra.mxu0 0
      %1755 = vmatpush.bf16.msra.mxu0 0
      %1756 = vmatpush.bf16.msra.mxu0 0
      %1757 = vmatpush.bf16.msra.mxu0 0
      %1758 = vmatpush.bf16.msra.mxu0 0
      %1759 = vmatpush.bf16.msra.mxu0 0
      %1760 = vmatpush.bf16.msra.mxu0 %v1747
      %1761 = vmatpush.bf16.msra.mxu0 %v1746
      %1762 = vmatmul.bf16.gmra.mxu0 %v1749
      %v1763 = vpop.f32.mrf.mxu0
      %v1764 = vadd.f32 0.0, %v1763
      %v1765 = vpop.f32.mrf.mxu0
      %v1766 = vadd.f32 0.0, %v1765
      %1767 = vmatmul.bf16.gmra.mxu0 %v1752
      %v1768 = vpop.f32.mrf.mxu0
      %v1769 = vadd.f32 0.0, %v1768
      %v1770 = vpop.f32.mrf.mxu0
      %v1771 = vadd.f32 0.0, %v1770
      %1772 = vdwg.mxu0
      %v1773 = vpack.c.bf16 %v1766, %v1764
      %v1774 = vpack.c.bf16 %v1771, %v1769
      %v1775 = vld [vmem:[%s19] sm:$0xf]
      %v1776 = vld [vmem:[%s19 + $0x4] sm:$0xf]
      %s1777 = scalar_lea.vmem %s16, 32
      %v1778 = vld [vmem:[%s1777] sm:$0xf]
      %v1779 = vld [vmem:[%s1777 + $0x4] sm:$0xf]
      %v1780 = vld [vmem:[%s1777 + $0x8] sm:$0xf]
      %v1781 = vld [vmem:[%s1777 + $0xc] sm:$0xf]
      %v1782 = vld [vmem:[%s1777 + $0x10] sm:$0xf]
      %v1783 = vld [vmem:[%s1777 + $0x14] sm:$0xf]
      %v1784 = vld [vmem:[%s1777 + $0x18] sm:$0xf]
      %v1785 = vld [vmem:[%s1777 + $0x1c] sm:$0xf]
      %v1794 = vunpack.c.l.b16 %v1778
      %v1795 = vunpack.c.l.b16 %v1779
      %v1796 = vunpack.c.l.b16 %v1780
      %v1797 = vunpack.c.l.b16 %v1781
      %v1798 = vunpack.c.l.b16 %v1782
      %v1799 = vunpack.c.l.b16 %v1783
      %v1800 = vunpack.c.l.b16 %v1784
      %v1801 = vunpack.c.l.b16 %v1785
      %v1802 = vpack.c.b16 %v1795, %v1794
      %v1803 = vpack.c.b16 %v1797, %v1796
      %v1804 = vpack.c.b16 %v1799, %v1798
      %v1805 = vpack.c.b16 %v1801, %v1800
      %1810 = vmatpush.bf16.msra.mxu0 0
      %1811 = vmatpush.bf16.msra.mxu0 0
      %1812 = vmatpush.bf16.msra.mxu0 0
      %1813 = vmatpush.bf16.msra.mxu0 0
      %1814 = vmatpush.bf16.msra.mxu0 %v1805
      %1815 = vmatpush.bf16.msra.mxu0 %v1804
      %1816 = vmatpush.bf16.msra.mxu0 %v1803
      %1817 = vmatpush.bf16.msra.mxu0 %v1802
      %1818 = vmatmul.bf16.gmra.mxu0 %v1521
      %v1819 = vpop.f32.mrf.mxu0
      %v1820 = vadd.f32 0.0, %v1819
      %v1821 = vpop.f32.mrf.mxu0
      %v1822 = vadd.f32 0.0, %v1821
      %1823 = vmatmul.bf16.gmra.mxu0 %v1524
      %v1824 = vpop.f32.mrf.mxu0
      %v1825 = vadd.f32 0.0, %v1824
      %v1826 = vpop.f32.mrf.mxu0
      %v1827 = vadd.f32 0.0, %v1826
      %1828 = vdwg.mxu0
      %s1829 = scalar_lea.vmem %s17, 32
      %v1830 = vld [vmem:[%s1829] sm:$0xf]
      %v1831 = vld [vmem:[%s1829 + $0x4] sm:$0xf]
      %v1832 = vld [vmem:[%s1829 + $0x8] sm:$0xf]
      %v1833 = vld [vmem:[%s1829 + $0xc] sm:$0xf]
      %v1834 = vld [vmem:[%s1829 + $0x10] sm:$0xf]
      %v1835 = vld [vmem:[%s1829 + $0x14] sm:$0xf]
      %v1836 = vld [vmem:[%s1829 + $0x18] sm:$0xf]
      %v1837 = vld [vmem:[%s1829 + $0x1c] sm:$0xf]
      %v1846 = vunpack.c.l.b16 %v1830
      %v1847 = vunpack.c.l.b16 %v1831
      %v1848 = vunpack.c.l.b16 %v1832
      %v1849 = vunpack.c.l.b16 %v1833
      %v1850 = vunpack.c.l.b16 %v1834
      %v1851 = vunpack.c.l.b16 %v1835
      %v1852 = vunpack.c.l.b16 %v1836
      %v1853 = vunpack.c.l.b16 %v1837
      %v1854 = vpack.c.b16 %v1847, %v1846
      %v1855 = vpack.c.b16 %v1849, %v1848
      %v1856 = vpack.c.b16 %v1851, %v1850
      %v1857 = vpack.c.b16 %v1853, %v1852
      %1862 = vmatpush.bf16.msra.mxu0 0
      %1863 = vmatpush.bf16.msra.mxu0 0
      %1864 = vmatpush.bf16.msra.mxu0 0
      %1865 = vmatpush.bf16.msra.mxu0 0
      %1866 = vmatpush.bf16.msra.mxu0 %v1857
      %1867 = vmatpush.bf16.msra.mxu0 %v1856
      %1868 = vmatpush.bf16.msra.mxu0 %v1855
      %1869 = vmatpush.bf16.msra.mxu0 %v1854
      %1870 = vmatmul.bf16.gmra.mxu0 %v1588
      %v1871 = vpop.f32.mrf.mxu0
      %v1872 = vadd.f32 0.0, %v1871
      %v1873 = vpop.f32.mrf.mxu0
      %v1874 = vadd.f32 0.0, %v1873
      %1875 = vmatmul.bf16.gmra.mxu0 %v1591
      %v1876 = vpop.f32.mrf.mxu0
      %v1877 = vadd.f32 0.0, %v1876
      %v1878 = vpop.f32.mrf.mxu0
      %v1879 = vadd.f32 0.0, %v1878
      %1880 = vdwg.mxu0
      %s1881 = scalar_lea.vmem %s18, 32
      %v1882 = vld [vmem:[%s1881] sm:$0xf]
      %v1883 = vld [vmem:[%s1881 + $0x4] sm:$0xf]
      %v1884 = vld [vmem:[%s1881 + $0x8] sm:$0xf]
      %v1885 = vld [vmem:[%s1881 + $0xc] sm:$0xf]
      %v1886 = vld [vmem:[%s1881 + $0x10] sm:$0xf]
      %v1887 = vld [vmem:[%s1881 + $0x14] sm:$0xf]
      %v1888 = vld [vmem:[%s1881 + $0x18] sm:$0xf]
      %v1889 = vld [vmem:[%s1881 + $0x1c] sm:$0xf]
      %v1898 = vunpack.c.l.b16 %v1882
      %v1899 = vunpack.c.l.b16 %v1883
      %v1900 = vunpack.c.l.b16 %v1884
      %v1901 = vunpack.c.l.b16 %v1885
      %v1902 = vunpack.c.l.b16 %v1886
      %v1903 = vunpack.c.l.b16 %v1887
      %v1904 = vunpack.c.l.b16 %v1888
      %v1905 = vunpack.c.l.b16 %v1889
      %v1906 = vpack.c.b16 %v1899, %v1898
      %v1907 = vpack.c.b16 %v1901, %v1900
      %v1908 = vpack.c.b16 %v1903, %v1902
      %v1909 = vpack.c.b16 %v1905, %v1904
      %1914 = vmatpush.bf16.msra.mxu0 0
      %1915 = vmatpush.bf16.msra.mxu0 0
      %1916 = vmatpush.bf16.msra.mxu0 0
      %1917 = vmatpush.bf16.msra.mxu0 0
      %1918 = vmatpush.bf16.msra.mxu0 %v1909
      %1919 = vmatpush.bf16.msra.mxu0 %v1908
      %1920 = vmatpush.bf16.msra.mxu0 %v1907
      %1921 = vmatpush.bf16.msra.mxu0 %v1906
      %1922 = vmatmul.bf16.gmra.mxu0 %v1588
      %v1923 = vpop.f32.mrf.mxu0
      %v1924 = vadd.f32 0.0, %v1923
      %v1925 = vpop.f32.mrf.mxu0
      %v1926 = vadd.f32 0.0, %v1925
      %1927 = vmatmul.bf16.gmra.mxu0 %v1591
      %v1928 = vpop.f32.mrf.mxu0
      %v1929 = vadd.f32 0.0, %v1928
      %v1930 = vpop.f32.mrf.mxu0
      %v1931 = vadd.f32 0.0, %v1930
      %1932 = vdwg.mxu0
      %v1933 = vpack.c.bf16 %v1822, %v1820
      %v1934 = vpack.c.bf16 %v1827, %v1825
      %v1935 = vpack.c.bf16 %v1874, %v1872
      %v1936 = vpack.c.bf16 %v1879, %v1877
      %v1938 = vsel %vm1667, %v1933, 0
      %v1941 = vsel %vm1667, %v1934, 0
      %v1944 = vsel %vm1667, %v1935, 0
      %v1947 = vsel %vm1667, %v1936, 0
      %1949 = vmatpush.bf16.xpose.msra.mxu0 0
      %1950 = vmatpush.bf16.xpose.msra.mxu0 0
      %1951 = vmatpush.bf16.xpose.msra.mxu0 0
      %1952 = vmatpush.bf16.xpose.msra.mxu0 0
      %1953 = vmatpush.bf16.xpose.msra.mxu0 0
      %1954 = vmatpush.bf16.xpose.msra.mxu0 0
      %1955 = vmatpush.bf16.xpose.msra.mxu0 %v1947
      %1956 = vmatpush.bf16.xpose.msra.mxu0 %v1944
      %1957 = vmatmul.bf16.gmra.mxu0 %v1938
      %v1958 = vpop.f32.mrf.mxu0
      %v1959 = vadd.f32 0.0, %v1958
      %v1960 = vpop.f32.mrf.mxu0
      %v1961 = vadd.f32 0.0, %v1960
      %1962 = vmatmul.bf16.gmra.mxu0 %v1941
      %v1963 = vpop.f32.mrf.mxu0
      %v1964 = vadd.f32 0.0, %v1963
      %v1965 = vpop.f32.mrf.mxu0
      %v1966 = vadd.f32 0.0, %v1965
      %1967 = vdwg.mxu0
      %v1968 = vsel %vm1699, %v1959, -inf
      %1969 = vmax.xlane.f32.xlu0 %v1968
      %v1970 = vpop.xlane.xlu0 %1969
      %v1971 = vsel %vm1699, %v1961, -inf
      %1972 = vmax.xlane.f32.xlu0 %v1971
      %v1973 = vpop.xlane.xlu0 %1972
      %v1974 = vsel %vm1699, %v1964, -inf
      %1975 = vmax.xlane.f32.xlu0 %v1974
      %v1976 = vpop.xlane.xlu0 %1975
      %v1977 = vsel %vm1699, %v1966, -inf
      %1978 = vmax.xlane.f32.xlu0 %v1977
      %v1979 = vpop.xlane.xlu0 %1978
      %v1980 = vsub.f32 %v1959, %v1970
      %v1981 = vsub.f32 %v1961, %v1973
      %v1982 = vsub.f32 %v1964, %v1976
      %v1983 = vsub.f32 %v1966, %v1979
      %v1984 = vmul.f32 %v1980, 1.442695
      %v1985 = vpow.pop %v1984
      %v1986 = vmul.f32 %v1981, 1.442695
      %v1987 = vpow.pop %v1986
      %v1988 = vmul.f32 %v1982, 1.442695
      %v1989 = vpow.pop %v1988
      %v1990 = vmul.f32 %v1983, 1.442695
      %v1991 = vpow.pop %v1990
      %v1992 = vsel %vm1699, %v1985, 0.0
      %1993 = vadd.xlane.f32.xlu0 %v1992
      %v1994 = vpop.xlane.xlu0 %1993
      %v1995 = vsel %vm1699, %v1987, 0.0
      %1996 = vadd.xlane.f32.xlu0 %v1995
      %v1997 = vpop.xlane.xlu0 %1996
      %v1998 = vsel %vm1699, %v1989, 0.0
      %1999 = vadd.xlane.f32.xlu0 %v1998
      %v2000 = vpop.xlane.xlu0 %1999
      %v2001 = vsel %vm1699, %v1991, 0.0
      %2002 = vadd.xlane.f32.xlu0 %v2001
      %v2003 = vpop.xlane.xlu0 %2002
      %v2004 = vrcp.pop %v1994
      %v2005 = vrcp.pop %v1997
      %v2006 = vrcp.pop %v2000
      %v2007 = vrcp.pop %v2003
      %v2008 = vmul.f32 %v1985, %v2004
      %v2009 = vmul.f32 %v1987, %v2005
      %v2010 = vmul.f32 %v1989, %v2006
      %v2011 = vmul.f32 %v1991, %v2007
      %v2012 = vpack.c.bf16 %v2009, %v2008
      %v2013 = vpack.c.bf16 %v2011, %v2010
      %v2014 = vpack.c.bf16 %v1926, %v1924
      %v2015 = vpack.c.bf16 %v1931, %v1929
      %v2017 = vsel %vm1699, %v2012, 0
      %v2020 = vsel %vm1699, %v2013, 0
      %2022 = vmatpush.bf16.msra.mxu0 0
      %2023 = vmatpush.bf16.msra.mxu0 0
      %2024 = vmatpush.bf16.msra.mxu0 0
      %2025 = vmatpush.bf16.msra.mxu0 0
      %2026 = vmatpush.bf16.msra.mxu0 0
      %2027 = vmatpush.bf16.msra.mxu0 0
      %2028 = vmatpush.bf16.msra.mxu0 %v2015
      %2029 = vmatpush.bf16.msra.mxu0 %v2014
      %2030 = vmatmul.bf16.gmra.mxu0 %v2017
      %v2031 = vpop.f32.mrf.mxu0
      %v2032 = vadd.f32 0.0, %v2031
      %v2033 = vpop.f32.mrf.mxu0
      %v2034 = vadd.f32 0.0, %v2033
      %2035 = vmatmul.bf16.gmra.mxu0 %v2020
      %v2036 = vpop.f32.mrf.mxu0
      %v2037 = vadd.f32 0.0, %v2036
      %v2038 = vpop.f32.mrf.mxu0
      %v2039 = vadd.f32 0.0, %v2038
      %2040 = vdwg.mxu0
      %v2041 = vpack.c.bf16 %v2034, %v2032
      %v2042 = vpack.c.bf16 %v2039, %v2037
      %s2043 = scalar_lea.vmem %s19, 8
      %v2044 = vld [vmem:[%s2043] sm:$0xf]
      %v2045 = vld [vmem:[%s2043 + $0x4] sm:$0xf]
      %v2048 = vunpack.c.l.b16 %v2044
      %v2049 = vunpack.c.l.b16 %v2045
      %v2050 = vpack.c.b16 %v2049, %v2048
      %v2053 = vsel %vm1667, %v2041, 0
      %v2056 = vsel %vm1667, %v2042, 0
      %2058 = vmatpush.bf16.msra.mxu0 0
      %2059 = vmatpush.bf16.msra.mxu0 0
      %2060 = vmatpush.bf16.msra.mxu0 0
      %2061 = vmatpush.bf16.msra.mxu0 0
      %2062 = vmatpush.bf16.msra.mxu0 0
      %2063 = vmatpush.bf16.msra.mxu0 0
      %2064 = vmatpush.bf16.msra.mxu0 0
      %2065 = vmatpush.bf16.msra.mxu0 %v2050
      %2066 = vmatmul.bf16.gmra.mxu0 %v2053
      %v2067 = vpop.f32.mrf.mxu0
      %v2068 = vadd.f32 0.0, %v2067
      %v2069 = vpop.f32.mrf.mxu0
      %v2070 = vadd.f32 0.0, %v2069
      %2071 = vmatmul.bf16.gmra.mxu0 %v2056
      %v2072 = vpop.f32.mrf.mxu0
      %v2073 = vadd.f32 0.0, %v2072
      %v2074 = vpop.f32.mrf.mxu0
      %v2075 = vadd.f32 0.0, %v2074
      %2076 = vdwg.mxu0
      %v2079 = vunpack.c.l.b16 %v1775
      %v2080 = vunpack.c.l.b16 %v1776
      %v2081 = vpack.c.b16 %v2080, %v2079
      %v2084 = vsel %vm1667, %v1773, 0
      %v2087 = vsel %vm1667, %v1774, 0
      %2089 = vmatpush.bf16.msra.mxu0 0
      %2090 = vmatpush.bf16.msra.mxu0 0
      %2091 = vmatpush.bf16.msra.mxu0 0
      %2092 = vmatpush.bf16.msra.mxu0 0
      %2093 = vmatpush.bf16.msra.mxu0 0
      %2094 = vmatpush.bf16.msra.mxu0 0
      %2095 = vmatpush.bf16.msra.mxu0 0
      %2096 = vmatpush.bf16.msra.mxu0 %v2081
      %2097 = vmatmul.bf16.gmra.mxu0 %v2084
      %v2098 = vpop.f32.mrf.mxu0
      %v2099 = vadd.f32 %v2068, %v2098
      %v2100 = vpop.f32.mrf.mxu0
      %v2101 = vadd.f32 %v2070, %v2100
      %2102 = vmatmul.bf16.gmra.mxu0 %v2087
      %v2103 = vpop.f32.mrf.mxu0
      %v2104 = vadd.f32 %v2073, %v2103
      %v2105 = vpop.f32.mrf.mxu0
      %v2106 = vadd.f32 %v2075, %v2105
      %2107 = vdwg.mxu0
      %s2108 = scalar_lea.vmem %s16, 64
      %v2109 = vld [vmem:[%s2108] sm:$0xf]
      %v2110 = vld [vmem:[%s2108 + $0x4] sm:$0xf]
      %v2111 = vld [vmem:[%s2108 + $0x8] sm:$0xf]
      %v2112 = vld [vmem:[%s2108 + $0xc] sm:$0xf]
      %v2113 = vld [vmem:[%s2108 + $0x10] sm:$0xf]
      %v2114 = vld [vmem:[%s2108 + $0x14] sm:$0xf]
      %v2115 = vld [vmem:[%s2108 + $0x18] sm:$0xf]
      %v2116 = vld [vmem:[%s2108 + $0x1c] sm:$0xf]
      %v2125 = vunpack.c.l.b16 %v2109
      %v2126 = vunpack.c.l.b16 %v2110
      %v2127 = vunpack.c.l.b16 %v2111
      %v2128 = vunpack.c.l.b16 %v2112
      %v2129 = vunpack.c.l.b16 %v2113
      %v2130 = vunpack.c.l.b16 %v2114
      %v2131 = vunpack.c.l.b16 %v2115
      %v2132 = vunpack.c.l.b16 %v2116
      %v2133 = vpack.c.b16 %v2126, %v2125
      %v2134 = vpack.c.b16 %v2128, %v2127
      %v2135 = vpack.c.b16 %v2130, %v2129
      %v2136 = vpack.c.b16 %v2132, %v2131
      %2141 = vmatpush.bf16.msra.mxu0 0
      %2142 = vmatpush.bf16.msra.mxu0 0
      %2143 = vmatpush.bf16.msra.mxu0 0
      %2144 = vmatpush.bf16.msra.mxu0 0
      %2145 = vmatpush.bf16.msra.mxu0 %v2136
      %2146 = vmatpush.bf16.msra.mxu0 %v2135
      %2147 = vmatpush.bf16.msra.mxu0 %v2134
      %2148 = vmatpush.bf16.msra.mxu0 %v2133
      %2149 = vmatmul.bf16.gmra.mxu0 %v1521
      %v2150 = vpop.f32.mrf.mxu0
      %v2151 = vadd.f32 0.0, %v2150
      %v2152 = vpop.f32.mrf.mxu0
      %v2153 = vadd.f32 0.0, %v2152
      %2154 = vmatmul.bf16.gmra.mxu0 %v1524
      %v2155 = vpop.f32.mrf.mxu0
      %v2156 = vadd.f32 0.0, %v2155
      %v2157 = vpop.f32.mrf.mxu0
      %v2158 = vadd.f32 0.0, %v2157
      %2159 = vdwg.mxu0
      %s2160 = scalar_lea.vmem %s17, 64
      %v2161 = vld [vmem:[%s2160] sm:$0xf]
      %v2162 = vld [vmem:[%s2160 + $0x4] sm:$0xf]
      %v2163 = vld [vmem:[%s2160 + $0x8] sm:$0xf]
      %v2164 = vld [vmem:[%s2160 + $0xc] sm:$0xf]
      %v2165 = vld [vmem:[%s2160 + $0x10] sm:$0xf]
      %v2166 = vld [vmem:[%s2160 + $0x14] sm:$0xf]
      %v2167 = vld [vmem:[%s2160 + $0x18] sm:$0xf]
      %v2168 = vld [vmem:[%s2160 + $0x1c] sm:$0xf]
      %v2177 = vunpack.c.l.b16 %v2161
      %v2178 = vunpack.c.l.b16 %v2162
      %v2179 = vunpack.c.l.b16 %v2163
      %v2180 = vunpack.c.l.b16 %v2164
      %v2181 = vunpack.c.l.b16 %v2165
      %v2182 = vunpack.c.l.b16 %v2166
      %v2183 = vunpack.c.l.b16 %v2167
      %v2184 = vunpack.c.l.b16 %v2168
      %v2185 = vpack.c.b16 %v2178, %v2177
      %v2186 = vpack.c.b16 %v2180, %v2179
      %v2187 = vpack.c.b16 %v2182, %v2181
      %v2188 = vpack.c.b16 %v2184, %v2183
      %2193 = vmatpush.bf16.msra.mxu0 0
      %2194 = vmatpush.bf16.msra.mxu0 0
      %2195 = vmatpush.bf16.msra.mxu0 0
      %2196 = vmatpush.bf16.msra.mxu0 0
      %2197 = vmatpush.bf16.msra.mxu0 %v2188
      %2198 = vmatpush.bf16.msra.mxu0 %v2187
      %2199 = vmatpush.bf16.msra.mxu0 %v2186
      %2200 = vmatpush.bf16.msra.mxu0 %v2185
      %2201 = vmatmul.bf16.gmra.mxu0 %v1588
      %v2202 = vpop.f32.mrf.mxu0
      %v2203 = vadd.f32 0.0, %v2202
      %v2204 = vpop.f32.mrf.mxu0
      %v2205 = vadd.f32 0.0, %v2204
      %2206 = vmatmul.bf16.gmra.mxu0 %v1591
      %v2207 = vpop.f32.mrf.mxu0
      %v2208 = vadd.f32 0.0, %v2207
      %v2209 = vpop.f32.mrf.mxu0
      %v2210 = vadd.f32 0.0, %v2209
      %2211 = vdwg.mxu0
      %s2212 = scalar_lea.vmem %s18, 64
      %v2213 = vld [vmem:[%s2212] sm:$0xf]
      %v2214 = vld [vmem:[%s2212 + $0x4] sm:$0xf]
      %v2215 = vld [vmem:[%s2212 + $0x8] sm:$0xf]
      %v2216 = vld [vmem:[%s2212 + $0xc] sm:$0xf]
      %v2217 = vld [vmem:[%s2212 + $0x10] sm:$0xf]
      %v2218 = vld [vmem:[%s2212 + $0x14] sm:$0xf]
      %v2219 = vld [vmem:[%s2212 + $0x18] sm:$0xf]
      %v2220 = vld [vmem:[%s2212 + $0x1c] sm:$0xf]
      %v2229 = vunpack.c.l.b16 %v2213
      %v2230 = vunpack.c.l.b16 %v2214
      %v2231 = vunpack.c.l.b16 %v2215
      %v2232 = vunpack.c.l.b16 %v2216
      %v2233 = vunpack.c.l.b16 %v2217
      %v2234 = vunpack.c.l.b16 %v2218
      %v2235 = vunpack.c.l.b16 %v2219
      %v2236 = vunpack.c.l.b16 %v2220
      %v2237 = vpack.c.b16 %v2230, %v2229
      %v2238 = vpack.c.b16 %v2232, %v2231
      %v2239 = vpack.c.b16 %v2234, %v2233
      %v2240 = vpack.c.b16 %v2236, %v2235
      %2245 = vmatpush.bf16.msra.mxu0 0
      %2246 = vmatpush.bf16.msra.mxu0 0
      %2247 = vmatpush.bf16.msra.mxu0 0
      %2248 = vmatpush.bf16.msra.mxu0 0
      %2249 = vmatpush.bf16.msra.mxu0 %v2240
      %2250 = vmatpush.bf16.msra.mxu0 %v2239
      %2251 = vmatpush.bf16.msra.mxu0 %v2238
      %2252 = vmatpush.bf16.msra.mxu0 %v2237
      %2253 = vmatmul.bf16.gmra.mxu0 %v1588
      %v2254 = vpop.f32.mrf.mxu0
      %v2255 = vadd.f32 0.0, %v2254
      %v2256 = vpop.f32.mrf.mxu0
      %v2257 = vadd.f32 0.0, %v2256
      %2258 = vmatmul.bf16.gmra.mxu0 %v1591
      %v2259 = vpop.f32.mrf.mxu0
      %v2260 = vadd.f32 0.0, %v2259
      %v2261 = vpop.f32.mrf.mxu0
      %v2262 = vadd.f32 0.0, %v2261
      %2263 = vdwg.mxu0
      %v2264 = vpack.c.bf16 %v2153, %v2151
      %v2265 = vpack.c.bf16 %v2158, %v2156
      %v2266 = vpack.c.bf16 %v2205, %v2203
      %v2267 = vpack.c.bf16 %v2210, %v2208
      %v2269 = vsel %vm1667, %v2264, 0
      %v2272 = vsel %vm1667, %v2265, 0
      %v2275 = vsel %vm1667, %v2266, 0
      %v2278 = vsel %vm1667, %v2267, 0
      %2280 = vmatpush.bf16.xpose.msra.mxu0 0
      %2281 = vmatpush.bf16.xpose.msra.mxu0 0
      %2282 = vmatpush.bf16.xpose.msra.mxu0 0
      %2283 = vmatpush.bf16.xpose.msra.mxu0 0
      %2284 = vmatpush.bf16.xpose.msra.mxu0 0
      %2285 = vmatpush.bf16.xpose.msra.mxu0 0
      %2286 = vmatpush.bf16.xpose.msra.mxu0 %v2278
      %2287 = vmatpush.bf16.xpose.msra.mxu0 %v2275
      %2288 = vmatmul.bf16.gmra.mxu0 %v2269
      %v2289 = vpop.f32.mrf.mxu0
      %v2290 = vadd.f32 0.0, %v2289
      %v2291 = vpop.f32.mrf.mxu0
      %v2292 = vadd.f32 0.0, %v2291
      %2293 = vmatmul.bf16.gmra.mxu0 %v2272
      %v2294 = vpop.f32.mrf.mxu0
      %v2295 = vadd.f32 0.0, %v2294
      %v2296 = vpop.f32.mrf.mxu0
      %v2297 = vadd.f32 0.0, %v2296
      %2298 = vdwg.mxu0
      %v2299 = vsel %vm1699, %v2290, -inf
      %2300 = vmax.xlane.f32.xlu0 %v2299
      %v2301 = vpop.xlane.xlu0 %2300
      %v2302 = vsel %vm1699, %v2292, -inf
      %2303 = vmax.xlane.f32.xlu0 %v2302
      %v2304 = vpop.xlane.xlu0 %2303
      %v2305 = vsel %vm1699, %v2295, -inf
      %2306 = vmax.xlane.f32.xlu0 %v2305
      %v2307 = vpop.xlane.xlu0 %2306
      %v2308 = vsel %vm1699, %v2297, -inf
      %2309 = vmax.xlane.f32.xlu0 %v2308
      %v2310 = vpop.xlane.xlu0 %2309
      %v2311 = vsub.f32 %v2290, %v2301
      %v2312 = vsub.f32 %v2292, %v2304
      %v2313 = vsub.f32 %v2295, %v2307
      %v2314 = vsub.f32 %v2297, %v2310
      %v2315 = vmul.f32 %v2311, 1.442695
      %v2316 = vpow.pop %v2315
      %v2317 = vmul.f32 %v2312, 1.442695
      %v2318 = vpow.pop %v2317
      %v2319 = vmul.f32 %v2313, 1.442695
      %v2320 = vpow.pop %v2319
      %v2321 = vmul.f32 %v2314, 1.442695
      %v2322 = vpow.pop %v2321
      %v2323 = vsel %vm1699, %v2316, 0.0
      %2324 = vadd.xlane.f32.xlu0 %v2323
      %v2325 = vpop.xlane.xlu0 %2324
      %v2326 = vsel %vm1699, %v2318, 0.0
      %2327 = vadd.xlane.f32.xlu0 %v2326
      %v2328 = vpop.xlane.xlu0 %2327
      %v2329 = vsel %vm1699, %v2320, 0.0
      %2330 = vadd.xlane.f32.xlu0 %v2329
      %v2331 = vpop.xlane.xlu0 %2330
      %v2332 = vsel %vm1699, %v2322, 0.0
      %2333 = vadd.xlane.f32.xlu0 %v2332
      %v2334 = vpop.xlane.xlu0 %2333
      %v2335 = vrcp.pop %v2325
      %v2336 = vrcp.pop %v2328
      %v2337 = vrcp.pop %v2331
      %v2338 = vrcp.pop %v2334
      %v2339 = vmul.f32 %v2316, %v2335
      %v2340 = vmul.f32 %v2318, %v2336
      %v2341 = vmul.f32 %v2320, %v2337
      %v2342 = vmul.f32 %v2322, %v2338
      %v2343 = vpack.c.bf16 %v2340, %v2339
      %v2344 = vpack.c.bf16 %v2342, %v2341
      %v2345 = vpack.c.bf16 %v2257, %v2255
      %v2346 = vpack.c.bf16 %v2262, %v2260
      %v2348 = vsel %vm1699, %v2343, 0
      %v2351 = vsel %vm1699, %v2344, 0
      %2353 = vmatpush.bf16.msra.mxu0 0
      %2354 = vmatpush.bf16.msra.mxu0 0
      %2355 = vmatpush.bf16.msra.mxu0 0
      %2356 = vmatpush.bf16.msra.mxu0 0
      %2357 = vmatpush.bf16.msra.mxu0 0
      %2358 = vmatpush.bf16.msra.mxu0 0
      %2359 = vmatpush.bf16.msra.mxu0 %v2346
      %2360 = vmatpush.bf16.msra.mxu0 %v2345
      %2361 = vmatmul.bf16.gmra.mxu0 %v2348
      %v2362 = vpop.f32.mrf.mxu0
      %v2363 = vadd.f32 0.0, %v2362
      %v2364 = vpop.f32.mrf.mxu0
      %v2365 = vadd.f32 0.0, %v2364
      %2366 = vmatmul.bf16.gmra.mxu0 %v2351
      %v2367 = vpop.f32.mrf.mxu0
      %v2368 = vadd.f32 0.0, %v2367
      %v2369 = vpop.f32.mrf.mxu0
      %v2370 = vadd.f32 0.0, %v2369
      %2371 = vdwg.mxu0
      %v2372 = vpack.c.bf16 %v2365, %v2363
      %v2373 = vpack.c.bf16 %v2370, %v2368
      %s2374 = scalar_lea.vmem %s19, 16
      %v2375 = vld [vmem:[%s2374] sm:$0xf]
      %v2376 = vld [vmem:[%s2374 + $0x4] sm:$0xf]
      %v2379 = vunpack.c.l.b16 %v2375
      %v2380 = vunpack.c.l.b16 %v2376
      %v2381 = vpack.c.b16 %v2380, %v2379
      %v2384 = vsel %vm1667, %v2372, 0
      %v2387 = vsel %vm1667, %v2373, 0
      %2389 = vmatpush.bf16.msra.mxu0 0
      %2390 = vmatpush.bf16.msra.mxu0 0
      %2391 = vmatpush.bf16.msra.mxu0 0
      %2392 = vmatpush.bf16.msra.mxu0 0
      %2393 = vmatpush.bf16.msra.mxu0 0
      %2394 = vmatpush.bf16.msra.mxu0 0
      %2395 = vmatpush.bf16.msra.mxu0 0
      %2396 = vmatpush.bf16.msra.mxu0 %v2381
      %2397 = vmatmul.bf16.gmra.mxu0 %v2384
      %v2398 = vpop.f32.mrf.mxu0
      %v2399 = vadd.f32 0.0, %v2398
      %v2400 = vpop.f32.mrf.mxu0
      %v2401 = vadd.f32 0.0, %v2400
      %2402 = vmatmul.bf16.gmra.mxu0 %v2387
      %v2403 = vpop.f32.mrf.mxu0
      %v2404 = vadd.f32 0.0, %v2403
      %v2405 = vpop.f32.mrf.mxu0
      %v2406 = vadd.f32 0.0, %v2405
      %2407 = vdwg.mxu0
      %v2408 = vadd.f32 %v2099, %v2399
      %v2409 = vadd.f32 %v2101, %v2401
      %v2410 = vadd.f32 %v2104, %v2404
      %v2411 = vadd.f32 %v2106, %v2406
      %s2412 = scalar_lea.vmem %s16, 96
      %v2413 = vld [vmem:[%s2412] sm:$0xf]
      %v2414 = vld [vmem:[%s2412 + $0x4] sm:$0xf]
      %v2415 = vld [vmem:[%s2412 + $0x8] sm:$0xf]
      %v2416 = vld [vmem:[%s2412 + $0xc] sm:$0xf]
      %v2417 = vld [vmem:[%s2412 + $0x10] sm:$0xf]
      %v2418 = vld [vmem:[%s2412 + $0x14] sm:$0xf]
      %v2419 = vld [vmem:[%s2412 + $0x18] sm:$0xf]
      %v2420 = vld [vmem:[%s2412 + $0x1c] sm:$0xf]
      %v2429 = vunpack.c.l.b16 %v2413
      %v2430 = vunpack.c.l.b16 %v2414
      %v2431 = vunpack.c.l.b16 %v2415
      %v2432 = vunpack.c.l.b16 %v2416
      %v2433 = vunpack.c.l.b16 %v2417
      %v2434 = vunpack.c.l.b16 %v2418
      %v2435 = vunpack.c.l.b16 %v2419
      %v2436 = vunpack.c.l.b16 %v2420
      %v2437 = vpack.c.b16 %v2430, %v2429
      %v2438 = vpack.c.b16 %v2432, %v2431
      %v2439 = vpack.c.b16 %v2434, %v2433
      %v2440 = vpack.c.b16 %v2436, %v2435
      %2445 = vmatpush.bf16.msra.mxu0 0
      %2446 = vmatpush.bf16.msra.mxu0 0
      %2447 = vmatpush.bf16.msra.mxu0 0
      %2448 = vmatpush.bf16.msra.mxu0 0
      %2449 = vmatpush.bf16.msra.mxu0 %v2440
      %2450 = vmatpush.bf16.msra.mxu0 %v2439
      %2451 = vmatpush.bf16.msra.mxu0 %v2438
      %2452 = vmatpush.bf16.msra.mxu0 %v2437
      %2453 = vmatmul.bf16.gmra.mxu0 %v1521
      %v2454 = vpop.f32.mrf.mxu0
      %v2455 = vadd.f32 0.0, %v2454
      %v2456 = vpop.f32.mrf.mxu0
      %v2457 = vadd.f32 0.0, %v2456
      %2458 = vmatmul.bf16.gmra.mxu0 %v1524
      %v2459 = vpop.f32.mrf.mxu0
      %v2460 = vadd.f32 0.0, %v2459
      %v2461 = vpop.f32.mrf.mxu0
      %v2462 = vadd.f32 0.0, %v2461
      %2463 = vdwg.mxu0
      %s2464 = scalar_lea.vmem %s17, 96
      %v2465 = vld [vmem:[%s2464] sm:$0xf]
      %v2466 = vld [vmem:[%s2464 + $0x4] sm:$0xf]
      %v2467 = vld [vmem:[%s2464 + $0x8] sm:$0xf]
      %v2468 = vld [vmem:[%s2464 + $0xc] sm:$0xf]
      %v2469 = vld [vmem:[%s2464 + $0x10] sm:$0xf]
      %v2470 = vld [vmem:[%s2464 + $0x14] sm:$0xf]
      %v2471 = vld [vmem:[%s2464 + $0x18] sm:$0xf]
      %v2472 = vld [vmem:[%s2464 + $0x1c] sm:$0xf]
      %v2481 = vunpack.c.l.b16 %v2465
      %v2482 = vunpack.c.l.b16 %v2466
      %v2483 = vunpack.c.l.b16 %v2467
      %v2484 = vunpack.c.l.b16 %v2468
      %v2485 = vunpack.c.l.b16 %v2469
      %v2486 = vunpack.c.l.b16 %v2470
      %v2487 = vunpack.c.l.b16 %v2471
      %v2488 = vunpack.c.l.b16 %v2472
      %v2489 = vpack.c.b16 %v2482, %v2481
      %v2490 = vpack.c.b16 %v2484, %v2483
      %v2491 = vpack.c.b16 %v2486, %v2485
      %v2492 = vpack.c.b16 %v2488, %v2487
      %2497 = vmatpush.bf16.msra.mxu0 0
      %2498 = vmatpush.bf16.msra.mxu0 0
      %2499 = vmatpush.bf16.msra.mxu0 0
      %2500 = vmatpush.bf16.msra.mxu0 0
      %2501 = vmatpush.bf16.msra.mxu0 %v2492
      %2502 = vmatpush.bf16.msra.mxu0 %v2491
      %2503 = vmatpush.bf16.msra.mxu0 %v2490
      %2504 = vmatpush.bf16.msra.mxu0 %v2489
      %2505 = vmatmul.bf16.gmra.mxu0 %v1588
      %v2506 = vpop.f32.mrf.mxu0
      %v2507 = vadd.f32 0.0, %v2506
      %v2508 = vpop.f32.mrf.mxu0
      %v2509 = vadd.f32 0.0, %v2508
      %2510 = vmatmul.bf16.gmra.mxu0 %v1591
      %v2511 = vpop.f32.mrf.mxu0
      %v2512 = vadd.f32 0.0, %v2511
      %v2513 = vpop.f32.mrf.mxu0
      %v2514 = vadd.f32 0.0, %v2513
      %2515 = vdwg.mxu0
      %s2516 = scalar_lea.vmem %s18, 96
      %v2517 = vld [vmem:[%s2516] sm:$0xf]
      %v2518 = vld [vmem:[%s2516 + $0x4] sm:$0xf]
      %v2519 = vld [vmem:[%s2516 + $0x8] sm:$0xf]
      %v2520 = vld [vmem:[%s2516 + $0xc] sm:$0xf]
      %v2521 = vld [vmem:[%s2516 + $0x10] sm:$0xf]
      %v2522 = vld [vmem:[%s2516 + $0x14] sm:$0xf]
      %v2523 = vld [vmem:[%s2516 + $0x18] sm:$0xf]
      %v2524 = vld [vmem:[%s2516 + $0x1c] sm:$0xf]
      %v2533 = vunpack.c.l.b16 %v2517
      %v2534 = vunpack.c.l.b16 %v2518
      %v2535 = vunpack.c.l.b16 %v2519
      %v2536 = vunpack.c.l.b16 %v2520
      %v2537 = vunpack.c.l.b16 %v2521
      %v2538 = vunpack.c.l.b16 %v2522
      %v2539 = vunpack.c.l.b16 %v2523
      %v2540 = vunpack.c.l.b16 %v2524
      %v2541 = vpack.c.b16 %v2534, %v2533
      %v2542 = vpack.c.b16 %v2536, %v2535
      %v2543 = vpack.c.b16 %v2538, %v2537
      %v2544 = vpack.c.b16 %v2540, %v2539
      %2549 = vmatpush.bf16.msra.mxu0 0
      %2550 = vmatpush.bf16.msra.mxu0 0
      %2551 = vmatpush.bf16.msra.mxu0 0
      %2552 = vmatpush.bf16.msra.mxu0 0
      %2553 = vmatpush.bf16.msra.mxu0 %v2544
      %2554 = vmatpush.bf16.msra.mxu0 %v2543
      %2555 = vmatpush.bf16.msra.mxu0 %v2542
      %2556 = vmatpush.bf16.msra.mxu0 %v2541
      %2557 = vmatmul.bf16.gmra.mxu0 %v1588
      %v2558 = vpop.f32.mrf.mxu0
      %v2559 = vadd.f32 0.0, %v2558
      %v2560 = vpop.f32.mrf.mxu0
      %v2561 = vadd.f32 0.0, %v2560
      %2562 = vmatmul.bf16.gmra.mxu0 %v1591
      %v2563 = vpop.f32.mrf.mxu0
      %v2564 = vadd.f32 0.0, %v2563
      %v2565 = vpop.f32.mrf.mxu0
      %v2566 = vadd.f32 0.0, %v2565
      %2567 = vdwg.mxu0
      %v2568 = vpack.c.bf16 %v2457, %v2455
      %v2569 = vpack.c.bf16 %v2462, %v2460
      %v2570 = vpack.c.bf16 %v2509, %v2507
      %v2571 = vpack.c.bf16 %v2514, %v2512
      %v2573 = vsel %vm1667, %v2568, 0
      %v2576 = vsel %vm1667, %v2569, 0
      %v2579 = vsel %vm1667, %v2570, 0
      %v2582 = vsel %vm1667, %v2571, 0
      %2584 = vmatpush.bf16.xpose.msra.mxu0 0
      %2585 = vmatpush.bf16.xpose.msra.mxu0 0
      %2586 = vmatpush.bf16.xpose.msra.mxu0 0
      %2587 = vmatpush.bf16.xpose.msra.mxu0 0
      %2588 = vmatpush.bf16.xpose.msra.mxu0 0
      %2589 = vmatpush.bf16.xpose.msra.mxu0 0
      %2590 = vmatpush.bf16.xpose.msra.mxu0 %v2582
      %2591 = vmatpush.bf16.xpose.msra.mxu0 %v2579
      %2592 = vmatmul.bf16.gmra.mxu0 %v2573
      %v2593 = vpop.f32.mrf.mxu0
      %v2594 = vadd.f32 0.0, %v2593
      %v2595 = vpop.f32.mrf.mxu0
      %v2596 = vadd.f32 0.0, %v2595
      %2597 = vmatmul.bf16.gmra.mxu0 %v2576
      %v2598 = vpop.f32.mrf.mxu0
      %v2599 = vadd.f32 0.0, %v2598
      %v2600 = vpop.f32.mrf.mxu0
      %v2601 = vadd.f32 0.0, %v2600
      %2602 = vdwg.mxu0
      %v2603 = vsel %vm1699, %v2594, -inf
      %2604 = vmax.xlane.f32.xlu0 %v2603
      %v2605 = vpop.xlane.xlu0 %2604
      %v2606 = vsel %vm1699, %v2596, -inf
      %2607 = vmax.xlane.f32.xlu0 %v2606
      %v2608 = vpop.xlane.xlu0 %2607
      %v2609 = vsel %vm1699, %v2599, -inf
      %2610 = vmax.xlane.f32.xlu0 %v2609
      %v2611 = vpop.xlane.xlu0 %2610
      %v2612 = vsel %vm1699, %v2601, -inf
      %2613 = vmax.xlane.f32.xlu0 %v2612
      %v2614 = vpop.xlane.xlu0 %2613
      %v2615 = vsub.f32 %v2594, %v2605
      %v2616 = vsub.f32 %v2596, %v2608
      %v2617 = vsub.f32 %v2599, %v2611
      %v2618 = vsub.f32 %v2601, %v2614
      %v2619 = vmul.f32 %v2615, 1.442695
      %v2620 = vpow.pop %v2619
      %v2621 = vmul.f32 %v2616, 1.442695
      %v2622 = vpow.pop %v2621
      %v2623 = vmul.f32 %v2617, 1.442695
      %v2624 = vpow.pop %v2623
      %v2625 = vmul.f32 %v2618, 1.442695
      %v2626 = vpow.pop %v2625
      %v2627 = vsel %vm1699, %v2620, 0.0
      %2628 = vadd.xlane.f32.xlu0 %v2627
      %v2629 = vpop.xlane.xlu0 %2628
      %v2630 = vsel %vm1699, %v2622, 0.0
      %2631 = vadd.xlane.f32.xlu0 %v2630
      %v2632 = vpop.xlane.xlu0 %2631
      %v2633 = vsel %vm1699, %v2624, 0.0
      %2634 = vadd.xlane.f32.xlu0 %v2633
      %v2635 = vpop.xlane.xlu0 %2634
      %v2636 = vsel %vm1699, %v2626, 0.0
      %2637 = vadd.xlane.f32.xlu0 %v2636
      %v2638 = vpop.xlane.xlu0 %2637
      %v2639 = vrcp.pop %v2629
      %v2640 = vrcp.pop %v2632
      %v2641 = vrcp.pop %v2635
      %v2642 = vrcp.pop %v2638
      %v2643 = vmul.f32 %v2620, %v2639
      %v2644 = vmul.f32 %v2622, %v2640
      %v2645 = vmul.f32 %v2624, %v2641
      %v2646 = vmul.f32 %v2626, %v2642
      %v2647 = vpack.c.bf16 %v2644, %v2643
      %v2648 = vpack.c.bf16 %v2646, %v2645
      %v2649 = vpack.c.bf16 %v2561, %v2559
      %v2650 = vpack.c.bf16 %v2566, %v2564
      %v2652 = vsel %vm1699, %v2647, 0
      %v2655 = vsel %vm1699, %v2648, 0
      %2657 = vmatpush.bf16.msra.mxu0 0
      %2658 = vmatpush.bf16.msra.mxu0 0
      %2659 = vmatpush.bf16.msra.mxu0 0
      %2660 = vmatpush.bf16.msra.mxu0 0
      %2661 = vmatpush.bf16.msra.mxu0 0
      %2662 = vmatpush.bf16.msra.mxu0 0
      %2663 = vmatpush.bf16.msra.mxu0 %v2650
      %2664 = vmatpush.bf16.msra.mxu0 %v2649
      %2665 = vmatmul.bf16.gmra.mxu0 %v2652
      %v2666 = vpop.f32.mrf.mxu0
      %v2667 = vadd.f32 0.0, %v2666
      %v2668 = vpop.f32.mrf.mxu0
      %v2669 = vadd.f32 0.0, %v2668
      %2670 = vmatmul.bf16.gmra.mxu0 %v2655
      %v2671 = vpop.f32.mrf.mxu0
      %v2672 = vadd.f32 0.0, %v2671
      %v2673 = vpop.f32.mrf.mxu0
      %v2674 = vadd.f32 0.0, %v2673
      %2675 = vdwg.mxu0
      %v2676 = vpack.c.bf16 %v2669, %v2667
      %v2677 = vpack.c.bf16 %v2674, %v2672
      %s2678 = scalar_lea.vmem %s19, 24
      %v2679 = vld [vmem:[%s2678] sm:$0xf]
      %v2680 = vld [vmem:[%s2678 + $0x4] sm:$0xf]
      %v2683 = vunpack.c.l.b16 %v2679
      %v2684 = vunpack.c.l.b16 %v2680
      %v2685 = vpack.c.b16 %v2684, %v2683
      %v2688 = vsel %vm1667, %v2676, 0
      %v2691 = vsel %vm1667, %v2677, 0
      %2693 = vmatpush.bf16.msra.mxu0 0
      %2694 = vmatpush.bf16.msra.mxu0 0
      %2695 = vmatpush.bf16.msra.mxu0 0
      %2696 = vmatpush.bf16.msra.mxu0 0
      %2697 = vmatpush.bf16.msra.mxu0 0
      %2698 = vmatpush.bf16.msra.mxu0 0
      %2699 = vmatpush.bf16.msra.mxu0 0
      %2700 = vmatpush.bf16.msra.mxu0 %v2685
      %2701 = vmatmul.bf16.gmra.mxu0 %v2688
      %v2702 = vpop.f32.mrf.mxu0
      %v2703 = vadd.f32 0.0, %v2702
      %v2704 = vpop.f32.mrf.mxu0
      %v2705 = vadd.f32 0.0, %v2704
      %2706 = vmatmul.bf16.gmra.mxu0 %v2691
      %v2707 = vpop.f32.mrf.mxu0
      %v2708 = vadd.f32 0.0, %v2707
      %v2709 = vpop.f32.mrf.mxu0
      %v2710 = vadd.f32 0.0, %v2709
      %2711 = vdwg.mxu0
      %v2712 = vadd.f32 %v2408, %v2703
      %v2713 = vadd.f32 %v2409, %v2705
      %v2714 = vadd.f32 %v2410, %v2708
      %v2715 = vadd.f32 %v2411, %v2710
      %v2716 = vadd.f32 %v1482, %v2712
      %v2717 = vadd.f32 %v1483, %v2713
      %v2718 = vadd.f32 %v1484, %v2714
      %v2719 = vadd.f32 %v1485, %v2715
      %2722 = vrot.lane.b32.xlu0 %v2718, 64
      %v2723 = vpop.permute.xlu0 %2722
      %2724 = vrot.lane.b32.xlu0 %v2719, 64
      %v2725 = vpop.permute.xlu0 %2724
      %v2728 = vsel %vm712, %v2716, %v2723
      %v2729 = vsel %vm712, %v2717, %v2725
      %v2730 = vpack.c.bf16 %v2728, %v2728
      %v2731 = vpack.c.bf16 %v2729, %v2729
      %2732 = vst [vmem:[%s649] sm:$0xf] %v2730
      %2733 = vst [vmem:[%s649 + $0x4] sm:$0xf] %v2731
      %p2734 = scmp.lt.s32.totalorder %s31, 1
      %s2735 = scalar_select %p2734, %s31, 1
      %s2736 = smul.addr %s2735, 2
      %s2737 = smul.addr %s2736, 4
      %s2738 = scalar_lea.vmem %s20, %s2737
      // Predicated region
      $region101: #{decoder_forward.3} parent=99 // pred_check
        %p2739 = pneg %p479
      $region102: #{decoder_forward.3} parent=99 // pred_check_branch
        %2741 = sbr.rel (%p2739) target = $region104
      $region103: #{decoder_forward.3} parent=99 // pred_region
        _
      $region104: #{decoder_forward.3} parent=99 // pred_fallthru
        _
    $region100: #{decoder_forward.3} parent=5 // pred_fallthru
      _
    %p2742 = scmp.le.s32.totalorder 2, %s26
    // Predicated region
    $region105: #{decoder_forward.3} parent=5 // pred_check
      %p2743 = pneg %p2742
    $region106: #{decoder_forward.3} parent=5 // pred_check_branch
      %2745 = sbr.rel (%p2743) target = $region108
    $region107: #{decoder_forward.3} parent=5 // pred_region
      %s2746 = ssub.s32 %s26, 2
      // Predicated region
      $region109: #{decoder_forward.3} parent=107 // pred_check
        %p2747 = pneg %p485
      $region110: #{decoder_forward.3} parent=107 // pred_check_branch
        %2749 = sbr.rel (%p2747) target = $region112
      $region111: #{decoder_forward.3} parent=107 // pred_region
        %p2750 = scmp.lt.s32.totalorder %s32, 1
        %s2751 = scalar_select %p2750, %s32, 1
        %s2752 = smul.addr %s2751, 2
        %s2753 = smul.addr %s2752, 4
        %s2754 = scalar_lea.vmem %s20, %s2753
      $region112: #{decoder_forward.3} parent=107 // pred_fallthru
        _
    $region108: #{decoder_forward.3} parent=5 // pred_fallthru
      _
  $region6: #{decoder_forward.3} parent=0 // loop_footer
    %s30 = sadd.s32 1, %s26
  $region7: #{decoder_forward.3} parent=0 // loop_footer_branch
    %25 = sbr.rel target = $region3
  $region8: #{decoder_forward.3} parent=0 // loop_exit
    _

</llo_original>
